<compile_context>
chip_gen: v7x
topology: tpu7x:2x2x1
jax: 0.10.0
libtpu: 0.0.40
codegen_flags: <defaults>
</compile_context>

<pallas_src>
import functools

import jax
import jax.numpy as jnp
from jax.experimental import pallas as pl
from jax.experimental.pallas import tpu as pltpu


def _round_up(n, m):
    return ((n + m - 1) // m) * m


def _vae_kernel(x_ref, eps_ref,
                w1_ref, b1_ref,
                w2_ref, b2_ref,
                w3_ref, b3_ref,
                w4_ref, b4_ref,
                w5_ref, b5_ref,
                xrec_ref, mu_ref, lv_ref):
    f32 = jnp.float32
    bf16 = jnp.bfloat16

    x = x_ref[...].astype(bf16)    # (TB, image_size) cast in-kernel (no wrapper pass)
    eps = eps_ref[...]             # (TB, Z_P) f32, zero-padded lanes

    # ---- encode: fc1 + relu ----
    h = jnp.dot(x, w1_ref[...], preferred_element_type=f32) + b1_ref[...]
    h = jnp.maximum(h, 0.0).astype(bf16)

    # ---- mu / log_var projections (lane-dense, 128-wide) ----
    mu = jnp.dot(h, w2_ref[...], preferred_element_type=f32) + b2_ref[...]
    log_var = jnp.dot(h, w3_ref[...], preferred_element_type=f32) + b3_ref[...]

    # ---- reparameterize ----
    # Padded lanes: mu = log_var = 0 and eps = 0  ->  z lane = 0 (no NaN hazard),
    # and fc4's padded weight rows are zero anyway.
    z = (mu + eps * jnp.exp(log_var * 0.5)).astype(bf16)

    # ---- decode: fc4 + relu, fc5 + sigmoid ----
    h2 = jnp.dot(z, w4_ref[...], preferred_element_type=f32) + b4_ref[...]
    h2 = jnp.maximum(h2, 0.0).astype(bf16)
    logits = jnp.dot(h2, w5_ref[...], preferred_element_type=f32) + b5_ref[...]

    xrec_ref[...] = jax.nn.sigmoid(logits).astype(xrec_ref.dtype)   # bf16 writeback
    mu_ref[...] = mu.astype(mu_ref.dtype)
    lv_ref[...] = log_var.astype(lv_ref.dtype)


@functools.partial(jax.jit, static_argnames=("block_b",))
def vae_forward_padded(x, eps, packed_params, block_b=512):
    """Kernel-facing path. x: [B, image_size] (any float dtype), eps: [B, z_dim].
    Returns (x_reconst_padded bf16 [Bp, IM_P], mu_padded f32 [Bp, Z_P],
    log_var_padded f32 [Bp, Z_P]).  Consume/slice lazily downstream."""
    B, image_size = x.shape
    z_dim = eps.shape[1]
    w1, b1, w2, b2, w3, b3, w4, b4, w5, b5 = packed_params
    assert w1.shape[0] == image_size
    H_P = w1.shape[1]
    Z_P = w2.shape[1]
    IM_P = w5.shape[1]

    # Batch tile: large enough to amortize the ~0.35us/step pipeline overhead, but
    # keep >= 2 grid steps when the batch allows it so the "parallel" batch axis can
    # shard across the two TensorCores on v7x.
    if B >= 2 * block_b:
        TB = block_b
    else:
        TB = min(block_b, max(8, _round_up((B + 1) // 2, 8)))
    Bp = _round_up(B, TB)
    grid = (Bp // TB,)

    # Only plumbing left: row padding of x when B % TB != 0 and the tiny eps pad.
    xp = x if Bp == B else jnp.pad(x, ((0, Bp - B), (0, 0)))
    epsp = jnp.zeros((Bp, Z_P), jnp.float32).at[:B, :z_dim].set(eps.astype(jnp.float32))

    def batch_spec(cols):
        return pl.BlockSpec((TB, cols), lambda i: (i, 0))

    def const_spec(arr):
        # Constant index_map -> weight/bias blocks stay resident across grid steps.
        return pl.BlockSpec(arr.shape, lambda i: (0, 0))

    in_specs = [batch_spec(image_size), batch_spec(Z_P)] + \
               [const_spec(p) for p in packed_params]
    out_specs = (batch_spec(IM_P), batch_spec(Z_P), batch_spec(Z_P))
    out_shape = (
        jax.ShapeDtypeStruct((Bp, IM_P), jnp.bfloat16),   # padded reconstruction
        jax.ShapeDtypeStruct((Bp, Z_P), jnp.float32),     # padded mu
        jax.ShapeDtypeStruct((Bp, Z_P), jnp.float32),     # padded log_var
    )

    flops = 2 * Bp * (image_size * H_P + 2 * H_P * Z_P + Z_P * H_P + H_P * IM_P)
    transcendentals = Bp * (Z_P + IM_P)                    # exp (reparam) + sigmoid
    param_bytes = sum(int(p.size) * p.dtype.itemsize for p in packed_params)
    bytes_accessed = (Bp * image_size * x.dtype.itemsize   # x (read as-is)
                      + Bp * Z_P * 4                       # eps
                      + param_bytes
                      + Bp * IM_P * 2                      # bf16 reconstruction
                      + 2 * Bp * Z_P * 4)                  # mu + log_var

    return pl.pallas_call(
        _vae_kernel,
        out_shape=out_shape,
        grid=grid,
        in_specs=in_specs,
        out_specs=out_specs,
        compiler_params=pltpu.CompilerParams(
            dimension_semantics=("parallel",),      # batch tiles are independent
            vmem_limit_bytes=48 * 1024 * 1024,      # headroom vs v7x's 64 MiB VMEM
        ),
        cost_estimate=pl.CostEstimate(
            flops=flops,
            transcendentals=transcendentals,
            bytes_accessed=bytes_accessed,
        ),
    )(xp, epsp, *packed_params)


def vae_forward(x, eps, packed_params, block_b=512):
    """nn.Module-compatible interface: returns (x_reconst, mu, log_var) in f32 at
    the original (unpadded) shapes.  The slice/cast here is interface plumbing; a
    real training step should consume the padded bf16 slab from vae_forward_padded
    directly to avoid the extra HBM pass."""
    B, image_size = x.shape
    z_dim = eps.shape[1]
    xrec_p, mu_p, lv_p = vae_forward_padded(x, eps, packed_params, block_b=block_b)
    x_reconst = xrec_p[:B, :image_size].astype(jnp.float32)
    mu = mu_p[:B, :z_dim]
    log_var = lv_p[:B, :z_dim]
    return x_reconst, mu, log_var


# ----------------------------------------------------------------------------- params
def init_linear(key, fan_in, fan_out):
    """Mimics torch.nn.Linear default init (uniform +-1/sqrt(fan_in)).
    Weight stored as [fan_in, fan_out] (already transposed for x @ W)."""
    kw, kb = jax.random.split(key)
    bound = 1.0 / jnp.sqrt(fan_in)
    w = jax.random.uniform(kw, (fan_in, fan_out), jnp.float32, -bound, bound)
    b = jax.random.uniform(kb, (1, fan_out), jnp.float32, -bound, bound)
    return w, b


def make_params(key, image_size, h_dim, z_dim):
    keys = jax.random.split(key, 5)
    w1, b1 = init_linear(keys[0], image_size, h_dim)   # fc1
    w2, b2 = init_linear(keys[1], h_dim, z_dim)        # fc2 (mu)
    w3, b3 = init_linear(keys[2], h_dim, z_dim)        # fc3 (log_var)
    w4, b4 = init_linear(keys[3], z_dim, h_dim)        # fc4
    w5, b5 = init_linear(keys[4], h_dim, image_size)   # fc5
    return (w1, b1, w2, b2, w3, b3, w4, b4, w5, b5)


def pack_params(params):
    """One-time layout plumbing: pad to lane-dense shapes (h_dim -> 512, z_dim -> 128,
    image_size -> 896 on the output side), cast weights to bf16 (biases stay f32 for
    the f32 accumulation path).  x's feature dim is left unpadded (784) since the
    MXU pads K internally and the input block uses the full array dim."""
    w1, b1, w2, b2, w3, b3, w4, b4, w5, b5 = params
    image_size, h_dim = w1.shape
    z_dim = w2.shape[1]
    H_P = _round_up(h_dim, 128)        # 400 -> 512
    Z_P = _round_up(z_dim, 128)        # 20  -> 128
    IM_P = _round_up(image_size, 128)  # 784 -> 896 (lane-dense output slab)

    bf16, f32 = jnp.bfloat16, jnp.float32

    # fc1: pad output columns (h_dim) with zeros; padded h lanes become relu(0) = 0.
    w1p = jnp.zeros((image_size, H_P), bf16).at[:, :h_dim].set(w1.astype(bf16))
    b1p = jnp.zeros((1, H_P), f32).at[:, :h_dim].set(b1.reshape(1, -1).astype(f32))

    # fc2 / fc3: pad h rows (zero, matches zero h lanes) and z cols (zero).
    w2p = jnp.zeros((H_P, Z_P), bf16).at[:h_dim, :z_dim].set(w2.astype(bf16))
    b2p = jnp.zeros((1, Z_P), f32).at[:, :z_dim].set(b2.reshape(1, -1).astype(f32))
    w3p = jnp.zeros((H_P, Z_P), bf16).at[:h_dim, :z_dim].set(w3.astype(bf16))
    b3p = jnp.zeros((1, Z_P), f32).at[:, :z_dim].set(b3.reshape(1, -1).astype(f32))

    # fc4: padded z rows are zero so padded z lanes contribute nothing.
    w4p = jnp.zeros((Z_P, H_P), bf16).at[:z_dim, :h_dim].set(w4.astype(bf16))
    b4p = jnp.zeros((1, H_P), f32).at[:, :h_dim].set(b4.reshape(1, -1).astype(f32))

    # fc5: pad output-feature cols (sliced off outside the kernel).
    w5p = jnp.zeros((H_P, IM_P), bf16).at[:h_dim, :image_size].set(w5.astype(bf16))
    b5p = jnp.zeros((1, IM_P), f32).at[:, :image_size].set(
        b5.reshape(1, image_size).astype(f32))

    return (w1p, b1p, w2p, b2p, w3p, b3p, w4p, b4p, w5p, b5p)


def vae_reference(x, eps, params):
    """Pure-JAX reference with the same bf16-matmul / f32-accumulation recipe."""
    w1, b1, w2, b2, w3, b3, w4, b4, w5, b5 = params
    bf16 = jnp.bfloat16

    def mm(a, w):
        return jnp.dot(a.astype(bf16), w.astype(bf16),
                       preferred_element_type=jnp.float32)

    h = jnp.maximum(mm(x, w1) + b1, 0.0)
    mu = mm(h, w2) + b2
    log_var = mm(h, w3) + b3
    z = mu + eps * jnp.exp(log_var * 0.5)
    h2 = jnp.maximum(mm(z, w4) + b4, 0.0)
    x_reconst = jax.nn.sigmoid(mm(h2, w5) + b5)
    return x_reconst, mu, log_var


if __name__ == "__main__":
    # Small shapes consistent with the module's fully-connected forward.
    batch = 12          # not a multiple of the batch tile -> exercises padding + 2 grid steps
    image_size = 784    # 28 * 28
    h_dim = 400
    z_dim = 20

    key = jax.random.PRNGKey(0)
    k_params, k_x, k_eps = jax.random.split(key, 3)

    params = make_params(k_params, image_size, h_dim, z_dim)
    packed = pack_params(params)
    x = jax.random.uniform(k_x, (batch, image_size), jnp.float32)   # "image" input
    eps = jax.random.normal(k_eps, (batch, z_dim), jnp.float32)     # reparam noise
    # TODO(synk): the PyTorch module draws eps internally via torch.randn_like; here
    # the noise is an explicit input (equivalent semantics, deterministic testing).

    x_reconst, mu, log_var = vae_forward(x, eps, packed)
    jax.block_until_ready((x_reconst, mu, log_var))

    assert x_reconst.shape == (batch, image_size)
    assert mu.shape == (batch, z_dim)
    assert log_var.shape == (batch, z_dim)

    xr_ref, mu_ref, lv_ref = vae_reference(x, eps, params)
    assert jnp.allclose(mu, mu_ref, atol=2e-3, rtol=2e-3), \
        float(jnp.max(jnp.abs(mu - mu_ref)))
    assert jnp.allclose(log_var, lv_ref, atol=2e-3, rtol=2e-3), \
        float(jnp.max(jnp.abs(log_var - lv_ref)))
    # x_reconst is written back as bf16 -> looser tolerance (~4e-3 rel near 1.0).
    assert jnp.allclose(x_reconst, xr_ref, atol=1e-2, rtol=1e-2), \
        float(jnp.max(jnp.abs(x_reconst - xr_ref)))

    print("KERNEL_OK")
</pallas_src>

<mosaic_0001>
module attributes {stable_mosaic.version = 11 : i64} {
  func.func @_vae_kernel(%arg0: i32, %arg1: memref<8x784xf32, #tpu.memory_space<vmem>>, %arg2: memref<8x128xf32, #tpu.memory_space<vmem>>, %arg3: memref<784x512xbf16, #tpu.memory_space<vmem>>, %arg4: memref<1x512xf32, #tpu.memory_space<vmem>>, %arg5: memref<512x128xbf16, #tpu.memory_space<vmem>>, %arg6: memref<1x128xf32, #tpu.memory_space<vmem>>, %arg7: memref<512x128xbf16, #tpu.memory_space<vmem>>, %arg8: memref<1x128xf32, #tpu.memory_space<vmem>>, %arg9: memref<128x512xbf16, #tpu.memory_space<vmem>>, %arg10: memref<1x512xf32, #tpu.memory_space<vmem>>, %arg11: memref<512x896xbf16, #tpu.memory_space<vmem>>, %arg12: memref<1x896xf32, #tpu.memory_space<vmem>>, %arg13: memref<8x896xbf16, #tpu.memory_space<vmem>>, %arg14: memref<8x128xf32, #tpu.memory_space<vmem>>, %arg15: memref<8x128xf32, #tpu.memory_space<vmem>>) attributes {dimension_semantics = [#tpu.dimension_semantics<parallel>], iteration_bounds = array<i64: 2>, scalar_prefetch = 0 : i64, scratch_operands = 0 : i64, tpu.core_type = #tpu.core_type<tc>, window_params = [{transform_indices = @transform_0, window_bounds = array<i64: 8, 784>}, {transform_indices = @transform_1, window_bounds = array<i64: 8, 128>}, {pipeline_mode = #tpu.pipeline_mode<synchronous>, transform_indices = @transform_2, window_bounds = array<i64: 784, 512>}, {pipeline_mode = #tpu.pipeline_mode<synchronous>, transform_indices = @transform_3, window_bounds = array<i64: 1, 512>}, {pipeline_mode = #tpu.pipeline_mode<synchronous>, transform_indices = @transform_4, window_bounds = array<i64: 512, 128>}, {pipeline_mode = #tpu.pipeline_mode<synchronous>, transform_indices = @transform_5, window_bounds = array<i64: 1, 128>}, {pipeline_mode = #tpu.pipeline_mode<synchronous>, transform_indices = @transform_6, window_bounds = array<i64: 512, 128>}, {pipeline_mode = #tpu.pipeline_mode<synchronous>, transform_indices = @transform_7, window_bounds = array<i64: 1, 128>}, {pipeline_mode = #tpu.pipeline_mode<synchronous>, transform_indices = @transform_8, window_bounds = array<i64: 128, 512>}, {pipeline_mode = #tpu.pipeline_mode<synchronous>, transform_indices = @transform_9, window_bounds = array<i64: 1, 512>}, {pipeline_mode = #tpu.pipeline_mode<synchronous>, transform_indices = @transform_10, window_bounds = array<i64: 512, 896>}, {pipeline_mode = #tpu.pipeline_mode<synchronous>, transform_indices = @transform_11, window_bounds = array<i64: 1, 896>}, {transform_indices = @transform_12, window_bounds = array<i64: 8, 896>}, {transform_indices = @transform_13, window_bounds = array<i64: 8, 128>}, {transform_indices = @transform_14, window_bounds = array<i64: 8, 128>}]} {
    %c0 = arith.constant 0 : index
    %c0_0 = arith.constant 0 : index
    %0 = vector.load %arg1[%c0, %c0_0] : memref<8x784xf32, #tpu.memory_space<vmem>>, vector<8x784xf32>
    %1 = arith.truncf %0 : vector<8x784xf32> to vector<8x784xbf16>
    %c0_1 = arith.constant 0 : index
    %c0_2 = arith.constant 0 : index
    %2 = vector.load %arg2[%c0_1, %c0_2] : memref<8x128xf32, #tpu.memory_space<vmem>>, vector<8x128xf32>
    %c0_3 = arith.constant 0 : index
    %c0_4 = arith.constant 0 : index
    %3 = vector.load %arg3[%c0_3, %c0_4] : memref<784x512xbf16, #tpu.memory_space<vmem>>, vector<784x512xbf16>
    %cst = arith.constant dense<0.000000e+00> : vector<8x512xf32>
    %4 = tpu.matmul %1, %3, %cst {dimension_numbers = #tpu.dot_dimension_numbers<[1], [0], [0], [1], [0, 0, 1, 1], [], []>} : vector<8x784xbf16>, vector<784x512xbf16>, vector<8x512xf32> -> vector<8x512xf32>
    %c0_5 = arith.constant 0 : index
    %c0_6 = arith.constant 0 : index
    %5 = vector.load %arg4[%c0_5, %c0_6] : memref<1x512xf32, #tpu.memory_space<vmem>>, vector<1x512xf32>
    %6 = vector.broadcast %5 : vector<1x512xf32> to vector<8x512xf32>
    %7 = arith.addf %4, %6 : vector<8x512xf32>
    %cst_7 = arith.constant 0.000000e+00 : f32
    %8 = vector.broadcast %cst_7 : f32 to vector<8x512xf32>
    %9 = arith.maximumf %7, %8 : vector<8x512xf32>
    %10 = arith.truncf %9 : vector<8x512xf32> to vector<8x512xbf16>
    %c0_8 = arith.constant 0 : index
    %c0_9 = arith.constant 0 : index
    %11 = vector.load %arg5[%c0_8, %c0_9] : memref<512x128xbf16, #tpu.memory_space<vmem>>, vector<512x128xbf16>
    %cst_10 = arith.constant dense<0.000000e+00> : vector<8x128xf32>
    %12 = tpu.matmul %10, %11, %cst_10 {dimension_numbers = #tpu.dot_dimension_numbers<[1], [0], [0], [1], [0, 0, 1, 1], [], []>} : vector<8x512xbf16>, vector<512x128xbf16>, vector<8x128xf32> -> vector<8x128xf32>
    %c0_11 = arith.constant 0 : index
    %c0_12 = arith.constant 0 : index
    %13 = vector.load %arg6[%c0_11, %c0_12] : memref<1x128xf32, #tpu.memory_space<vmem>>, vector<1x128xf32>
    %14 = vector.broadcast %13 : vector<1x128xf32> to vector<8x128xf32>
    %15 = arith.addf %12, %14 : vector<8x128xf32>
    %c0_13 = arith.constant 0 : index
    %c0_14 = arith.constant 0 : index
    %16 = vector.load %arg7[%c0_13, %c0_14] : memref<512x128xbf16, #tpu.memory_space<vmem>>, vector<512x128xbf16>
    %cst_15 = arith.constant dense<0.000000e+00> : vector<8x128xf32>
    %17 = tpu.matmul %10, %16, %cst_15 {dimension_numbers = #tpu.dot_dimension_numbers<[1], [0], [0], [1], [0, 0, 1, 1], [], []>} : vector<8x512xbf16>, vector<512x128xbf16>, vector<8x128xf32> -> vector<8x128xf32>
    %c0_16 = arith.constant 0 : index
    %c0_17 = arith.constant 0 : index
    %18 = vector.load %arg8[%c0_16, %c0_17] : memref<1x128xf32, #tpu.memory_space<vmem>>, vector<1x128xf32>
    %19 = vector.broadcast %18 : vector<1x128xf32> to vector<8x128xf32>
    %20 = arith.addf %17, %19 : vector<8x128xf32>
    %cst_18 = arith.constant 5.000000e-01 : f32
    %21 = vector.broadcast %cst_18 : f32 to vector<8x128xf32>
    %22 = arith.mulf %20, %21 : vector<8x128xf32>
    %23 = math.exp %22 : vector<8x128xf32>
    %24 = arith.mulf %2, %23 : vector<8x128xf32>
    %25 = arith.addf %15, %24 : vector<8x128xf32>
    %26 = arith.truncf %25 : vector<8x128xf32> to vector<8x128xbf16>
    %c0_19 = arith.constant 0 : index
    %c0_20 = arith.constant 0 : index
    %27 = vector.load %arg9[%c0_19, %c0_20] : memref<128x512xbf16, #tpu.memory_space<vmem>>, vector<128x512xbf16>
    %cst_21 = arith.constant dense<0.000000e+00> : vector<8x512xf32>
    %28 = tpu.matmul %26, %27, %cst_21 {dimension_numbers = #tpu.dot_dimension_numbers<[1], [0], [0], [1], [0, 0, 1, 1], [], []>} : vector<8x128xbf16>, vector<128x512xbf16>, vector<8x512xf32> -> vector<8x512xf32>
    %c0_22 = arith.constant 0 : index
    %c0_23 = arith.constant 0 : index
    %29 = vector.load %arg10[%c0_22, %c0_23] : memref<1x512xf32, #tpu.memory_space<vmem>>, vector<1x512xf32>
    %30 = vector.broadcast %29 : vector<1x512xf32> to vector<8x512xf32>
    %31 = arith.addf %28, %30 : vector<8x512xf32>
    %cst_24 = arith.constant 0.000000e+00 : f32
    %32 = vector.broadcast %cst_24 : f32 to vector<8x512xf32>
    %33 = arith.maximumf %31, %32 : vector<8x512xf32>
    %34 = arith.truncf %33 : vector<8x512xf32> to vector<8x512xbf16>
    %c0_25 = arith.constant 0 : index
    %c0_26 = arith.constant 0 : index
    %35 = vector.load %arg11[%c0_25, %c0_26] : memref<512x896xbf16, #tpu.memory_space<vmem>>, vector<512x896xbf16>
    %cst_27 = arith.constant dense<0.000000e+00> : vector<8x896xf32>
    %36 = tpu.matmul %34, %35, %cst_27 {dimension_numbers = #tpu.dot_dimension_numbers<[1], [0], [0], [1], [0, 0, 1, 1], [], []>} : vector<8x512xbf16>, vector<512x896xbf16>, vector<8x896xf32> -> vector<8x896xf32>
    %c0_28 = arith.constant 0 : index
    %c0_29 = arith.constant 0 : index
    %37 = vector.load %arg12[%c0_28, %c0_29] : memref<1x896xf32, #tpu.memory_space<vmem>>, vector<1x896xf32>
    %38 = vector.broadcast %37 : vector<1x896xf32> to vector<8x896xf32>
    %39 = arith.addf %36, %38 : vector<8x896xf32>
    %40 = arith.negf %39 : vector<8x896xf32>
    %41 = math.exp %40 : vector<8x896xf32>
    %cst_30 = arith.constant 1.000000e+00 : f32
    %42 = vector.broadcast %cst_30 : f32 to vector<8x896xf32>
    %43 = arith.addf %42, %41 : vector<8x896xf32>
    %44 = arith.divf %42, %43 : vector<8x896xf32>
    %45 = arith.truncf %44 : vector<8x896xf32> to vector<8x896xbf16>
    %c0_31 = arith.constant 0 : index
    %c0_32 = arith.constant 0 : index
    %46 = vector.load %arg13[%c0_31, %c0_32] : memref<8x896xbf16, #tpu.memory_space<vmem>>, vector<8x896xbf16>
    tpu.vector_store %arg13[%c0_31, %c0_32], %45 {strides = array<i32>} : memref<8x896xbf16, #tpu.memory_space<vmem>>, vector<8x896xbf16>,
    %c0_33 = arith.constant 0 : index
    %c0_34 = arith.constant 0 : index
    %47 = vector.load %arg14[%c0_33, %c0_34] : memref<8x128xf32, #tpu.memory_space<vmem>>, vector<8x128xf32>
    tpu.vector_store %arg14[%c0_33, %c0_34], %15 {strides = array<i32>} : memref<8x128xf32, #tpu.memory_space<vmem>>, vector<8x128xf32>,
    %c0_35 = arith.constant 0 : index
    %c0_36 = arith.constant 0 : index
    %48 = vector.load %arg15[%c0_35, %c0_36] : memref<8x128xf32, #tpu.memory_space<vmem>>, vector<8x128xf32>
    tpu.vector_store %arg15[%c0_35, %c0_36], %20 {strides = array<i32>} : memref<8x128xf32, #tpu.memory_space<vmem>>, vector<8x128xf32>,
    return
  }
  func.func @transform_0(%arg0: i32) -> (i32, i32) {
    %c0_i32 = arith.constant 0 : i32
    %c0_i32_0 = arith.constant 0 : i32
    return %arg0, %c0_i32 : i32, i32
  }
  func.func @transform_1(%arg0: i32) -> (i32, i32) {
    %c0_i32 = arith.constant 0 : i32
    %c0_i32_0 = arith.constant 0 : i32
    return %arg0, %c0_i32 : i32, i32
  }
  func.func @transform_2(%arg0: i32) -> (i32, i32) {
    %c0_i32 = arith.constant 0 : i32
    %c0_i32_0 = arith.constant 0 : i32
    %c0_i32_1 = arith.constant 0 : i32
    return %c0_i32, %c0_i32_0 : i32, i32
  }
  func.func @transform_3(%arg0: i32) -> (i32, i32) {
    %c0_i32 = arith.constant 0 : i32
    %c0_i32_0 = arith.constant 0 : i32
    %c0_i32_1 = arith.constant 0 : i32
    return %c0_i32, %c0_i32_0 : i32, i32
  }
  func.func @transform_4(%arg0: i32) -> (i32, i32) {
    %c0_i32 = arith.constant 0 : i32
    %c0_i32_0 = arith.constant 0 : i32
    %c0_i32_1 = arith.constant 0 : i32
    return %c0_i32, %c0_i32_0 : i32, i32
  }
  func.func @transform_5(%arg0: i32) -> (i32, i32) {
    %c0_i32 = arith.constant 0 : i32
    %c0_i32_0 = arith.constant 0 : i32
    %c0_i32_1 = arith.constant 0 : i32
    return %c0_i32, %c0_i32_0 : i32, i32
  }
  func.func @transform_6(%arg0: i32) -> (i32, i32) {
    %c0_i32 = arith.constant 0 : i32
    %c0_i32_0 = arith.constant 0 : i32
    %c0_i32_1 = arith.constant 0 : i32
    return %c0_i32, %c0_i32_0 : i32, i32
  }
  func.func @transform_7(%arg0: i32) -> (i32, i32) {
    %c0_i32 = arith.constant 0 : i32
    %c0_i32_0 = arith.constant 0 : i32
    %c0_i32_1 = arith.constant 0 : i32
    return %c0_i32, %c0_i32_0 : i32, i32
  }
  func.func @transform_8(%arg0: i32) -> (i32, i32) {
    %c0_i32 = arith.constant 0 : i32
    %c0_i32_0 = arith.constant 0 : i32
    %c0_i32_1 = arith.constant 0 : i32
    return %c0_i32, %c0_i32_0 : i32, i32
  }
  func.func @transform_9(%arg0: i32) -> (i32, i32) {
    %c0_i32 = arith.constant 0 : i32
    %c0_i32_0 = arith.constant 0 : i32
    %c0_i32_1 = arith.constant 0 : i32
    return %c0_i32, %c0_i32_0 : i32, i32
  }
  func.func @transform_10(%arg0: i32) -> (i32, i32) {
    %c0_i32 = arith.constant 0 : i32
    %c0_i32_0 = arith.constant 0 : i32
    %c0_i32_1 = arith.constant 0 : i32
    return %c0_i32, %c0_i32_0 : i32, i32
  }
  func.func @transform_11(%arg0: i32) -> (i32, i32) {
    %c0_i32 = arith.constant 0 : i32
    %c0_i32_0 = arith.constant 0 : i32
    %c0_i32_1 = arith.constant 0 : i32
    return %c0_i32, %c0_i32_0 : i32, i32
  }
  func.func @transform_12(%arg0: i32) -> (i32, i32) {
    %c0_i32 = arith.constant 0 : i32
    %c0_i32_0 = arith.constant 0 : i32
    return %arg0, %c0_i32 : i32, i32
  }
  func.func @transform_13(%arg0: i32) -> (i32, i32) {
    %c0_i32 = arith.constant 0 : i32
    %c0_i32_0 = arith.constant 0 : i32
    return %arg0, %c0_i32 : i32, i32
  }
  func.func @transform_14(%arg0: i32) -> (i32, i32) {
    %c0_i32 = arith.constant 0 : i32
    %c0_i32_0 = arith.constant 0 : i32
    return %arg0, %c0_i32 : i32, i32
  }
}

</mosaic_0001>

<llo_original>
// kernel: vae_forward_padded.1
$region0: #{vae_forward_padded.1}
  #allocation0 [shape = 'u32[]', space=smem, size = 0x4, offset = 0x4, fixed_abs, tag = 'smem constant byte address 0x4 - core index']
  #allocation1 [shape = 'u32[144,128]{1,0:T(1,128)}', space=vmem, size = 0x12000, scoped, tag = 'internal scratch']
  %s0 = inlined_call_operand.vmem [shape: f32[16,784], index: 0, kind: input, shape index: {}]
  %s1 = inlined_call_operand.vmem [shape: f32[16,128], index: 1, kind: input, shape index: {}]
  %s2 = inlined_call_operand.hbm [shape: bf16[784,512], index: 2, kind: input, shape index: {}]
  %s3 = inlined_call_operand.vmem [shape: f32[1,512], index: 3, kind: input, shape index: {}]
  %s4 = inlined_call_operand.vmem [shape: bf16[512,128], index: 4, kind: input, shape index: {}]
  %s5 = inlined_call_operand.vmem [shape: f32[1,128], index: 5, kind: input, shape index: {}]
  %s6 = inlined_call_operand.hbm [shape: bf16[512,128], index: 6, kind: input, shape index: {}]
  %s7 = inlined_call_operand.vmem [shape: f32[1,128], index: 7, kind: input, shape index: {}]
  %s8 = inlined_call_operand.hbm [shape: bf16[128,512], index: 8, kind: input, shape index: {}]
  %s9 = inlined_call_operand.vmem [shape: f32[1,512], index: 9, kind: input, shape index: {}]
  %s10 = inlined_call_operand.hbm [shape: bf16[512,896], index: 10, kind: input, shape index: {}]
  %s11 = inlined_call_operand.vmem [shape: f32[1,896], index: 11, kind: input, shape index: {}]
  %s12 = inlined_call_operand.hbm [shape: bf16[16,896], index: 12, kind: output, shape index: {0}]
  %s13 = inlined_call_operand.hbm [shape: f32[16,128], index: 13, kind: output, shape index: {1}]
  %s14 = inlined_call_operand.hbm [shape: f32[16,128], index: 14, kind: output, shape index: {2}]
  %15 = xla_tuple %s12, %s13, %s14
  %s16 = sld [smem:[#allocation0]]
  $region113: #{vae_forward_padded.1} parent=0
    _
  %s18 = ssub.s32 1, %s16
  %s19 = scalar_select 0, %s18, %s16
  $region1: #{vae_forward_padded.1} parent=0
    #allocation2 [shape = 'u8[802816]{0}', space=vmem, size = 0xc4000, scoped, tag = 'input window, operand 2, single buffered']
    #allocation3 [shape = 's32[2]{0}', space=sflag, size = 0x8, scoped, tag = 'scoped memory for vae_forward_padded.1']
    #allocation4 [shape = 's32[2]{0}', space=sflag, size = 0x8, scoped, tag = 'scoped memory for vae_forward_padded.1']
    #allocation5 [shape = 'u8[131072]{0}', space=vmem, size = 0x20000, scoped, tag = 'input window, operand 6, single buffered']
    #allocation6 [shape = 's32[1]{0}', space=sflag, size = 0x4, scoped, tag = 'scoped memory for vae_forward_padded.1']
    #allocation7 [shape = 'u8[131072]{0}', space=vmem, size = 0x20000, scoped, tag = 'input window, operand 8, single buffered']
    #allocation8 [shape = 'u8[917504]{0}', space=vmem, size = 0xe0000, scoped, tag = 'input window, operand 10, single buffered']
    #allocation9 [shape = 's32[1]{0}', space=sflag, size = 0x4, scoped, tag = 'scoped memory for vae_forward_padded.1']
    #allocation10 [shape = 'u8[28672]{0}', space=vmem, size = 0x7000, scoped, tag = 'output window, operand 0']
    #allocation11 [shape = 'u8[8192]{0}', space=vmem, size = 0x2000, scoped, tag = 'output window, operand 1']
    #allocation12 [shape = 's32[2]{0}', space=sflag, size = 0x8, scoped, tag = 'scoped memory for vae_forward_padded.1']
    #allocation13 [shape = 'u8[8192]{0}', space=vmem, size = 0x2000, scoped, tag = 'output window, operand 2']
    %20 = vsyncpa [#allocation3], 0
    %21 = vsyncpa [#allocation6], 0
    %22 = vsyncpa [#allocation9], 0
    %23 = vsyncpa [#allocation4], 0
    %s24 = scalar_lea.sflag [#allocation4], 1
    %25 = vsyncpa %s24, 0
    %26 = vsyncpa [#allocation12], 0
    %s27 = scalar_lea.sflag [#allocation12], 1
    %28 = vsyncpa %s27, 0
    loop: start=0, step=1, limit=4
    $region2: #{vae_forward_padded.1} parent=1 // loop_pre_header
      _
    $region3: #{vae_forward_padded.1} parent=1 // loop_header
      %s30 = sphi 0, %s34
      %p31 = scmp.ge.s32.totalorder %s30, 4
      %s40 = sphi 0, %s42
      %s43 = sphi 0, %s40
      %s44 = sphi 0, %s43
      %s60 = sphi 0, %s44
      %s66 = sphi 0, %s68
      %s69 = sphi 0, %s66
      %s70 = sphi 0, %s69
      %s86 = sphi 0, %s70
      %s90 = sphi 0, %s90
      %s92 = sphi 0, %s90
      %s93 = sphi 0, %s92
      %s107 = sphi 0, %s93
      %s111 = sphi 0, %s111
      %s113 = sphi 0, %s111
      %s114 = sphi 0, %s113
      %s128 = sphi 0, %s114
      %s132 = sphi 0, %s132
      %s134 = sphi 0, %s132
      %s135 = sphi 0, %s134
      %s149 = sphi 0, %s135
      %s153 = sphi 0, %s153
      %s155 = sphi 0, %s153
      %s156 = sphi 0, %s155
      %s170 = sphi 0, %s156
      %s174 = sphi 0, %s174
      %s176 = sphi 0, %s174
      %s177 = sphi 0, %s176
      %s191 = sphi 0, %s177
      %s195 = sphi 0, %s195
      %s197 = sphi 0, %s195
      %s198 = sphi 0, %s197
      %s212 = sphi 0, %s198
      %s216 = sphi 0, %s216
      %s218 = sphi 0, %s216
      %s219 = sphi 0, %s218
      %s233 = sphi 0, %s219
      %s237 = sphi 0, %s237
      %s239 = sphi 0, %s237
      %s240 = sphi 0, %s239
      %s254 = sphi 0, %s240
      %s258 = sphi 0, %s258
      %s260 = sphi 0, %s258
      %s261 = sphi 0, %s260
      %s275 = sphi 0, %s261
      %s279 = sphi 0, %s279
      %s281 = sphi 0, %s279
      %s282 = sphi 0, %s281
      %s296 = sphi 0, %s282
      %s302 = sphi 0, %s304
      %s305 = sphi 0, %s302
      %s306 = sphi 0, %s305
      %s322 = sphi 0, %s306
      %s328 = sphi 0, %s330
      %s331 = sphi 0, %s328
      %s332 = sphi 0, %s331
      %s348 = sphi 0, %s332
      %s354 = sphi 0, %s356
      %s357 = sphi 0, %s354
      %s358 = sphi 0, %s357
      %s374 = sphi 0, %s358
    $region4: #{vae_forward_padded.1} parent=1 // loop_header_branch
      %33 = sbr.rel (%p31) target = $region8
    $region5: #{vae_forward_padded.1} parent=1 // loop_body
      %s35 = ssub.s32 %s30, 1
      %s36 = ssub.s32 %s30, 2
      %s37 = sadd.s32 %s30, 1
      %s38 = ssub.s32 %s30, %s37
      %p39 = scmp.eq.s32.totalorder %s38, 0
      %s41 = sadd.s32 %s40, 1
      %s42 = scalar_select %p39, %s40, %s41
      %p45 = pneg %p39
      %p46 = scmp.eq.s32.totalorder %s30, 1
      %p47 = por %p45, %p46
      %p48 = scmp.ne.s32.totalorder %s40, %s43
      %p49 = scmp.eq.s32.totalorder %s30, 0
      %p50 = por %p48, %p49
      %p51 = scmp.ne.s32.totalorder %s40, %s43
      %p52 = scmp.eq.s32.totalorder %s35, 1
      %p53 = por %p51, %p52
      %p54 = scmp.ne.s32.totalorder %s43, %s44
      %p55 = scmp.eq.s32.totalorder %s35, 0
      %p56 = por %p54, %p55
      %p57 = scmp.ne.s32.totalorder %s43, %s44
      %p58 = scmp.eq.s32.totalorder %s36, 1
      %p59 = por %p57, %p58
      %p61 = scmp.ne.s32.totalorder %s44, %s60
      %p62 = scmp.eq.s32.totalorder %s36, 0
      %p63 = por %p61, %p62
      %s64 = ssub.s32 %s30, %s37
      %p65 = scmp.eq.s32.totalorder %s64, 0
      %s67 = sadd.s32 %s66, 1
      %s68 = scalar_select %p65, %s66, %s67
      %p71 = pneg %p65
      %p72 = scmp.eq.s32.totalorder %s30, 1
      %p73 = por %p71, %p72
      %p74 = scmp.ne.s32.totalorder %s66, %s69
      %p75 = scmp.eq.s32.totalorder %s30, 0
      %p76 = por %p74, %p75
      %p77 = scmp.ne.s32.totalorder %s66, %s69
      %p78 = scmp.eq.s32.totalorder %s35, 1
      %p79 = por %p77, %p78
      %p80 = scmp.ne.s32.totalorder %s69, %s70
      %p81 = scmp.eq.s32.totalorder %s35, 0
      %p82 = por %p80, %p81
      %p83 = scmp.ne.s32.totalorder %s69, %s70
      %p84 = scmp.eq.s32.totalorder %s36, 1
      %p85 = por %p83, %p84
      %p87 = scmp.ne.s32.totalorder %s70, %s86
      %p88 = scmp.eq.s32.totalorder %s36, 0
      %p89 = por %p87, %p88
      %s91 = sadd.s32 %s90, 1
      %p94 = scmp.eq.s32.totalorder %s30, 1
      %p95 = scmp.ne.s32.totalorder %s90, %s92
      %p96 = scmp.eq.s32.totalorder %s30, 0
      %p97 = por %p95, %p96
      %p98 = scmp.ne.s32.totalorder %s90, %s92
      %p99 = scmp.eq.s32.totalorder %s35, 1
      %p100 = por %p98, %p99
      %p101 = scmp.ne.s32.totalorder %s92, %s93
      %p102 = scmp.eq.s32.totalorder %s35, 0
      %p103 = por %p101, %p102
      %p104 = scmp.ne.s32.totalorder %s92, %s93
      %p105 = scmp.eq.s32.totalorder %s36, 1
      %p106 = por %p104, %p105
      %p108 = scmp.ne.s32.totalorder %s93, %s107
      %p109 = scmp.eq.s32.totalorder %s36, 0
      %p110 = por %p108, %p109
      %s112 = sadd.s32 %s111, 1
      %p115 = scmp.eq.s32.totalorder %s30, 1
      %p116 = scmp.ne.s32.totalorder %s111, %s113
      %p117 = scmp.eq.s32.totalorder %s30, 0
      %p118 = por %p116, %p117
      %p119 = scmp.ne.s32.totalorder %s111, %s113
      %p120 = scmp.eq.s32.totalorder %s35, 1
      %p121 = por %p119, %p120
      %p122 = scmp.ne.s32.totalorder %s113, %s114
      %p123 = scmp.eq.s32.totalorder %s35, 0
      %p124 = por %p122, %p123
      %p125 = scmp.ne.s32.totalorder %s113, %s114
      %p126 = scmp.eq.s32.totalorder %s36, 1
      %p127 = por %p125, %p126
      %p129 = scmp.ne.s32.totalorder %s114, %s128
      %p130 = scmp.eq.s32.totalorder %s36, 0
      %p131 = por %p129, %p130
      %s133 = sadd.s32 %s132, 1
      %p136 = scmp.eq.s32.totalorder %s30, 1
      %p137 = scmp.ne.s32.totalorder %s132, %s134
      %p138 = scmp.eq.s32.totalorder %s30, 0
      %p139 = por %p137, %p138
      %p140 = scmp.ne.s32.totalorder %s132, %s134
      %p141 = scmp.eq.s32.totalorder %s35, 1
      %p142 = por %p140, %p141
      %p143 = scmp.ne.s32.totalorder %s134, %s135
      %p144 = scmp.eq.s32.totalorder %s35, 0
      %p145 = por %p143, %p144
      %p146 = scmp.ne.s32.totalorder %s134, %s135
      %p147 = scmp.eq.s32.totalorder %s36, 1
      %p148 = por %p146, %p147
      %p150 = scmp.ne.s32.totalorder %s135, %s149
      %p151 = scmp.eq.s32.totalorder %s36, 0
      %p152 = por %p150, %p151
      %s154 = sadd.s32 %s153, 1
      %p157 = scmp.eq.s32.totalorder %s30, 1
      %p158 = scmp.ne.s32.totalorder %s153, %s155
      %p159 = scmp.eq.s32.totalorder %s30, 0
      %p160 = por %p158, %p159
      %p161 = scmp.ne.s32.totalorder %s153, %s155
      %p162 = scmp.eq.s32.totalorder %s35, 1
      %p163 = por %p161, %p162
      %p164 = scmp.ne.s32.totalorder %s155, %s156
      %p165 = scmp.eq.s32.totalorder %s35, 0
      %p166 = por %p164, %p165
      %p167 = scmp.ne.s32.totalorder %s155, %s156
      %p168 = scmp.eq.s32.totalorder %s36, 1
      %p169 = por %p167, %p168
      %p171 = scmp.ne.s32.totalorder %s156, %s170
      %p172 = scmp.eq.s32.totalorder %s36, 0
      %p173 = por %p171, %p172
      %s175 = sadd.s32 %s174, 1
      %p178 = scmp.eq.s32.totalorder %s30, 1
      %p179 = scmp.ne.s32.totalorder %s174, %s176
      %p180 = scmp.eq.s32.totalorder %s30, 0
      %p181 = por %p179, %p180
      %p182 = scmp.ne.s32.totalorder %s174, %s176
      %p183 = scmp.eq.s32.totalorder %s35, 1
      %p184 = por %p182, %p183
      %p185 = scmp.ne.s32.totalorder %s176, %s177
      %p186 = scmp.eq.s32.totalorder %s35, 0
      %p187 = por %p185, %p186
      %p188 = scmp.ne.s32.totalorder %s176, %s177
      %p189 = scmp.eq.s32.totalorder %s36, 1
      %p190 = por %p188, %p189
      %p192 = scmp.ne.s32.totalorder %s177, %s191
      %p193 = scmp.eq.s32.totalorder %s36, 0
      %p194 = por %p192, %p193
      %s196 = sadd.s32 %s195, 1
      %p199 = scmp.eq.s32.totalorder %s30, 1
      %p200 = scmp.ne.s32.totalorder %s195, %s197
      %p201 = scmp.eq.s32.totalorder %s30, 0
      %p202 = por %p200, %p201
      %p203 = scmp.ne.s32.totalorder %s195, %s197
      %p204 = scmp.eq.s32.totalorder %s35, 1
      %p205 = por %p203, %p204
      %p206 = scmp.ne.s32.totalorder %s197, %s198
      %p207 = scmp.eq.s32.totalorder %s35, 0
      %p208 = por %p206, %p207
      %p209 = scmp.ne.s32.totalorder %s197, %s198
      %p210 = scmp.eq.s32.totalorder %s36, 1
      %p211 = por %p209, %p210
      %p213 = scmp.ne.s32.totalorder %s198, %s212
      %p214 = scmp.eq.s32.totalorder %s36, 0
      %p215 = por %p213, %p214
      %s217 = sadd.s32 %s216, 1
      %p220 = scmp.eq.s32.totalorder %s30, 1
      %p221 = scmp.ne.s32.totalorder %s216, %s218
      %p222 = scmp.eq.s32.totalorder %s30, 0
      %p223 = por %p221, %p222
      %p224 = scmp.ne.s32.totalorder %s216, %s218
      %p225 = scmp.eq.s32.totalorder %s35, 1
      %p226 = por %p224, %p225
      %p227 = scmp.ne.s32.totalorder %s218, %s219
      %p228 = scmp.eq.s32.totalorder %s35, 0
      %p229 = por %p227, %p228
      %p230 = scmp.ne.s32.totalorder %s218, %s219
      %p231 = scmp.eq.s32.totalorder %s36, 1
      %p232 = por %p230, %p231
      %p234 = scmp.ne.s32.totalorder %s219, %s233
      %p235 = scmp.eq.s32.totalorder %s36, 0
      %p236 = por %p234, %p235
      %s238 = sadd.s32 %s237, 1
      %p241 = scmp.eq.s32.totalorder %s30, 1
      %p242 = scmp.ne.s32.totalorder %s237, %s239
      %p243 = scmp.eq.s32.totalorder %s30, 0
      %p244 = por %p242, %p243
      %p245 = scmp.ne.s32.totalorder %s237, %s239
      %p246 = scmp.eq.s32.totalorder %s35, 1
      %p247 = por %p245, %p246
      %p248 = scmp.ne.s32.totalorder %s239, %s240
      %p249 = scmp.eq.s32.totalorder %s35, 0
      %p250 = por %p248, %p249
      %p251 = scmp.ne.s32.totalorder %s239, %s240
      %p252 = scmp.eq.s32.totalorder %s36, 1
      %p253 = por %p251, %p252
      %p255 = scmp.ne.s32.totalorder %s240, %s254
      %p256 = scmp.eq.s32.totalorder %s36, 0
      %p257 = por %p255, %p256
      %s259 = sadd.s32 %s258, 1
      %p262 = scmp.eq.s32.totalorder %s30, 1
      %p263 = scmp.ne.s32.totalorder %s258, %s260
      %p264 = scmp.eq.s32.totalorder %s30, 0
      %p265 = por %p263, %p264
      %p266 = scmp.ne.s32.totalorder %s258, %s260
      %p267 = scmp.eq.s32.totalorder %s35, 1
      %p268 = por %p266, %p267
      %p269 = scmp.ne.s32.totalorder %s260, %s261
      %p270 = scmp.eq.s32.totalorder %s35, 0
      %p271 = por %p269, %p270
      %p272 = scmp.ne.s32.totalorder %s260, %s261
      %p273 = scmp.eq.s32.totalorder %s36, 1
      %p274 = por %p272, %p273
      %p276 = scmp.ne.s32.totalorder %s261, %s275
      %p277 = scmp.eq.s32.totalorder %s36, 0
      %p278 = por %p276, %p277
      %s280 = sadd.s32 %s279, 1
      %p283 = scmp.eq.s32.totalorder %s30, 1
      %p284 = scmp.ne.s32.totalorder %s279, %s281
      %p285 = scmp.eq.s32.totalorder %s30, 0
      %p286 = por %p284, %p285
      %p287 = scmp.ne.s32.totalorder %s279, %s281
      %p288 = scmp.eq.s32.totalorder %s35, 1
      %p289 = por %p287, %p288
      %p290 = scmp.ne.s32.totalorder %s281, %s282
      %p291 = scmp.eq.s32.totalorder %s35, 0
      %p292 = por %p290, %p291
      %p293 = scmp.ne.s32.totalorder %s281, %s282
      %p294 = scmp.eq.s32.totalorder %s36, 1
      %p295 = por %p293, %p294
      %p297 = scmp.ne.s32.totalorder %s282, %s296
      %p298 = scmp.eq.s32.totalorder %s36, 0
      %p299 = por %p297, %p298
      %s300 = ssub.s32 %s30, %s37
      %p301 = scmp.eq.s32.totalorder %s300, 0
      %s303 = sadd.s32 %s302, 1
      %s304 = scalar_select %p301, %s302, %s303
      %p307 = pneg %p301
      %p308 = scmp.eq.s32.totalorder %s30, 1
      %p309 = por %p307, %p308
      %p310 = scmp.ne.s32.totalorder %s302, %s305
      %p311 = scmp.eq.s32.totalorder %s30, 0
      %p312 = por %p310, %p311
      %p313 = scmp.ne.s32.totalorder %s302, %s305
      %p314 = scmp.eq.s32.totalorder %s35, 1
      %p315 = por %p313, %p314
      %p316 = scmp.ne.s32.totalorder %s305, %s306
      %p317 = scmp.eq.s32.totalorder %s35, 0
      %p318 = por %p316, %p317
      %p319 = scmp.ne.s32.totalorder %s305, %s306
      %p320 = scmp.eq.s32.totalorder %s36, 1
      %p321 = por %p319, %p320
      %p323 = scmp.ne.s32.totalorder %s306, %s322
      %p324 = scmp.eq.s32.totalorder %s36, 0
      %p325 = por %p323, %p324
      %s326 = ssub.s32 %s30, %s37
      %p327 = scmp.eq.s32.totalorder %s326, 0
      %s329 = sadd.s32 %s328, 1
      %s330 = scalar_select %p327, %s328, %s329
      %p333 = pneg %p327
      %p334 = scmp.eq.s32.totalorder %s30, 1
      %p335 = por %p333, %p334
      %p336 = scmp.ne.s32.totalorder %s328, %s331
      %p337 = scmp.eq.s32.totalorder %s30, 0
      %p338 = por %p336, %p337
      %p339 = scmp.ne.s32.totalorder %s328, %s331
      %p340 = scmp.eq.s32.totalorder %s35, 1
      %p341 = por %p339, %p340
      %p342 = scmp.ne.s32.totalorder %s331, %s332
      %p343 = scmp.eq.s32.totalorder %s35, 0
      %p344 = por %p342, %p343
      %p345 = scmp.ne.s32.totalorder %s331, %s332
      %p346 = scmp.eq.s32.totalorder %s36, 1
      %p347 = por %p345, %p346
      %p349 = scmp.ne.s32.totalorder %s332, %s348
      %p350 = scmp.eq.s32.totalorder %s36, 0
      %p351 = por %p349, %p350
      %s352 = ssub.s32 %s30, %s37
      %p353 = scmp.eq.s32.totalorder %s352, 0
      %s355 = sadd.s32 %s354, 1
      %s356 = scalar_select %p353, %s354, %s355
      %p359 = pneg %p353
      %p360 = scmp.eq.s32.totalorder %s30, 1
      %p361 = por %p359, %p360
      %p362 = scmp.ne.s32.totalorder %s354, %s357
      %p363 = scmp.eq.s32.totalorder %s30, 0
      %p364 = por %p362, %p363
      %p365 = scmp.ne.s32.totalorder %s354, %s357
      %p366 = scmp.eq.s32.totalorder %s35, 1
      %p367 = por %p365, %p366
      %p368 = scmp.ne.s32.totalorder %s357, %s358
      %p369 = scmp.eq.s32.totalorder %s35, 0
      %p370 = por %p368, %p369
      %p371 = scmp.ne.s32.totalorder %s357, %s358
      %p372 = scmp.eq.s32.totalorder %s36, 1
      %p373 = por %p371, %p372
      %p375 = scmp.ne.s32.totalorder %s358, %s374
      %p376 = scmp.eq.s32.totalorder %s36, 0
      %p377 = por %p375, %p376
      %p378 = scmp.le.s32.totalorder 1, %s30
      %p379 = scmp.lt.s32.totalorder %s30, 3
      %p380 = pnand %p378, %p379
      %p381 = pneg %p380
      // Predicated region
      $region9: #{vae_forward_padded.1} parent=5 // pred_check
        _
      $region10: #{vae_forward_padded.1} parent=5 // pred_check_branch
        %383 = sbr.rel (%p380) target = $region12
      $region11: #{vae_forward_padded.1} parent=5 // pred_region
        %s384 = ssub.s32 %s30, 1
        // Predicated region
        $region13: #{vae_forward_padded.1} parent=11 // pred_check
          %p385 = pneg %p103
        $region14: #{vae_forward_padded.1} parent=11 // pred_check_branch
          %387 = sbr.rel (%p385) target = $region16
        $region15: #{vae_forward_padded.1} parent=11 // pred_region
          %s389 = ssub.s32 25088, 25088
          %390 = vsyncadd [#allocation3], %s389
          %s391 = sshll.u32 [#allocation2], 4
          %s392 = int_to_ptr.vmem [resolvable:$true] %s391
          %397 = dma.hbm_to_vmem [thread:$0]  %s2, 25088, %s392, [#allocation3], 256, 256, 16
        $region16: #{vae_forward_padded.1} parent=11 // pred_fallthru
          _
        // Predicated region
        $region17: #{vae_forward_padded.1} parent=11 // pred_check
          %p398 = pneg %p124
        $region18: #{vae_forward_padded.1} parent=11 // pred_check_branch
          %400 = sbr.rel (%p398) target = $region20
        $region19: #{vae_forward_padded.1} parent=11 // pred_region
          _
        $region20: #{vae_forward_padded.1} parent=11 // pred_fallthru
          _
        // Predicated region
        $region21: #{vae_forward_padded.1} parent=11 // pred_check
          %p401 = pneg %p145
        $region22: #{vae_forward_padded.1} parent=11 // pred_check_branch
          %403 = sbr.rel (%p401) target = $region24
        $region23: #{vae_forward_padded.1} parent=11 // pred_region
          _
        $region24: #{vae_forward_padded.1} parent=11 // pred_fallthru
          _
        // Predicated region
        $region25: #{vae_forward_padded.1} parent=11 // pred_check
          %p404 = pneg %p166
        $region26: #{vae_forward_padded.1} parent=11 // pred_check_branch
          %406 = sbr.rel (%p404) target = $region28
        $region27: #{vae_forward_padded.1} parent=11 // pred_region
          _
        $region28: #{vae_forward_padded.1} parent=11 // pred_fallthru
          _
        // Predicated region
        $region29: #{vae_forward_padded.1} parent=11 // pred_check
          %p407 = pneg %p187
        $region30: #{vae_forward_padded.1} parent=11 // pred_check_branch
          %409 = sbr.rel (%p407) target = $region32
        $region31: #{vae_forward_padded.1} parent=11 // pred_region
          %s411 = ssub.s32 4096, 4096
          %412 = vsyncadd [#allocation6], %s411
          %s413 = sshll.u32 [#allocation5], 4
          %s414 = int_to_ptr.vmem [resolvable:$true] %s413
          %419 = dma.hbm_to_vmem [thread:$0]  %s6, 4096, %s414, [#allocation6], 64, 64, 4
        $region32: #{vae_forward_padded.1} parent=11 // pred_fallthru
          _
        // Predicated region
        $region33: #{vae_forward_padded.1} parent=11 // pred_check
          %p420 = pneg %p208
        $region34: #{vae_forward_padded.1} parent=11 // pred_check_branch
          %422 = sbr.rel (%p420) target = $region36
        $region35: #{vae_forward_padded.1} parent=11 // pred_region
          _
        $region36: #{vae_forward_padded.1} parent=11 // pred_fallthru
          _
        // Predicated region
        $region37: #{vae_forward_padded.1} parent=11 // pred_check
          %p423 = pneg %p229
        $region38: #{vae_forward_padded.1} parent=11 // pred_check_branch
          %425 = sbr.rel (%p423) target = $region40
        $region39: #{vae_forward_padded.1} parent=11 // pred_region
          %s427 = ssub.s32 4096, 4096
          %428 = vsyncadd [#allocation6], %s427
          %s429 = sshll.u32 [#allocation7], 4
          %s430 = int_to_ptr.vmem [resolvable:$true] %s429
          %435 = dma.hbm_to_vmem [thread:$0]  %s8, 4096, %s430, [#allocation6], 256, 256, 16
        $region40: #{vae_forward_padded.1} parent=11 // pred_fallthru
          _
        // Predicated region
        $region41: #{vae_forward_padded.1} parent=11 // pred_check
          %p436 = pneg %p250
        $region42: #{vae_forward_padded.1} parent=11 // pred_check_branch
          %438 = sbr.rel (%p436) target = $region44
        $region43: #{vae_forward_padded.1} parent=11 // pred_region
          _
        $region44: #{vae_forward_padded.1} parent=11 // pred_fallthru
          _
        // Predicated region
        $region45: #{vae_forward_padded.1} parent=11 // pred_check
          %p439 = pneg %p271
        $region46: #{vae_forward_padded.1} parent=11 // pred_check_branch
          %441 = sbr.rel (%p439) target = $region48
        $region47: #{vae_forward_padded.1} parent=11 // pred_region
          %s443 = ssub.s32 28672, 28672
          %444 = vsyncadd [#allocation9], %s443
          %s445 = sshll.u32 [#allocation8], 4
          %s446 = int_to_ptr.vmem [resolvable:$true] %s445
          %451 = dma.hbm_to_vmem [thread:$0]  %s10, 28672, %s446, [#allocation9], 448, 448, 28
        $region48: #{vae_forward_padded.1} parent=11 // pred_fallthru
          _
        // Predicated region
        $region49: #{vae_forward_padded.1} parent=11 // pred_check
          %p452 = pneg %p292
        $region50: #{vae_forward_padded.1} parent=11 // pred_check_branch
          %454 = sbr.rel (%p452) target = $region52
        $region51: #{vae_forward_padded.1} parent=11 // pred_region
          _
        $region52: #{vae_forward_padded.1} parent=11 // pred_fallthru
          _
      $region12: #{vae_forward_padded.1} parent=5 // pred_fallthru
        _
      %p455 = scmp.lt.s32.totalorder %s30, 2
      // Predicated region
      $region53: #{vae_forward_padded.1} parent=5 // pred_check
        %p456 = pneg %p455
      $region54: #{vae_forward_padded.1} parent=5 // pred_check_branch
        %458 = sbr.rel (%p456) target = $region56
      $region55: #{vae_forward_padded.1} parent=5 // pred_region
        // Predicated region
        $region57: #{vae_forward_padded.1} parent=55 // pred_check
          %p459 = pneg %p50
        $region58: #{vae_forward_padded.1} parent=55 // pred_check_branch
          %461 = sbr.rel (%p459) target = $region60
        $region59: #{vae_forward_padded.1} parent=55 // pred_region
          %p462 = scmp.lt.s32.totalorder %s30, 1
          %s463 = scalar_select %p462, %s30, 1
          %s464 = smul.addr %s463, 7
          %s465 = smul.addr %s464, 8
          %s466 = scalar_lea.vmem %s0, %s465
        $region60: #{vae_forward_padded.1} parent=55 // pred_fallthru
          _
        // Predicated region
        $region61: #{vae_forward_padded.1} parent=55 // pred_check
          %p467 = pneg %p76
        $region62: #{vae_forward_padded.1} parent=55 // pred_check_branch
          %469 = sbr.rel (%p467) target = $region64
        $region63: #{vae_forward_padded.1} parent=55 // pred_region
          %p470 = scmp.lt.s32.totalorder %s30, 1
          %s471 = scalar_select %p470, %s30, 1
          %s472 = smul.addr %s471, 8
          %s473 = scalar_lea.vmem %s1, %s472
        $region64: #{vae_forward_padded.1} parent=55 // pred_fallthru
          _
      $region56: #{vae_forward_padded.1} parent=5 // pred_fallthru
        _
      %p474 = scmp.le.s32.totalorder 1, %s30
      %p475 = scmp.lt.s32.totalorder %s30, 3
      %p476 = pnand %p474, %p475
      %p477 = pneg %p476
      // Predicated region
      $region65: #{vae_forward_padded.1} parent=5 // pred_check
        _
      $region66: #{vae_forward_padded.1} parent=5 // pred_check_branch
        %479 = sbr.rel (%p476) target = $region68
      $region67: #{vae_forward_padded.1} parent=5 // pred_region
        %s480 = ssub.s32 %s30, 1
        // Predicated region
        $region69: #{vae_forward_padded.1} parent=67 // pred_check
          %p481 = pneg %p103
        $region70: #{vae_forward_padded.1} parent=67 // pred_check_branch
          %483 = sbr.rel (%p481) target = $region72
        $region71: #{vae_forward_padded.1} parent=67 // pred_region
          %484 = dma.done [#allocation3], 25088
        $region72: #{vae_forward_padded.1} parent=67 // pred_fallthru
          _
        // Predicated region
        $region73: #{vae_forward_padded.1} parent=67 // pred_check
          %p485 = pneg %p187
        $region74: #{vae_forward_padded.1} parent=67 // pred_check_branch
          %487 = sbr.rel (%p485) target = $region76
        $region75: #{vae_forward_padded.1} parent=67 // pred_region
          %488 = dma.done [#allocation6], 4096
        $region76: #{vae_forward_padded.1} parent=67 // pred_fallthru
          _
        // Predicated region
        $region77: #{vae_forward_padded.1} parent=67 // pred_check
          %p489 = pneg %p229
        $region78: #{vae_forward_padded.1} parent=67 // pred_check_branch
          %491 = sbr.rel (%p489) target = $region80
        $region79: #{vae_forward_padded.1} parent=67 // pred_region
          %492 = dma.done [#allocation6], 4096
        $region80: #{vae_forward_padded.1} parent=67 // pred_fallthru
          _
        // Predicated region
        $region81: #{vae_forward_padded.1} parent=67 // pred_check
          %p493 = pneg %p271
        $region82: #{vae_forward_padded.1} parent=67 // pred_check_branch
          %495 = sbr.rel (%p493) target = $region84
        $region83: #{vae_forward_padded.1} parent=67 // pred_region
          %496 = dma.done [#allocation9], 28672
        $region84: #{vae_forward_padded.1} parent=67 // pred_fallthru
          _
        %p497 = scmp.lt.s32.totalorder %s35, 1
        %s498 = scalar_select %p497, %s35, 1
        %s499 = smul.addr %s498, 7
        %s500 = smul.addr %s499, 8
        %s501 = scalar_lea.vmem %s0, %s500
        %p502 = pneg %p56
        %p503 = pneg %p53
        %p504 = scmp.lt.s32.totalorder %s35, 1
        %s505 = scalar_select %p504, %s35, 1
        %s506 = smul.addr %s505, 8
        %s507 = scalar_lea.vmem %s1, %s506
        %p508 = pneg %p82
        %p509 = pneg %p79
        %p510 = pneg %p103
        %p511 = pneg %p100
        %p512 = pneg %p124
        %p513 = pneg %p121
        %p514 = pneg %p145
        %p515 = pneg %p142
        %p516 = pneg %p166
        %p517 = pneg %p163
        %p518 = pneg %p187
        %p519 = pneg %p184
        %p520 = pneg %p208
        %p521 = pneg %p205
        %p522 = pneg %p229
        %p523 = pneg %p226
        %p524 = pneg %p250
        %p525 = pneg %p247
        %p526 = pneg %p271
        %p527 = pneg %p268
        %p528 = pneg %p292
        %p529 = pneg %p289
        %p530 = pneg %p318
        %p531 = pneg %p315
        %s532 = sand.u32 %s305, 1
        %s533 = scalar_lea.sflag [#allocation4], %s532
        %s534 = sand.u32 %s305, 1
        %s535 = smul.addr %s534, 28
        %s536 = scalar_lea.vmem [#allocation10], %s535
        %p537 = pneg %p344
        %p538 = pneg %p341
        %s539 = sand.u32 %s35, 1
        %s540 = scalar_lea.sflag [#allocation12], %s539
        %s541 = sand.u32 %s331, 1
        %s542 = smul.addr %s541, 8
        %s543 = scalar_lea.vmem [#allocation11], %s542
        %p544 = pneg %p370
        %p545 = pneg %p367
        %s546 = sand.u32 %s35, 1
        %s547 = scalar_lea.sflag [#allocation12], %s546
        %s548 = sand.u32 %s357, 1
        %s549 = smul.addr %s548, 8
        %s550 = scalar_lea.vmem [#allocation13], %s549
        %p551 = scmp.lt.s32.totalorder %s35, 1
        %s552 = scalar_select %p551, %s35, 1
        %s553 = smul.addr %s552, 7
        %s554 = smul.addr %s553, 8
        %s555 = scalar_lea.vmem %s0, %s554
        %p556 = scmp.lt.s32.totalorder %s35, 1
        %s557 = scalar_select %p556, %s35, 1
        %s558 = smul.addr %s557, 8
        %s559 = scalar_lea.vmem %s1, %s558
        %v561 = vld [vmem:[%s555] sm:$0xff]
        %v562 = vld [vmem:[%s555 + $0x8] sm:$0xff]
        %v563 = vld [vmem:[%s555 + $0x10] sm:$0xff]
        %v564 = vld [vmem:[%s555 + $0x18] sm:$0xff]
        %v565 = vld [vmem:[%s555 + $0x20] sm:$0xff]
        %v566 = vld [vmem:[%s555 + $0x28] sm:$0xff]
        %v567 = vld [vmem:[%s555 + $0x30] sm:$0xff]
        %v568 = vpack.c.bf16 %v561, %v561
        %v569 = vpack.c.bf16 %v562, %v562
        %v570 = vpack.c.bf16 %v563, %v563
        %v571 = vpack.c.bf16 %v564, %v564
        %v572 = vpack.c.bf16 %v565, %v565
        %v573 = vpack.c.bf16 %v566, %v566
        %v574 = vpack.c.bf16 %v567, %v567
        %v575 = vld [vmem:[%s559] sm:$0xff]
        %v576 = vld [vmem:[#allocation2] sm:$0xff]
        %v577 = vld [vmem:[#allocation2 + $0x8] sm:$0xff]
        %v578 = vld [vmem:[#allocation2 + $0x10] sm:$0xff]
        %v579 = vld [vmem:[#allocation2 + $0x18] sm:$0xff]
        %v580 = vld [vmem:[#allocation2 + $0x20] sm:$0xff]
        %v581 = vld [vmem:[#allocation2 + $0x28] sm:$0xff]
        %v582 = vld [vmem:[#allocation2 + $0x30] sm:$0xff]
        %v583 = vld [vmem:[#allocation2 + $0x38] sm:$0xff]
        %v584 = vld [vmem:[#allocation2 + $0x40] sm:$0xff]
        %v585 = vld [vmem:[#allocation2 + $0x48] sm:$0xff]
        %v586 = vld [vmem:[#allocation2 + $0x50] sm:$0xff]
        %v587 = vld [vmem:[#allocation2 + $0x58] sm:$0xff]
        %v588 = vld [vmem:[#allocation2 + $0x60] sm:$0xff]
        %v589 = vld [vmem:[#allocation2 + $0x68] sm:$0xff]
        %v590 = vld [vmem:[#allocation2 + $0x70] sm:$0xff]
        %v591 = vld [vmem:[#allocation2 + $0x78] sm:$0xff]
        %v592 = vld [vmem:[#allocation2 + $0x80] sm:$0xff]
        %v593 = vld [vmem:[#allocation2 + $0x88] sm:$0xff]
        %v594 = vld [vmem:[#allocation2 + $0x90] sm:$0xff]
        %v595 = vld [vmem:[#allocation2 + $0x98] sm:$0xff]
        %v596 = vld [vmem:[#allocation2 + $0xa0] sm:$0xff]
        %v597 = vld [vmem:[#allocation2 + $0xa8] sm:$0xff]
        %v598 = vld [vmem:[#allocation2 + $0xb0] sm:$0xff]
        %v599 = vld [vmem:[#allocation2 + $0xb8] sm:$0xff]
        %v600 = vld [vmem:[#allocation2 + $0xc0] sm:$0xff]
        %v601 = vld [vmem:[#allocation2 + $0xc8] sm:$0xff]
        %v602 = vld [vmem:[#allocation2 + $0xd0] sm:$0xff]
        %v603 = vld [vmem:[#allocation2 + $0xd8] sm:$0xff]
        %v604 = vld [vmem:[#allocation2 + $0xe0] sm:$0xff]
        %v605 = vld [vmem:[#allocation2 + $0xe8] sm:$0xff]
        %v606 = vld [vmem:[#allocation2 + $0xf0] sm:$0xff]
        %v607 = vld [vmem:[#allocation2 + $0xf8] sm:$0xff]
        %v608 = vld [vmem:[#allocation2 + $0x100] sm:$0xff]
        %v609 = vld [vmem:[#allocation2 + $0x108] sm:$0xff]
        %v610 = vld [vmem:[#allocation2 + $0x110] sm:$0xff]
        %v611 = vld [vmem:[#allocation2 + $0x118] sm:$0xff]
        %v612 = vld [vmem:[#allocation2 + $0x120] sm:$0xff]
        %v613 = vld [vmem:[#allocation2 + $0x128] sm:$0xff]
        %v614 = vld [vmem:[#allocation2 + $0x130] sm:$0xff]
        %v615 = vld [vmem:[#allocation2 + $0x138] sm:$0xff]
        %v616 = vld [vmem:[#allocation2 + $0x140] sm:$0xff]
        %v617 = vld [vmem:[#allocation2 + $0x148] sm:$0xff]
        %v618 = vld [vmem:[#allocation2 + $0x150] sm:$0xff]
        %v619 = vld [vmem:[#allocation2 + $0x158] sm:$0xff]
        %v620 = vld [vmem:[#allocation2 + $0x160] sm:$0xff]
        %v621 = vld [vmem:[#allocation2 + $0x168] sm:$0xff]
        %v622 = vld [vmem:[#allocation2 + $0x170] sm:$0xff]
        %v623 = vld [vmem:[#allocation2 + $0x178] sm:$0xff]
        %v624 = vld [vmem:[#allocation2 + $0x180] sm:$0xff]
        %v625 = vld [vmem:[#allocation2 + $0x188] sm:$0xff]
        %v626 = vld [vmem:[#allocation2 + $0x190] sm:$0xff]
        %v627 = vld [vmem:[#allocation2 + $0x198] sm:$0xff]
        %v628 = vld [vmem:[#allocation2 + $0x1a0] sm:$0xff]
        %v629 = vld [vmem:[#allocation2 + $0x1a8] sm:$0xff]
        %v630 = vld [vmem:[#allocation2 + $0x1b0] sm:$0xff]
        %v631 = vld [vmem:[#allocation2 + $0x1b8] sm:$0xff]
        %v632 = vld [vmem:[#allocation2 + $0x1c0] sm:$0xff]
        %v633 = vld [vmem:[#allocation2 + $0x1c8] sm:$0xff]
        %v634 = vld [vmem:[#allocation2 + $0x1d0] sm:$0xff]
        %v635 = vld [vmem:[#allocation2 + $0x1d8] sm:$0xff]
        %v636 = vld [vmem:[#allocation2 + $0x1e0] sm:$0xff]
        %v637 = vld [vmem:[#allocation2 + $0x1e8] sm:$0xff]
        %v638 = vld [vmem:[#allocation2 + $0x1f0] sm:$0xff]
        %v639 = vld [vmem:[#allocation2 + $0x1f8] sm:$0xff]
        %v640 = vld [vmem:[#allocation2 + $0x200] sm:$0xff]
        %v641 = vld [vmem:[#allocation2 + $0x208] sm:$0xff]
        %v642 = vld [vmem:[#allocation2 + $0x210] sm:$0xff]
        %v643 = vld [vmem:[#allocation2 + $0x218] sm:$0xff]
        %v644 = vld [vmem:[#allocation2 + $0x220] sm:$0xff]
        %v645 = vld [vmem:[#allocation2 + $0x228] sm:$0xff]
        %v646 = vld [vmem:[#allocation2 + $0x230] sm:$0xff]
        %v647 = vld [vmem:[#allocation2 + $0x238] sm:$0xff]
        %v648 = vld [vmem:[#allocation2 + $0x240] sm:$0xff]
        %v649 = vld [vmem:[#allocation2 + $0x248] sm:$0xff]
        %v650 = vld [vmem:[#allocation2 + $0x250] sm:$0xff]
        %v651 = vld [vmem:[#allocation2 + $0x258] sm:$0xff]
        %v652 = vld [vmem:[#allocation2 + $0x260] sm:$0xff]
        %v653 = vld [vmem:[#allocation2 + $0x268] sm:$0xff]
        %v654 = vld [vmem:[#allocation2 + $0x270] sm:$0xff]
        %v655 = vld [vmem:[#allocation2 + $0x278] sm:$0xff]
        %v656 = vld [vmem:[#allocation2 + $0x280] sm:$0xff]
        %v657 = vld [vmem:[#allocation2 + $0x288] sm:$0xff]
        %v658 = vld [vmem:[#allocation2 + $0x290] sm:$0xff]
        %v659 = vld [vmem:[#allocation2 + $0x298] sm:$0xff]
        %v660 = vld [vmem:[#allocation2 + $0x2a0] sm:$0xff]
        %v661 = vld [vmem:[#allocation2 + $0x2a8] sm:$0xff]
        %v662 = vld [vmem:[#allocation2 + $0x2b0] sm:$0xff]
        %v663 = vld [vmem:[#allocation2 + $0x2b8] sm:$0xff]
        %v664 = vld [vmem:[#allocation2 + $0x2c0] sm:$0xff]
        %v665 = vld [vmem:[#allocation2 + $0x2c8] sm:$0xff]
        %v666 = vld [vmem:[#allocation2 + $0x2d0] sm:$0xff]
        %v667 = vld [vmem:[#allocation2 + $0x2d8] sm:$0xff]
        %v668 = vld [vmem:[#allocation2 + $0x2e0] sm:$0xff]
        %v669 = vld [vmem:[#allocation2 + $0x2e8] sm:$0xff]
        %v670 = vld [vmem:[#allocation2 + $0x2f0] sm:$0xff]
        %v671 = vld [vmem:[#allocation2 + $0x2f8] sm:$0xff]
        %v672 = vld [vmem:[#allocation2 + $0x300] sm:$0xff]
        %v673 = vld [vmem:[#allocation2 + $0x308] sm:$0xff]
        %v674 = vld [vmem:[#allocation2 + $0x310] sm:$0xff]
        %v675 = vld [vmem:[#allocation2 + $0x318] sm:$0xff]
        %v676 = vld [vmem:[#allocation2 + $0x320] sm:$0xff]
        %v677 = vld [vmem:[#allocation2 + $0x328] sm:$0xff]
        %v678 = vld [vmem:[#allocation2 + $0x330] sm:$0xff]
        %v679 = vld [vmem:[#allocation2 + $0x338] sm:$0xff]
        %v680 = vld [vmem:[#allocation2 + $0x340] sm:$0xff]
        %v681 = vld [vmem:[#allocation2 + $0x348] sm:$0xff]
        %v682 = vld [vmem:[#allocation2 + $0x350] sm:$0xff]
        %v683 = vld [vmem:[#allocation2 + $0x358] sm:$0xff]
        %v684 = vld [vmem:[#allocation2 + $0x360] sm:$0xff]
        %v685 = vld [vmem:[#allocation2 + $0x368] sm:$0xff]
        %v686 = vld [vmem:[#allocation2 + $0x370] sm:$0xff]
        %v687 = vld [vmem:[#allocation2 + $0x378] sm:$0xff]
        %v688 = vld [vmem:[#allocation2 + $0x380] sm:$0xff]
        %v689 = vld [vmem:[#allocation2 + $0x388] sm:$0xff]
        %v690 = vld [vmem:[#allocation2 + $0x390] sm:$0xff]
        %v691 = vld [vmem:[#allocation2 + $0x398] sm:$0xff]
        %v692 = vld [vmem:[#allocation2 + $0x3a0] sm:$0xff]
        %v693 = vld [vmem:[#allocation2 + $0x3a8] sm:$0xff]
        %v694 = vld [vmem:[#allocation2 + $0x3b0] sm:$0xff]
        %v695 = vld [vmem:[#allocation2 + $0x3b8] sm:$0xff]
        %v696 = vld [vmem:[#allocation2 + $0x3c0] sm:$0xff]
        %v697 = vld [vmem:[#allocation2 + $0x3c8] sm:$0xff]
        %v698 = vld [vmem:[#allocation2 + $0x3d0] sm:$0xff]
        %v699 = vld [vmem:[#allocation2 + $0x3d8] sm:$0xff]
        %v700 = vld [vmem:[#allocation2 + $0x3e0] sm:$0xff]
        %v701 = vld [vmem:[#allocation2 + $0x3e8] sm:$0xff]
        %v702 = vld [vmem:[#allocation2 + $0x3f0] sm:$0xff]
        %v703 = vld [vmem:[#allocation2 + $0x3f8] sm:$0xff]
        %v704 = vld [vmem:[#allocation2 + $0x400] sm:$0xff]
        %v705 = vld [vmem:[#allocation2 + $0x408] sm:$0xff]
        %v706 = vld [vmem:[#allocation2 + $0x410] sm:$0xff]
        %v707 = vld [vmem:[#allocation2 + $0x418] sm:$0xff]
        %v708 = vld [vmem:[#allocation2 + $0x420] sm:$0xff]
        %v709 = vld [vmem:[#allocation2 + $0x428] sm:$0xff]
        %v710 = vld [vmem:[#allocation2 + $0x430] sm:$0xff]
        %v711 = vld [vmem:[#allocation2 + $0x438] sm:$0xff]
        %v712 = vld [vmem:[#allocation2 + $0x440] sm:$0xff]
        %v713 = vld [vmem:[#allocation2 + $0x448] sm:$0xff]
        %v714 = vld [vmem:[#allocation2 + $0x450] sm:$0xff]
        %v715 = vld [vmem:[#allocation2 + $0x458] sm:$0xff]
        %v716 = vld [vmem:[#allocation2 + $0x460] sm:$0xff]
        %v717 = vld [vmem:[#allocation2 + $0x468] sm:$0xff]
        %v718 = vld [vmem:[#allocation2 + $0x470] sm:$0xff]
        %v719 = vld [vmem:[#allocation2 + $0x478] sm:$0xff]
        %v720 = vld [vmem:[#allocation2 + $0x480] sm:$0xff]
        %v721 = vld [vmem:[#allocation2 + $0x488] sm:$0xff]
        %v722 = vld [vmem:[#allocation2 + $0x490] sm:$0xff]
        %v723 = vld [vmem:[#allocation2 + $0x498] sm:$0xff]
        %v724 = vld [vmem:[#allocation2 + $0x4a0] sm:$0xff]
        %v725 = vld [vmem:[#allocation2 + $0x4a8] sm:$0xff]
        %v726 = vld [vmem:[#allocation2 + $0x4b0] sm:$0xff]
        %v727 = vld [vmem:[#allocation2 + $0x4b8] sm:$0xff]
        %v728 = vld [vmem:[#allocation2 + $0x4c0] sm:$0xff]
        %v729 = vld [vmem:[#allocation2 + $0x4c8] sm:$0xff]
        %v730 = vld [vmem:[#allocation2 + $0x4d0] sm:$0xff]
        %v731 = vld [vmem:[#allocation2 + $0x4d8] sm:$0xff]
        %v732 = vld [vmem:[#allocation2 + $0x4e0] sm:$0xff]
        %v733 = vld [vmem:[#allocation2 + $0x4e8] sm:$0xff]
        %v734 = vld [vmem:[#allocation2 + $0x4f0] sm:$0xff]
        %v735 = vld [vmem:[#allocation2 + $0x4f8] sm:$0xff]
        %v736 = vld [vmem:[#allocation2 + $0x500] sm:$0xff]
        %v737 = vld [vmem:[#allocation2 + $0x508] sm:$0xff]
        %v738 = vld [vmem:[#allocation2 + $0x510] sm:$0xff]
        %v739 = vld [vmem:[#allocation2 + $0x518] sm:$0xff]
        %v740 = vld [vmem:[#allocation2 + $0x520] sm:$0xff]
        %v741 = vld [vmem:[#allocation2 + $0x528] sm:$0xff]
        %v742 = vld [vmem:[#allocation2 + $0x530] sm:$0xff]
        %v743 = vld [vmem:[#allocation2 + $0x538] sm:$0xff]
        %v744 = vld [vmem:[#allocation2 + $0x540] sm:$0xff]
        %v745 = vld [vmem:[#allocation2 + $0x548] sm:$0xff]
        %v746 = vld [vmem:[#allocation2 + $0x550] sm:$0xff]
        %v747 = vld [vmem:[#allocation2 + $0x558] sm:$0xff]
        %v748 = vld [vmem:[#allocation2 + $0x560] sm:$0xff]
        %v749 = vld [vmem:[#allocation2 + $0x568] sm:$0xff]
        %v750 = vld [vmem:[#allocation2 + $0x570] sm:$0xff]
        %v751 = vld [vmem:[#allocation2 + $0x578] sm:$0xff]
        %v752 = vld [vmem:[#allocation2 + $0x580] sm:$0xff]
        %v753 = vld [vmem:[#allocation2 + $0x588] sm:$0xff]
        %v754 = vld [vmem:[#allocation2 + $0x590] sm:$0xff]
        %v755 = vld [vmem:[#allocation2 + $0x598] sm:$0xff]
        %v756 = vld [vmem:[#allocation2 + $0x5a0] sm:$0xff]
        %v757 = vld [vmem:[#allocation2 + $0x5a8] sm:$0xff]
        %v758 = vld [vmem:[#allocation2 + $0x5b0] sm:$0xff]
        %v759 = vld [vmem:[#allocation2 + $0x5b8] sm:$0xff]
        %v760 = vld [vmem:[#allocation2 + $0x5c0] sm:$0xff]
        %v761 = vld [vmem:[#allocation2 + $0x5c8] sm:$0xff]
        %v762 = vld [vmem:[#allocation2 + $0x5d0] sm:$0xff]
        %v763 = vld [vmem:[#allocation2 + $0x5d8] sm:$0xff]
        %v764 = vld [vmem:[#allocation2 + $0x5e0] sm:$0xff]
        %v765 = vld [vmem:[#allocation2 + $0x5e8] sm:$0xff]
        %v766 = vld [vmem:[#allocation2 + $0x5f0] sm:$0xff]
        %v767 = vld [vmem:[#allocation2 + $0x5f8] sm:$0xff]
        %v768 = vld [vmem:[#allocation2 + $0x600] sm:$0xff]
        %v769 = vld [vmem:[#allocation2 + $0x608] sm:$0xff]
        %v770 = vld [vmem:[#allocation2 + $0x610] sm:$0xff]
        %v771 = vld [vmem:[#allocation2 + $0x618] sm:$0xff]
        %v772 = vld [vmem:[%s3] sm:$0xf]
        %v774 = vlaneseq
        %v775 = vshrl.u32 %v774, 7
        %v776 = vsub.s32 0, %v775
        %v777 = vrot.slane %v772, %v776
        %v778 = vlaneseq
        %v779 = vshrl.u32 %v778, 7
        %v780 = vsub.s32 1, %v779
        %v781 = vrot.slane %v772, %v780
        %v782 = vlaneseq
        %v783 = vshrl.u32 %v782, 7
        %v784 = vsub.s32 2, %v783
        %v785 = vrot.slane %v772, %v784
        %v786 = vlaneseq
        %v787 = vshrl.u32 %v786, 7
        %v788 = vsub.s32 3, %v787
        %v789 = vrot.slane %v772, %v788
        %v990 = vunpack.c.l.b16 %v576
        %v991 = vunpack.c.h.b16 %v576
        %v992 = vunpack.c.l.b16 %v577
        %v993 = vunpack.c.h.b16 %v577
        %v994 = vunpack.c.l.b16 %v578
        %v995 = vunpack.c.h.b16 %v578
        %v996 = vunpack.c.l.b16 %v579
        %v997 = vunpack.c.h.b16 %v579
        %v998 = vunpack.c.l.b16 %v580
        %v999 = vunpack.c.h.b16 %v580
        %v1000 = vunpack.c.l.b16 %v581
        %v1001 = vunpack.c.h.b16 %v581
        %v1002 = vunpack.c.l.b16 %v582
        %v1003 = vunpack.c.h.b16 %v582
        %v1004 = vunpack.c.l.b16 %v583
        %v1005 = vunpack.c.h.b16 %v583
        %v1006 = vunpack.c.l.b16 %v584
        %v1007 = vunpack.c.h.b16 %v584
        %v1008 = vunpack.c.l.b16 %v585
        %v1009 = vunpack.c.h.b16 %v585
        %v1010 = vunpack.c.l.b16 %v586
        %v1011 = vunpack.c.h.b16 %v586
        %v1012 = vunpack.c.l.b16 %v587
        %v1013 = vunpack.c.h.b16 %v587
        %v1014 = vunpack.c.l.b16 %v588
        %v1015 = vunpack.c.h.b16 %v588
        %v1016 = vunpack.c.l.b16 %v589
        %v1017 = vunpack.c.h.b16 %v589
        %v1018 = vunpack.c.l.b16 %v590
        %v1019 = vunpack.c.h.b16 %v590
        %v1020 = vunpack.c.l.b16 %v591
        %v1021 = vunpack.c.h.b16 %v591
        %v1022 = vunpack.c.l.b16 %v592
        %v1023 = vunpack.c.h.b16 %v592
        %v1024 = vunpack.c.l.b16 %v593
        %v1025 = vunpack.c.h.b16 %v593
        %v1026 = vunpack.c.l.b16 %v594
        %v1027 = vunpack.c.h.b16 %v594
        %v1028 = vunpack.c.l.b16 %v595
        %v1029 = vunpack.c.h.b16 %v595
        %v1030 = vunpack.c.l.b16 %v596
        %v1031 = vunpack.c.h.b16 %v596
        %v1032 = vunpack.c.l.b16 %v597
        %v1033 = vunpack.c.h.b16 %v597
        %v1034 = vunpack.c.l.b16 %v598
        %v1035 = vunpack.c.h.b16 %v598
        %v1036 = vunpack.c.l.b16 %v599
        %v1037 = vunpack.c.h.b16 %v599
        %v1038 = vunpack.c.l.b16 %v600
        %v1039 = vunpack.c.h.b16 %v600
        %v1040 = vunpack.c.l.b16 %v601
        %v1041 = vunpack.c.h.b16 %v601
        %v1042 = vunpack.c.l.b16 %v602
        %v1043 = vunpack.c.h.b16 %v602
        %v1044 = vunpack.c.l.b16 %v603
        %v1045 = vunpack.c.h.b16 %v603
        %v1046 = vunpack.c.l.b16 %v604
        %v1047 = vunpack.c.h.b16 %v604
        %v1048 = vunpack.c.l.b16 %v605
        %v1049 = vunpack.c.h.b16 %v605
        %v1050 = vunpack.c.l.b16 %v606
        %v1051 = vunpack.c.h.b16 %v606
        %v1052 = vunpack.c.l.b16 %v607
        %v1053 = vunpack.c.h.b16 %v607
        %v1054 = vunpack.c.l.b16 %v608
        %v1055 = vunpack.c.h.b16 %v608
        %v1056 = vunpack.c.l.b16 %v609
        %v1057 = vunpack.c.h.b16 %v609
        %v1058 = vunpack.c.l.b16 %v610
        %v1059 = vunpack.c.h.b16 %v610
        %v1060 = vunpack.c.l.b16 %v611
        %v1061 = vunpack.c.h.b16 %v611
        %v1062 = vunpack.c.l.b16 %v612
        %v1063 = vunpack.c.h.b16 %v612
        %v1064 = vunpack.c.l.b16 %v613
        %v1065 = vunpack.c.h.b16 %v613
        %v1066 = vunpack.c.l.b16 %v614
        %v1067 = vunpack.c.h.b16 %v614
        %v1068 = vunpack.c.l.b16 %v615
        %v1069 = vunpack.c.h.b16 %v615
        %v1070 = vunpack.c.l.b16 %v616
        %v1071 = vunpack.c.h.b16 %v616
        %v1072 = vunpack.c.l.b16 %v617
        %v1073 = vunpack.c.h.b16 %v617
        %v1074 = vunpack.c.l.b16 %v618
        %v1075 = vunpack.c.h.b16 %v618
        %v1076 = vunpack.c.l.b16 %v619
        %v1077 = vunpack.c.h.b16 %v619
        %v1078 = vunpack.c.l.b16 %v620
        %v1079 = vunpack.c.h.b16 %v620
        %v1080 = vunpack.c.l.b16 %v621
        %v1081 = vunpack.c.h.b16 %v621
        %v1082 = vunpack.c.l.b16 %v622
        %v1083 = vunpack.c.h.b16 %v622
        %v1084 = vunpack.c.l.b16 %v623
        %v1085 = vunpack.c.h.b16 %v623
        %v1086 = vunpack.c.l.b16 %v624
        %v1087 = vunpack.c.h.b16 %v624
        %v1088 = vunpack.c.l.b16 %v625
        %v1089 = vunpack.c.h.b16 %v625
        %v1090 = vunpack.c.l.b16 %v626
        %v1091 = vunpack.c.h.b16 %v626
        %v1092 = vunpack.c.l.b16 %v627
        %v1093 = vunpack.c.h.b16 %v627
        %v1094 = vunpack.c.l.b16 %v628
        %v1095 = vunpack.c.h.b16 %v628
        %v1096 = vunpack.c.l.b16 %v629
        %v1097 = vunpack.c.h.b16 %v629
        %v1098 = vunpack.c.l.b16 %v630
        %v1099 = vunpack.c.h.b16 %v630
        %v1100 = vunpack.c.l.b16 %v631
        %v1101 = vunpack.c.h.b16 %v631
        %v1102 = vunpack.c.l.b16 %v632
        %v1103 = vunpack.c.h.b16 %v632
        %v1104 = vunpack.c.l.b16 %v633
        %v1105 = vunpack.c.h.b16 %v633
        %v1106 = vunpack.c.l.b16 %v634
        %v1107 = vunpack.c.h.b16 %v634
        %v1108 = vunpack.c.l.b16 %v635
        %v1109 = vunpack.c.h.b16 %v635
        %v1110 = vunpack.c.l.b16 %v636
        %v1111 = vunpack.c.h.b16 %v636
        %v1112 = vunpack.c.l.b16 %v637
        %v1113 = vunpack.c.h.b16 %v637
        %v1114 = vunpack.c.l.b16 %v638
        %v1115 = vunpack.c.h.b16 %v638
        %v1116 = vunpack.c.l.b16 %v639
        %v1117 = vunpack.c.h.b16 %v639
        %v1118 = vunpack.c.l.b16 %v640
        %v1119 = vunpack.c.h.b16 %v640
        %v1120 = vunpack.c.l.b16 %v641
        %v1121 = vunpack.c.h.b16 %v641
        %v1122 = vunpack.c.l.b16 %v642
        %v1123 = vunpack.c.h.b16 %v642
        %v1124 = vunpack.c.l.b16 %v643
        %v1125 = vunpack.c.h.b16 %v643
        %v1126 = vunpack.c.l.b16 %v644
        %v1127 = vunpack.c.h.b16 %v644
        %v1128 = vunpack.c.l.b16 %v645
        %v1129 = vunpack.c.h.b16 %v645
        %v1130 = vunpack.c.l.b16 %v646
        %v1131 = vunpack.c.h.b16 %v646
        %v1132 = vunpack.c.l.b16 %v647
        %v1133 = vunpack.c.h.b16 %v647
        %v1134 = vunpack.c.l.b16 %v648
        %v1135 = vunpack.c.h.b16 %v648
        %v1136 = vunpack.c.l.b16 %v649
        %v1137 = vunpack.c.h.b16 %v649
        %v1138 = vunpack.c.l.b16 %v650
        %v1139 = vunpack.c.h.b16 %v650
        %v1140 = vunpack.c.l.b16 %v651
        %v1141 = vunpack.c.h.b16 %v651
        %v1142 = vunpack.c.l.b16 %v652
        %v1143 = vunpack.c.h.b16 %v652
        %v1144 = vunpack.c.l.b16 %v653
        %v1145 = vunpack.c.h.b16 %v653
        %v1146 = vunpack.c.l.b16 %v654
        %v1147 = vunpack.c.h.b16 %v654
        %v1148 = vunpack.c.l.b16 %v655
        %v1149 = vunpack.c.h.b16 %v655
        %v1150 = vunpack.c.l.b16 %v656
        %v1151 = vunpack.c.h.b16 %v656
        %v1152 = vunpack.c.l.b16 %v657
        %v1153 = vunpack.c.h.b16 %v657
        %v1154 = vunpack.c.l.b16 %v658
        %v1155 = vunpack.c.h.b16 %v658
        %v1156 = vunpack.c.l.b16 %v659
        %v1157 = vunpack.c.h.b16 %v659
        %v1158 = vunpack.c.l.b16 %v660
        %v1159 = vunpack.c.h.b16 %v660
        %v1160 = vunpack.c.l.b16 %v661
        %v1161 = vunpack.c.h.b16 %v661
        %v1162 = vunpack.c.l.b16 %v662
        %v1163 = vunpack.c.h.b16 %v662
        %v1164 = vunpack.c.l.b16 %v663
        %v1165 = vunpack.c.h.b16 %v663
        %v1166 = vunpack.c.l.b16 %v664
        %v1167 = vunpack.c.h.b16 %v664
        %v1168 = vunpack.c.l.b16 %v665
        %v1169 = vunpack.c.h.b16 %v665
        %v1170 = vunpack.c.l.b16 %v666
        %v1171 = vunpack.c.h.b16 %v666
        %v1172 = vunpack.c.l.b16 %v667
        %v1173 = vunpack.c.h.b16 %v667
        %v1174 = vunpack.c.l.b16 %v668
        %v1175 = vunpack.c.h.b16 %v668
        %v1176 = vunpack.c.l.b16 %v669
        %v1177 = vunpack.c.h.b16 %v669
        %v1178 = vunpack.c.l.b16 %v670
        %v1179 = vunpack.c.h.b16 %v670
        %v1180 = vunpack.c.l.b16 %v671
        %v1181 = vunpack.c.h.b16 %v671
        %v1182 = vunpack.c.l.b16 %v672
        %v1183 = vunpack.c.h.b16 %v672
        %v1184 = vunpack.c.l.b16 %v673
        %v1185 = vunpack.c.h.b16 %v673
        %v1186 = vunpack.c.l.b16 %v674
        %v1187 = vunpack.c.h.b16 %v674
        %v1188 = vunpack.c.l.b16 %v675
        %v1189 = vunpack.c.h.b16 %v675
        %v1190 = vunpack.c.l.b16 %v676
        %v1191 = vunpack.c.h.b16 %v676
        %v1192 = vunpack.c.l.b16 %v677
        %v1193 = vunpack.c.h.b16 %v677
        %v1194 = vunpack.c.l.b16 %v678
        %v1195 = vunpack.c.h.b16 %v678
        %v1196 = vunpack.c.l.b16 %v679
        %v1197 = vunpack.c.h.b16 %v679
        %v1198 = vunpack.c.l.b16 %v680
        %v1199 = vunpack.c.h.b16 %v680
        %v1200 = vunpack.c.l.b16 %v681
        %v1201 = vunpack.c.h.b16 %v681
        %v1202 = vunpack.c.l.b16 %v682
        %v1203 = vunpack.c.h.b16 %v682
        %v1204 = vunpack.c.l.b16 %v683
        %v1205 = vunpack.c.h.b16 %v683
        %v1206 = vunpack.c.l.b16 %v684
        %v1207 = vunpack.c.h.b16 %v684
        %v1208 = vunpack.c.l.b16 %v685
        %v1209 = vunpack.c.h.b16 %v685
        %v1210 = vunpack.c.l.b16 %v686
        %v1211 = vunpack.c.h.b16 %v686
        %v1212 = vunpack.c.l.b16 %v687
        %v1213 = vunpack.c.h.b16 %v687
        %v1214 = vunpack.c.l.b16 %v688
        %v1215 = vunpack.c.h.b16 %v688
        %v1216 = vunpack.c.l.b16 %v689
        %v1217 = vunpack.c.h.b16 %v689
        %v1218 = vunpack.c.l.b16 %v690
        %v1219 = vunpack.c.h.b16 %v690
        %v1220 = vunpack.c.l.b16 %v691
        %v1221 = vunpack.c.h.b16 %v691
        %v1222 = vunpack.c.l.b16 %v692
        %v1223 = vunpack.c.h.b16 %v692
        %v1224 = vunpack.c.l.b16 %v693
        %v1225 = vunpack.c.h.b16 %v693
        %v1226 = vunpack.c.l.b16 %v694
        %v1227 = vunpack.c.h.b16 %v694
        %v1228 = vunpack.c.l.b16 %v695
        %v1229 = vunpack.c.h.b16 %v695
        %v1230 = vunpack.c.l.b16 %v696
        %v1231 = vunpack.c.h.b16 %v696
        %v1232 = vunpack.c.l.b16 %v697
        %v1233 = vunpack.c.h.b16 %v697
        %v1234 = vunpack.c.l.b16 %v698
        %v1235 = vunpack.c.h.b16 %v698
        %v1236 = vunpack.c.l.b16 %v699
        %v1237 = vunpack.c.h.b16 %v699
        %v1238 = vunpack.c.l.b16 %v700
        %v1239 = vunpack.c.h.b16 %v700
        %v1240 = vunpack.c.l.b16 %v701
        %v1241 = vunpack.c.h.b16 %v701
        %v1242 = vunpack.c.l.b16 %v702
        %v1243 = vunpack.c.h.b16 %v702
        %v1244 = vunpack.c.l.b16 %v703
        %v1245 = vunpack.c.h.b16 %v703
        %v1246 = vunpack.c.l.b16 %v704
        %v1247 = vunpack.c.h.b16 %v704
        %v1248 = vunpack.c.l.b16 %v705
        %v1249 = vunpack.c.h.b16 %v705
        %v1250 = vunpack.c.l.b16 %v706
        %v1251 = vunpack.c.h.b16 %v706
        %v1252 = vunpack.c.l.b16 %v707
        %v1253 = vunpack.c.h.b16 %v707
        %v1254 = vunpack.c.l.b16 %v708
        %v1255 = vunpack.c.h.b16 %v708
        %v1256 = vunpack.c.l.b16 %v709
        %v1257 = vunpack.c.h.b16 %v709
        %v1258 = vunpack.c.l.b16 %v710
        %v1259 = vunpack.c.h.b16 %v710
        %v1260 = vunpack.c.l.b16 %v711
        %v1261 = vunpack.c.h.b16 %v711
        %v1262 = vunpack.c.l.b16 %v712
        %v1263 = vunpack.c.h.b16 %v712
        %v1264 = vunpack.c.l.b16 %v713
        %v1265 = vunpack.c.h.b16 %v713
        %v1266 = vunpack.c.l.b16 %v714
        %v1267 = vunpack.c.h.b16 %v714
        %v1268 = vunpack.c.l.b16 %v715
        %v1269 = vunpack.c.h.b16 %v715
        %v1270 = vunpack.c.l.b16 %v716
        %v1271 = vunpack.c.h.b16 %v716
        %v1272 = vunpack.c.l.b16 %v717
        %v1273 = vunpack.c.h.b16 %v717
        %v1274 = vunpack.c.l.b16 %v718
        %v1275 = vunpack.c.h.b16 %v718
        %v1276 = vunpack.c.l.b16 %v719
        %v1277 = vunpack.c.h.b16 %v719
        %v1278 = vunpack.c.l.b16 %v720
        %v1279 = vunpack.c.h.b16 %v720
        %v1280 = vunpack.c.l.b16 %v721
        %v1281 = vunpack.c.h.b16 %v721
        %v1282 = vunpack.c.l.b16 %v722
        %v1283 = vunpack.c.h.b16 %v722
        %v1284 = vunpack.c.l.b16 %v723
        %v1285 = vunpack.c.h.b16 %v723
        %v1286 = vunpack.c.l.b16 %v724
        %v1287 = vunpack.c.h.b16 %v724
        %v1288 = vunpack.c.l.b16 %v725
        %v1289 = vunpack.c.h.b16 %v725
        %v1290 = vunpack.c.l.b16 %v726
        %v1291 = vunpack.c.h.b16 %v726
        %v1292 = vunpack.c.l.b16 %v727
        %v1293 = vunpack.c.h.b16 %v727
        %v1294 = vunpack.c.l.b16 %v728
        %v1295 = vunpack.c.h.b16 %v728
        %v1296 = vunpack.c.l.b16 %v729
        %v1297 = vunpack.c.h.b16 %v729
        %v1298 = vunpack.c.l.b16 %v730
        %v1299 = vunpack.c.h.b16 %v730
        %v1300 = vunpack.c.l.b16 %v731
        %v1301 = vunpack.c.h.b16 %v731
        %v1302 = vunpack.c.l.b16 %v732
        %v1303 = vunpack.c.h.b16 %v732
        %v1304 = vunpack.c.l.b16 %v733
        %v1305 = vunpack.c.h.b16 %v733
        %v1306 = vunpack.c.l.b16 %v734
        %v1307 = vunpack.c.h.b16 %v734
        %v1308 = vunpack.c.l.b16 %v735
        %v1309 = vunpack.c.h.b16 %v735
        %v1310 = vunpack.c.l.b16 %v736
        %v1311 = vunpack.c.h.b16 %v736
        %v1312 = vunpack.c.l.b16 %v737
        %v1313 = vunpack.c.h.b16 %v737
        %v1314 = vunpack.c.l.b16 %v738
        %v1315 = vunpack.c.h.b16 %v738
        %v1316 = vunpack.c.l.b16 %v739
        %v1317 = vunpack.c.h.b16 %v739
        %v1318 = vunpack.c.l.b16 %v740
        %v1319 = vunpack.c.h.b16 %v740
        %v1320 = vunpack.c.l.b16 %v741
        %v1321 = vunpack.c.h.b16 %v741
        %v1322 = vunpack.c.l.b16 %v742
        %v1323 = vunpack.c.h.b16 %v742
        %v1324 = vunpack.c.l.b16 %v743
        %v1325 = vunpack.c.h.b16 %v743
        %v1326 = vunpack.c.l.b16 %v744
        %v1327 = vunpack.c.h.b16 %v744
        %v1328 = vunpack.c.l.b16 %v745
        %v1329 = vunpack.c.h.b16 %v745
        %v1330 = vunpack.c.l.b16 %v746
        %v1331 = vunpack.c.h.b16 %v746
        %v1332 = vunpack.c.l.b16 %v747
        %v1333 = vunpack.c.h.b16 %v747
        %v1334 = vunpack.c.l.b16 %v748
        %v1335 = vunpack.c.h.b16 %v748
        %v1336 = vunpack.c.l.b16 %v749
        %v1337 = vunpack.c.h.b16 %v749
        %v1338 = vunpack.c.l.b16 %v750
        %v1339 = vunpack.c.h.b16 %v750
        %v1340 = vunpack.c.l.b16 %v751
        %v1341 = vunpack.c.h.b16 %v751
        %v1342 = vunpack.c.l.b16 %v752
        %v1343 = vunpack.c.h.b16 %v752
        %v1344 = vunpack.c.l.b16 %v753
        %v1345 = vunpack.c.h.b16 %v753
        %v1346 = vunpack.c.l.b16 %v754
        %v1347 = vunpack.c.h.b16 %v754
        %v1348 = vunpack.c.l.b16 %v755
        %v1349 = vunpack.c.h.b16 %v755
        %v1350 = vunpack.c.l.b16 %v756
        %v1351 = vunpack.c.h.b16 %v756
        %v1352 = vunpack.c.l.b16 %v757
        %v1353 = vunpack.c.h.b16 %v757
        %v1354 = vunpack.c.l.b16 %v758
        %v1355 = vunpack.c.h.b16 %v758
        %v1356 = vunpack.c.l.b16 %v759
        %v1357 = vunpack.c.h.b16 %v759
        %v1358 = vunpack.c.l.b16 %v760
        %v1359 = vunpack.c.h.b16 %v760
        %v1360 = vunpack.c.l.b16 %v761
        %v1361 = vunpack.c.h.b16 %v761
        %v1362 = vunpack.c.l.b16 %v762
        %v1363 = vunpack.c.h.b16 %v762
        %v1364 = vunpack.c.l.b16 %v763
        %v1365 = vunpack.c.h.b16 %v763
        %v1366 = vunpack.c.l.b16 %v764
        %v1367 = vunpack.c.h.b16 %v764
        %v1368 = vunpack.c.l.b16 %v765
        %v1369 = vunpack.c.h.b16 %v765
        %v1370 = vunpack.c.l.b16 %v766
        %v1371 = vunpack.c.h.b16 %v766
        %v1372 = vunpack.c.l.b16 %v767
        %v1373 = vunpack.c.h.b16 %v767
        %v1374 = vunpack.c.l.b16 %v768
        %v1375 = vunpack.c.h.b16 %v768
        %v1376 = vunpack.c.l.b16 %v769
        %v1377 = vunpack.c.h.b16 %v769
        %v1378 = vunpack.c.l.b16 %v770
        %v1379 = vunpack.c.h.b16 %v770
        %v1380 = vunpack.c.l.b16 %v771
        %v1381 = vunpack.c.h.b16 %v771
        %v1382 = vpack.c.b16 %v994, %v990
        %v1383 = vpack.c.b16 %v995, %v991
        %v1384 = vpack.c.b16 %v996, %v992
        %v1385 = vpack.c.b16 %v997, %v993
        %v1386 = vpack.c.b16 %v1002, %v998
        %v1387 = vpack.c.b16 %v1003, %v999
        %v1388 = vpack.c.b16 %v1004, %v1000
        %v1389 = vpack.c.b16 %v1005, %v1001
        %v1390 = vpack.c.b16 %v1010, %v1006
        %v1391 = vpack.c.b16 %v1011, %v1007
        %v1392 = vpack.c.b16 %v1012, %v1008
        %v1393 = vpack.c.b16 %v1013, %v1009
        %v1394 = vpack.c.b16 %v1018, %v1014
        %v1395 = vpack.c.b16 %v1019, %v1015
        %v1396 = vpack.c.b16 %v1020, %v1016
        %v1397 = vpack.c.b16 %v1021, %v1017
        %v1398 = vpack.c.b16 %v1026, %v1022
        %v1399 = vpack.c.b16 %v1027, %v1023
        %v1400 = vpack.c.b16 %v1028, %v1024
        %v1401 = vpack.c.b16 %v1029, %v1025
        %v1402 = vpack.c.b16 %v1034, %v1030
        %v1403 = vpack.c.b16 %v1035, %v1031
        %v1404 = vpack.c.b16 %v1036, %v1032
        %v1405 = vpack.c.b16 %v1037, %v1033
        %v1406 = vpack.c.b16 %v1042, %v1038
        %v1407 = vpack.c.b16 %v1043, %v1039
        %v1408 = vpack.c.b16 %v1044, %v1040
        %v1409 = vpack.c.b16 %v1045, %v1041
        %v1410 = vpack.c.b16 %v1050, %v1046
        %v1411 = vpack.c.b16 %v1051, %v1047
        %v1412 = vpack.c.b16 %v1052, %v1048
        %v1413 = vpack.c.b16 %v1053, %v1049
        %v1414 = vpack.c.b16 %v1058, %v1054
        %v1415 = vpack.c.b16 %v1059, %v1055
        %v1416 = vpack.c.b16 %v1060, %v1056
        %v1417 = vpack.c.b16 %v1061, %v1057
        %v1418 = vpack.c.b16 %v1066, %v1062
        %v1419 = vpack.c.b16 %v1067, %v1063
        %v1420 = vpack.c.b16 %v1068, %v1064
        %v1421 = vpack.c.b16 %v1069, %v1065
        %v1422 = vpack.c.b16 %v1074, %v1070
        %v1423 = vpack.c.b16 %v1075, %v1071
        %v1424 = vpack.c.b16 %v1076, %v1072
        %v1425 = vpack.c.b16 %v1077, %v1073
        %v1426 = vpack.c.b16 %v1082, %v1078
        %v1427 = vpack.c.b16 %v1083, %v1079
        %v1428 = vpack.c.b16 %v1084, %v1080
        %v1429 = vpack.c.b16 %v1085, %v1081
        %v1430 = vpack.c.b16 %v1090, %v1086
        %v1431 = vpack.c.b16 %v1091, %v1087
        %v1432 = vpack.c.b16 %v1092, %v1088
        %v1433 = vpack.c.b16 %v1093, %v1089
        %v1434 = vpack.c.b16 %v1098, %v1094
        %v1435 = vpack.c.b16 %v1099, %v1095
        %v1436 = vpack.c.b16 %v1100, %v1096
        %v1437 = vpack.c.b16 %v1101, %v1097
        %v1438 = vpack.c.b16 %v1106, %v1102
        %v1439 = vpack.c.b16 %v1107, %v1103
        %v1440 = vpack.c.b16 %v1108, %v1104
        %v1441 = vpack.c.b16 %v1109, %v1105
        %v1442 = vpack.c.b16 %v1114, %v1110
        %v1443 = vpack.c.b16 %v1115, %v1111
        %v1444 = vpack.c.b16 %v1116, %v1112
        %v1445 = vpack.c.b16 %v1117, %v1113
        %v1446 = vpack.c.b16 %v1122, %v1118
        %v1447 = vpack.c.b16 %v1123, %v1119
        %v1448 = vpack.c.b16 %v1124, %v1120
        %v1449 = vpack.c.b16 %v1125, %v1121
        %v1450 = vpack.c.b16 %v1130, %v1126
        %v1451 = vpack.c.b16 %v1131, %v1127
        %v1452 = vpack.c.b16 %v1132, %v1128
        %v1453 = vpack.c.b16 %v1133, %v1129
        %v1454 = vpack.c.b16 %v1138, %v1134
        %v1455 = vpack.c.b16 %v1139, %v1135
        %v1456 = vpack.c.b16 %v1140, %v1136
        %v1457 = vpack.c.b16 %v1141, %v1137
        %v1458 = vpack.c.b16 %v1146, %v1142
        %v1459 = vpack.c.b16 %v1147, %v1143
        %v1460 = vpack.c.b16 %v1148, %v1144
        %v1461 = vpack.c.b16 %v1149, %v1145
        %v1462 = vpack.c.b16 %v1154, %v1150
        %v1463 = vpack.c.b16 %v1155, %v1151
        %v1464 = vpack.c.b16 %v1156, %v1152
        %v1465 = vpack.c.b16 %v1157, %v1153
        %v1466 = vpack.c.b16 %v1162, %v1158
        %v1467 = vpack.c.b16 %v1163, %v1159
        %v1468 = vpack.c.b16 %v1164, %v1160
        %v1469 = vpack.c.b16 %v1165, %v1161
        %v1470 = vpack.c.b16 %v1170, %v1166
        %v1471 = vpack.c.b16 %v1171, %v1167
        %v1472 = vpack.c.b16 %v1172, %v1168
        %v1473 = vpack.c.b16 %v1173, %v1169
        %v1474 = vpack.c.b16 %v1178, %v1174
        %v1475 = vpack.c.b16 %v1179, %v1175
        %v1476 = vpack.c.b16 %v1180, %v1176
        %v1477 = vpack.c.b16 %v1181, %v1177
        %v1478 = vpack.c.b16 %v1186, %v1182
        %v1479 = vpack.c.b16 %v1187, %v1183
        %v1480 = vpack.c.b16 %v1188, %v1184
        %v1481 = vpack.c.b16 %v1189, %v1185
        %v1482 = vpack.c.b16 %v1194, %v1190
        %v1483 = vpack.c.b16 %v1195, %v1191
        %v1484 = vpack.c.b16 %v1196, %v1192
        %v1485 = vpack.c.b16 %v1197, %v1193
        %v1486 = vpack.c.b16 %v1202, %v1198
        %v1487 = vpack.c.b16 %v1203, %v1199
        %v1488 = vpack.c.b16 %v1204, %v1200
        %v1489 = vpack.c.b16 %v1205, %v1201
        %v1490 = vpack.c.b16 %v1210, %v1206
        %v1491 = vpack.c.b16 %v1211, %v1207
        %v1492 = vpack.c.b16 %v1212, %v1208
        %v1493 = vpack.c.b16 %v1213, %v1209
        %v1494 = vpack.c.b16 %v1218, %v1214
        %v1495 = vpack.c.b16 %v1219, %v1215
        %v1496 = vpack.c.b16 %v1220, %v1216
        %v1497 = vpack.c.b16 %v1221, %v1217
        %v1498 = vpack.c.b16 %v1226, %v1222
        %v1499 = vpack.c.b16 %v1227, %v1223
        %v1500 = vpack.c.b16 %v1228, %v1224
        %v1501 = vpack.c.b16 %v1229, %v1225
        %v1502 = vpack.c.b16 %v1234, %v1230
        %v1503 = vpack.c.b16 %v1235, %v1231
        %v1504 = vpack.c.b16 %v1236, %v1232
        %v1505 = vpack.c.b16 %v1237, %v1233
        %v1506 = vpack.c.b16 %v1242, %v1238
        %v1507 = vpack.c.b16 %v1243, %v1239
        %v1508 = vpack.c.b16 %v1244, %v1240
        %v1509 = vpack.c.b16 %v1245, %v1241
        %v1510 = vpack.c.b16 %v1250, %v1246
        %v1511 = vpack.c.b16 %v1251, %v1247
        %v1512 = vpack.c.b16 %v1252, %v1248
        %v1513 = vpack.c.b16 %v1253, %v1249
        %v1514 = vpack.c.b16 %v1258, %v1254
        %v1515 = vpack.c.b16 %v1259, %v1255
        %v1516 = vpack.c.b16 %v1260, %v1256
        %v1517 = vpack.c.b16 %v1261, %v1257
        %v1518 = vpack.c.b16 %v1266, %v1262
        %v1519 = vpack.c.b16 %v1267, %v1263
        %v1520 = vpack.c.b16 %v1268, %v1264
        %v1521 = vpack.c.b16 %v1269, %v1265
        %v1522 = vpack.c.b16 %v1274, %v1270
        %v1523 = vpack.c.b16 %v1275, %v1271
        %v1524 = vpack.c.b16 %v1276, %v1272
        %v1525 = vpack.c.b16 %v1277, %v1273
        %v1526 = vpack.c.b16 %v1282, %v1278
        %v1527 = vpack.c.b16 %v1283, %v1279
        %v1528 = vpack.c.b16 %v1284, %v1280
        %v1529 = vpack.c.b16 %v1285, %v1281
        %v1530 = vpack.c.b16 %v1290, %v1286
        %v1531 = vpack.c.b16 %v1291, %v1287
        %v1532 = vpack.c.b16 %v1292, %v1288
        %v1533 = vpack.c.b16 %v1293, %v1289
        %v1534 = vpack.c.b16 %v1298, %v1294
        %v1535 = vpack.c.b16 %v1299, %v1295
        %v1536 = vpack.c.b16 %v1300, %v1296
        %v1537 = vpack.c.b16 %v1301, %v1297
        %v1538 = vpack.c.b16 %v1306, %v1302
        %v1539 = vpack.c.b16 %v1307, %v1303
        %v1540 = vpack.c.b16 %v1308, %v1304
        %v1541 = vpack.c.b16 %v1309, %v1305
        %v1542 = vpack.c.b16 %v1314, %v1310
        %v1543 = vpack.c.b16 %v1315, %v1311
        %v1544 = vpack.c.b16 %v1316, %v1312
        %v1545 = vpack.c.b16 %v1317, %v1313
        %v1546 = vpack.c.b16 %v1322, %v1318
        %v1547 = vpack.c.b16 %v1323, %v1319
        %v1548 = vpack.c.b16 %v1324, %v1320
        %v1549 = vpack.c.b16 %v1325, %v1321
        %v1550 = vpack.c.b16 %v1330, %v1326
        %v1551 = vpack.c.b16 %v1331, %v1327
        %v1552 = vpack.c.b16 %v1332, %v1328
        %v1553 = vpack.c.b16 %v1333, %v1329
        %v1554 = vpack.c.b16 %v1338, %v1334
        %v1555 = vpack.c.b16 %v1339, %v1335
        %v1556 = vpack.c.b16 %v1340, %v1336
        %v1557 = vpack.c.b16 %v1341, %v1337
        %v1558 = vpack.c.b16 %v1346, %v1342
        %v1559 = vpack.c.b16 %v1347, %v1343
        %v1560 = vpack.c.b16 %v1348, %v1344
        %v1561 = vpack.c.b16 %v1349, %v1345
        %v1562 = vpack.c.b16 %v1354, %v1350
        %v1563 = vpack.c.b16 %v1355, %v1351
        %v1564 = vpack.c.b16 %v1356, %v1352
        %v1565 = vpack.c.b16 %v1357, %v1353
        %v1566 = vpack.c.b16 %v1362, %v1358
        %v1567 = vpack.c.b16 %v1363, %v1359
        %v1568 = vpack.c.b16 %v1364, %v1360
        %v1569 = vpack.c.b16 %v1365, %v1361
        %v1570 = vpack.c.b16 %v1370, %v1366
        %v1571 = vpack.c.b16 %v1371, %v1367
        %v1572 = vpack.c.b16 %v1372, %v1368
        %v1573 = vpack.c.b16 %v1373, %v1369
        %v1574 = vpack.c.b16 %v1378, %v1374
        %v1575 = vpack.c.b16 %v1379, %v1375
        %v1576 = vpack.c.b16 %v1380, %v1376
        %v1577 = vpack.c.b16 %v1381, %v1377
        %vm1774 = vcmask 130048
        %v1776 = vsel %vm1774, %v574, 0
        %1778 = vmatprep.subr.bf16.mxu0 %v1383
        %1779 = vmatpush1.bf16.msra.mxu0 %v1382
        %1780 = vmatprep.subr.bf16.mxu0 %v1387
        %1781 = vmatpush1.bf16.msra.mxu0 %v1386
        %1782 = vmatprep.subr.bf16.mxu0 %v1391
        %1783 = vmatpush1.bf16.msra.mxu0 %v1390
        %1784 = vmatprep.subr.bf16.mxu0 %v1395
        %1785 = vmatpush1.bf16.msra.mxu0 %v1394
        %1786 = vmatprep.subr.bf16.mxu0 %v1399
        %1787 = vmatpush1.bf16.msra.mxu0 %v1398
        %1788 = vmatprep.subr.bf16.mxu0 %v1403
        %1789 = vmatpush1.bf16.msra.mxu0 %v1402
        %1790 = vmatprep.subr.bf16.mxu0 %v1407
        %1791 = vmatpush1.bf16.msra.mxu0 %v1406
        %1792 = vmatprep.subr.bf16.mxu0 %v1411
        %1793 = vmatpush1.bf16.msra.mxu0 %v1410
        %1794 = vmatprep.subr.bf16.mxu0 %v1415
        %1795 = vmatpush1.bf16.msra.mxu0 %v1414
        %1796 = vmatprep.subr.bf16.mxu0 %v1419
        %1797 = vmatpush1.bf16.msra.mxu0 %v1418
        %1798 = vmatprep.subr.bf16.mxu0 %v1423
        %1799 = vmatpush1.bf16.msra.mxu0 %v1422
        %1800 = vmatprep.subr.bf16.mxu0 %v1427
        %1801 = vmatpush1.bf16.msra.mxu0 %v1426
        %1802 = vmatprep.subr.bf16.mxu0 %v1431
        %1803 = vmatpush1.bf16.msra.mxu0 %v1430
        %1804 = vmatprep.subr.bf16.mxu0 %v1435
        %1805 = vmatpush1.bf16.msra.mxu0 %v1434
        %1806 = vmatprep.subr.bf16.mxu0 %v1439
        %1807 = vmatpush1.bf16.msra.mxu0 %v1438
        %1808 = vmatprep.subr.bf16.mxu0 %v1443
        %1809 = vmatpush1.bf16.msra.mxu0 %v1442
        %1810 = vmatprep.mubr.bf16.mxu0 %v569
        %1811 = vmatmul.mubr.bf16.gmra.mrb[0].mxu0 %v568
        %v1812 = vpop.f32.mrb[0].mxu0
        %v1813 = vadd.f32 %v777, %v1812
        %v1814 = vpop.f32.mrb[0].mxu0
        %v1815 = vadd.f32 %v781, %v1814
        %v1816 = vpop.f32.mrb[0].mxu0
        %v1817 = vpop.f32.mrb[0].mxu0
        %1818 = vdwg.mxu0
        %1819 = vmatprep.subr.bf16.mxu0 %v1447
        %1820 = vmatpush1.bf16.msra.mxu0 %v1446
        %1821 = vmatprep.subr.bf16.mxu0 %v1451
        %1822 = vmatpush1.bf16.msra.mxu0 %v1450
        %1823 = vmatprep.subr.bf16.mxu0 %v1455
        %1824 = vmatpush1.bf16.msra.mxu0 %v1454
        %1825 = vmatprep.subr.bf16.mxu0 %v1459
        %1826 = vmatpush1.bf16.msra.mxu0 %v1458
        %1827 = vmatprep.subr.bf16.mxu0 %v1463
        %1828 = vmatpush1.bf16.msra.mxu0 %v1462
        %1829 = vmatprep.subr.bf16.mxu0 %v1467
        %1830 = vmatpush1.bf16.msra.mxu0 %v1466
        %1831 = vmatprep.subr.bf16.mxu0 %v1471
        %1832 = vmatpush1.bf16.msra.mxu0 %v1470
        %1833 = vmatprep.subr.bf16.mxu0 %v1475
        %1834 = vmatpush1.bf16.msra.mxu0 %v1474
        %1835 = vmatprep.subr.bf16.mxu0 %v1479
        %1836 = vmatpush1.bf16.msra.mxu0 %v1478
        %1837 = vmatprep.subr.bf16.mxu0 %v1483
        %1838 = vmatpush1.bf16.msra.mxu0 %v1482
        %1839 = vmatprep.subr.bf16.mxu0 %v1487
        %1840 = vmatpush1.bf16.msra.mxu0 %v1486
        %1841 = vmatprep.subr.bf16.mxu0 %v1491
        %1842 = vmatpush1.bf16.msra.mxu0 %v1490
        %1843 = vmatprep.subr.bf16.mxu0 %v1495
        %1844 = vmatpush1.bf16.msra.mxu0 %v1494
        %1845 = vmatprep.subr.bf16.mxu0 %v1499
        %1846 = vmatpush1.bf16.msra.mxu0 %v1498
        %1847 = vmatprep.subr.bf16.mxu0 %v1503
        %1848 = vmatpush1.bf16.msra.mxu0 %v1502
        %1849 = vmatprep.subr.bf16.mxu0 %v1507
        %1850 = vmatpush1.bf16.msra.mxu0 %v1506
        %1851 = vmatprep.mubr.bf16.mxu0 %v571
        %1852 = vmatmul.mubr.bf16.gmra.mrb[0].mxu0 %v570
        %v1853 = vpop.f32.mrb[0].mxu0
        %v1854 = vadd.f32 %v1813, %v1853
        %v1855 = vpop.f32.mrb[0].mxu0
        %v1856 = vadd.f32 %v1815, %v1855
        %v1857 = vpop.f32.mrb[0].mxu0
        %v1858 = vpop.f32.mrb[0].mxu0
        %1859 = vdwg.mxu0
        %1860 = vmatprep.subr.bf16.mxu0 %v1511
        %1861 = vmatpush1.bf16.msra.mxu0 %v1510
        %1862 = vmatprep.subr.bf16.mxu0 %v1515
        %1863 = vmatpush1.bf16.msra.mxu0 %v1514
        %1864 = vmatprep.subr.bf16.mxu0 %v1519
        %1865 = vmatpush1.bf16.msra.mxu0 %v1518
        %1866 = vmatprep.subr.bf16.mxu0 %v1523
        %1867 = vmatpush1.bf16.msra.mxu0 %v1522
        %1868 = vmatprep.subr.bf16.mxu0 %v1527
        %1869 = vmatpush1.bf16.msra.mxu0 %v1526
        %1870 = vmatprep.subr.bf16.mxu0 %v1531
        %1871 = vmatpush1.bf16.msra.mxu0 %v1530
        %1872 = vmatprep.subr.bf16.mxu0 %v1535
        %1873 = vmatpush1.bf16.msra.mxu0 %v1534
        %1874 = vmatprep.subr.bf16.mxu0 %v1539
        %1875 = vmatpush1.bf16.msra.mxu0 %v1538
        %1876 = vmatprep.subr.bf16.mxu0 %v1543
        %1877 = vmatpush1.bf16.msra.mxu0 %v1542
        %1878 = vmatprep.subr.bf16.mxu0 %v1547
        %1879 = vmatpush1.bf16.msra.mxu0 %v1546
        %1880 = vmatprep.subr.bf16.mxu0 %v1551
        %1881 = vmatpush1.bf16.msra.mxu0 %v1550
        %1882 = vmatprep.subr.bf16.mxu0 %v1555
        %1883 = vmatpush1.bf16.msra.mxu0 %v1554
        %1884 = vmatprep.subr.bf16.mxu0 %v1559
        %1885 = vmatpush1.bf16.msra.mxu0 %v1558
        %1886 = vmatprep.subr.bf16.mxu0 %v1563
        %1887 = vmatpush1.bf16.msra.mxu0 %v1562
        %1888 = vmatprep.subr.bf16.mxu0 %v1567
        %1889 = vmatpush1.bf16.msra.mxu0 %v1566
        %1890 = vmatprep.subr.bf16.mxu0 %v1571
        %1891 = vmatpush1.bf16.msra.mxu0 %v1570
        %1892 = vmatprep.mubr.bf16.mxu0 %v573
        %1893 = vmatmul.mubr.bf16.gmra.mrb[0].mxu0 %v572
        %v1894 = vpop.f32.mrb[0].mxu0
        %v1895 = vadd.f32 %v1854, %v1894
        %v1896 = vpop.f32.mrb[0].mxu0
        %v1897 = vadd.f32 %v1856, %v1896
        %v1898 = vpop.f32.mrb[0].mxu0
        %v1899 = vpop.f32.mrb[0].mxu0
        %1900 = vdwg.mxu0
        %1901 = vmatprep.subr.bf16.mxu0 %v1575
        %1902 = vmatpush1.bf16.msra.mxu0 %v1574
        %1903 = vmatprep.subr.bf16.mxu0 0
        %1904 = vmatpush1.bf16.msra.mxu0 0
        %1905 = vmatprep.subr.bf16.mxu0 0
        %1906 = vmatpush1.bf16.msra.mxu0 0
        %1907 = vmatprep.subr.bf16.mxu0 0
        %1908 = vmatpush1.bf16.msra.mxu0 0
        %1909 = vmatprep.subr.bf16.mxu0 0
        %1910 = vmatpush1.bf16.msra.mxu0 0
        %1911 = vmatprep.subr.bf16.mxu0 0
        %1912 = vmatpush1.bf16.msra.mxu0 0
        %1913 = vmatprep.subr.bf16.mxu0 0
        %1914 = vmatpush1.bf16.msra.mxu0 0
        %1915 = vmatprep.subr.bf16.mxu0 0
        %1916 = vmatpush1.bf16.msra.mxu0 0
        %1917 = vmatprep.subr.bf16.mxu0 0
        %1918 = vmatpush1.bf16.msra.mxu0 0
        %1919 = vmatprep.subr.bf16.mxu0 0
        %1920 = vmatpush1.bf16.msra.mxu0 0
        %1921 = vmatprep.subr.bf16.mxu0 0
        %1922 = vmatpush1.bf16.msra.mxu0 0
        %1923 = vmatprep.subr.bf16.mxu0 0
        %1924 = vmatpush1.bf16.msra.mxu0 0
        %1925 = vmatprep.subr.bf16.mxu0 0
        %1926 = vmatpush1.bf16.msra.mxu0 0
        %1927 = vmatprep.subr.bf16.mxu0 0
        %1928 = vmatpush1.bf16.msra.mxu0 0
        %1929 = vmatprep.subr.bf16.mxu0 0
        %1930 = vmatpush1.bf16.msra.mxu0 0
        %1931 = vmatprep.subr.bf16.mxu0 0
        %1932 = vmatpush1.bf16.msra.mxu0 0
        %1933 = vmatprep.mubr.bf16.mxu0 0
        %1934 = vmatmul.mubr.bf16.gmra.mrb[0].mxu0 %v1776
        %v1935 = vpop.f32.mrb[0].mxu0
        %v1936 = vadd.f32 %v1895, %v1935
        %v1937 = vpop.f32.mrb[0].mxu0
        %v1938 = vadd.f32 %v1897, %v1937
        %v1939 = vpop.f32.mrb[0].mxu0
        %v1940 = vpop.f32.mrb[0].mxu0
        %1941 = vdwg.mxu0
        %1942 = vmatprep.subr.bf16.mxu0 %v1385
        %1943 = vmatpush1.bf16.msra.mxu0 %v1384
        %1944 = vmatprep.subr.bf16.mxu0 %v1389
        %1945 = vmatpush1.bf16.msra.mxu0 %v1388
        %1946 = vmatprep.subr.bf16.mxu0 %v1393
        %1947 = vmatpush1.bf16.msra.mxu0 %v1392
        %1948 = vmatprep.subr.bf16.mxu0 %v1397
        %1949 = vmatpush1.bf16.msra.mxu0 %v1396
        %1950 = vmatprep.subr.bf16.mxu0 %v1401
        %1951 = vmatpush1.bf16.msra.mxu0 %v1400
        %1952 = vmatprep.subr.bf16.mxu0 %v1405
        %1953 = vmatpush1.bf16.msra.mxu0 %v1404
        %1954 = vmatprep.subr.bf16.mxu0 %v1409
        %1955 = vmatpush1.bf16.msra.mxu0 %v1408
        %1956 = vmatprep.subr.bf16.mxu0 %v1413
        %1957 = vmatpush1.bf16.msra.mxu0 %v1412
        %1958 = vmatprep.subr.bf16.mxu0 %v1417
        %1959 = vmatpush1.bf16.msra.mxu0 %v1416
        %1960 = vmatprep.subr.bf16.mxu0 %v1421
        %1961 = vmatpush1.bf16.msra.mxu0 %v1420
        %1962 = vmatprep.subr.bf16.mxu0 %v1425
        %1963 = vmatpush1.bf16.msra.mxu0 %v1424
        %1964 = vmatprep.subr.bf16.mxu0 %v1429
        %1965 = vmatpush1.bf16.msra.mxu0 %v1428
        %1966 = vmatprep.subr.bf16.mxu0 %v1433
        %1967 = vmatpush1.bf16.msra.mxu0 %v1432
        %1968 = vmatprep.subr.bf16.mxu0 %v1437
        %1969 = vmatpush1.bf16.msra.mxu0 %v1436
        %1970 = vmatprep.subr.bf16.mxu0 %v1441
        %1971 = vmatpush1.bf16.msra.mxu0 %v1440
        %1972 = vmatprep.subr.bf16.mxu0 %v1445
        %1973 = vmatpush1.bf16.msra.mxu0 %v1444
        %1974 = vmatprep.mubr.bf16.mxu0 %v569
        %1975 = vmatmul.mubr.bf16.gmra.mrb[0].mxu0 %v568
        %v1976 = vpop.f32.mrb[0].mxu0
        %v1977 = vadd.f32 %v785, %v1976
        %v1978 = vpop.f32.mrb[0].mxu0
        %v1979 = vadd.f32 %v789, %v1978
        %v1980 = vpop.f32.mrb[0].mxu0
        %v1981 = vpop.f32.mrb[0].mxu0
        %1982 = vdwg.mxu0
        %1983 = vmatprep.subr.bf16.mxu0 %v1449
        %1984 = vmatpush1.bf16.msra.mxu0 %v1448
        %1985 = vmatprep.subr.bf16.mxu0 %v1453
        %1986 = vmatpush1.bf16.msra.mxu0 %v1452
        %1987 = vmatprep.subr.bf16.mxu0 %v1457
        %1988 = vmatpush1.bf16.msra.mxu0 %v1456
        %1989 = vmatprep.subr.bf16.mxu0 %v1461
        %1990 = vmatpush1.bf16.msra.mxu0 %v1460
        %1991 = vmatprep.subr.bf16.mxu0 %v1465
        %1992 = vmatpush1.bf16.msra.mxu0 %v1464
        %1993 = vmatprep.subr.bf16.mxu0 %v1469
        %1994 = vmatpush1.bf16.msra.mxu0 %v1468
        %1995 = vmatprep.subr.bf16.mxu0 %v1473
        %1996 = vmatpush1.bf16.msra.mxu0 %v1472
        %1997 = vmatprep.subr.bf16.mxu0 %v1477
        %1998 = vmatpush1.bf16.msra.mxu0 %v1476
        %1999 = vmatprep.subr.bf16.mxu0 %v1481
        %2000 = vmatpush1.bf16.msra.mxu0 %v1480
        %2001 = vmatprep.subr.bf16.mxu0 %v1485
        %2002 = vmatpush1.bf16.msra.mxu0 %v1484
        %2003 = vmatprep.subr.bf16.mxu0 %v1489
        %2004 = vmatpush1.bf16.msra.mxu0 %v1488
        %2005 = vmatprep.subr.bf16.mxu0 %v1493
        %2006 = vmatpush1.bf16.msra.mxu0 %v1492
        %2007 = vmatprep.subr.bf16.mxu0 %v1497
        %2008 = vmatpush1.bf16.msra.mxu0 %v1496
        %2009 = vmatprep.subr.bf16.mxu0 %v1501
        %2010 = vmatpush1.bf16.msra.mxu0 %v1500
        %2011 = vmatprep.subr.bf16.mxu0 %v1505
        %2012 = vmatpush1.bf16.msra.mxu0 %v1504
        %2013 = vmatprep.subr.bf16.mxu0 %v1509
        %2014 = vmatpush1.bf16.msra.mxu0 %v1508
        %2015 = vmatprep.mubr.bf16.mxu0 %v571
        %2016 = vmatmul.mubr.bf16.gmra.mrb[0].mxu0 %v570
        %v2017 = vpop.f32.mrb[0].mxu0
        %v2018 = vadd.f32 %v1977, %v2017
        %v2019 = vpop.f32.mrb[0].mxu0
        %v2020 = vadd.f32 %v1979, %v2019
        %v2021 = vpop.f32.mrb[0].mxu0
        %v2022 = vpop.f32.mrb[0].mxu0
        %2023 = vdwg.mxu0
        %2024 = vmatprep.subr.bf16.mxu0 %v1513
        %2025 = vmatpush1.bf16.msra.mxu0 %v1512
        %2026 = vmatprep.subr.bf16.mxu0 %v1517
        %2027 = vmatpush1.bf16.msra.mxu0 %v1516
        %2028 = vmatprep.subr.bf16.mxu0 %v1521
        %2029 = vmatpush1.bf16.msra.mxu0 %v1520
        %2030 = vmatprep.subr.bf16.mxu0 %v1525
        %2031 = vmatpush1.bf16.msra.mxu0 %v1524
        %2032 = vmatprep.subr.bf16.mxu0 %v1529
        %2033 = vmatpush1.bf16.msra.mxu0 %v1528
        %2034 = vmatprep.subr.bf16.mxu0 %v1533
        %2035 = vmatpush1.bf16.msra.mxu0 %v1532
        %2036 = vmatprep.subr.bf16.mxu0 %v1537
        %2037 = vmatpush1.bf16.msra.mxu0 %v1536
        %2038 = vmatprep.subr.bf16.mxu0 %v1541
        %2039 = vmatpush1.bf16.msra.mxu0 %v1540
        %2040 = vmatprep.subr.bf16.mxu0 %v1545
        %2041 = vmatpush1.bf16.msra.mxu0 %v1544
        %2042 = vmatprep.subr.bf16.mxu0 %v1549
        %2043 = vmatpush1.bf16.msra.mxu0 %v1548
        %2044 = vmatprep.subr.bf16.mxu0 %v1553
        %2045 = vmatpush1.bf16.msra.mxu0 %v1552
        %2046 = vmatprep.subr.bf16.mxu0 %v1557
        %2047 = vmatpush1.bf16.msra.mxu0 %v1556
        %2048 = vmatprep.subr.bf16.mxu0 %v1561
        %2049 = vmatpush1.bf16.msra.mxu0 %v1560
        %2050 = vmatprep.subr.bf16.mxu0 %v1565
        %2051 = vmatpush1.bf16.msra.mxu0 %v1564
        %2052 = vmatprep.subr.bf16.mxu0 %v1569
        %2053 = vmatpush1.bf16.msra.mxu0 %v1568
        %2054 = vmatprep.subr.bf16.mxu0 %v1573
        %2055 = vmatpush1.bf16.msra.mxu0 %v1572
        %2056 = vmatprep.mubr.bf16.mxu0 %v573
        %2057 = vmatmul.mubr.bf16.gmra.mrb[0].mxu0 %v572
        %v2058 = vpop.f32.mrb[0].mxu0
        %v2059 = vadd.f32 %v2018, %v2058
        %v2060 = vpop.f32.mrb[0].mxu0
        %v2061 = vadd.f32 %v2020, %v2060
        %v2062 = vpop.f32.mrb[0].mxu0
        %v2063 = vpop.f32.mrb[0].mxu0
        %2064 = vdwg.mxu0
        %2065 = vmatprep.subr.bf16.mxu0 %v1577
        %2066 = vmatpush1.bf16.msra.mxu0 %v1576
        %2067 = vmatprep.subr.bf16.mxu0 0
        %2068 = vmatpush1.bf16.msra.mxu0 0
        %2069 = vmatprep.subr.bf16.mxu0 0
        %2070 = vmatpush1.bf16.msra.mxu0 0
        %2071 = vmatprep.subr.bf16.mxu0 0
        %2072 = vmatpush1.bf16.msra.mxu0 0
        %2073 = vmatprep.subr.bf16.mxu0 0
        %2074 = vmatpush1.bf16.msra.mxu0 0
        %2075 = vmatprep.subr.bf16.mxu0 0
        %2076 = vmatpush1.bf16.msra.mxu0 0
        %2077 = vmatprep.subr.bf16.mxu0 0
        %2078 = vmatpush1.bf16.msra.mxu0 0
        %2079 = vmatprep.subr.bf16.mxu0 0
        %2080 = vmatpush1.bf16.msra.mxu0 0
        %2081 = vmatprep.subr.bf16.mxu0 0
        %2082 = vmatpush1.bf16.msra.mxu0 0
        %2083 = vmatprep.subr.bf16.mxu0 0
        %2084 = vmatpush1.bf16.msra.mxu0 0
        %2085 = vmatprep.subr.bf16.mxu0 0
        %2086 = vmatpush1.bf16.msra.mxu0 0
        %2087 = vmatprep.subr.bf16.mxu0 0
        %2088 = vmatpush1.bf16.msra.mxu0 0
        %2089 = vmatprep.subr.bf16.mxu0 0
        %2090 = vmatpush1.bf16.msra.mxu0 0
        %2091 = vmatprep.subr.bf16.mxu0 0
        %2092 = vmatpush1.bf16.msra.mxu0 0
        %2093 = vmatprep.subr.bf16.mxu0 0
        %2094 = vmatpush1.bf16.msra.mxu0 0
        %2095 = vmatprep.subr.bf16.mxu0 0
        %2096 = vmatpush1.bf16.msra.mxu0 0
        %2097 = vmatprep.mubr.bf16.mxu0 0
        %2098 = vmatmul.mubr.bf16.gmra.mrb[0].mxu0 %v1776
        %v2099 = vpop.f32.mrb[0].mxu0
        %v2100 = vadd.f32 %v2059, %v2099
        %v2101 = vpop.f32.mrb[0].mxu0
        %v2102 = vadd.f32 %v2061, %v2101
        %v2103 = vpop.f32.mrb[0].mxu0
        %v2104 = vpop.f32.mrb[0].mxu0
        %2105 = vdwg.mxu0
        %v2106 = vmax.f32 %v1936, 0.0
        %v2107 = vmax.f32 %v1938, 0.0
        %v2108 = vmax.f32 %v2100, 0.0
        %v2109 = vmax.f32 %v2102, 0.0
        %v2110 = vpack.c.bf16 %v2106, %v2106
        %v2111 = vpack.c.bf16 %v2107, %v2107
        %v2112 = vpack.c.bf16 %v2108, %v2108
        %v2113 = vpack.c.bf16 %v2109, %v2109
        %v2114 = vld [vmem:[%s4] sm:$0xf]
        %v2115 = vld [vmem:[%s4 + $0x4] sm:$0xf]
        %v2116 = vld [vmem:[%s4 + $0x8] sm:$0xf]
        %v2117 = vld [vmem:[%s4 + $0xc] sm:$0xf]
        %v2118 = vld [vmem:[%s4 + $0x10] sm:$0xf]
        %v2119 = vld [vmem:[%s4 + $0x14] sm:$0xf]
        %v2120 = vld [vmem:[%s4 + $0x18] sm:$0xf]
        %v2121 = vld [vmem:[%s4 + $0x1c] sm:$0xf]
        %v2122 = vld [vmem:[%s4 + $0x20] sm:$0xf]
        %v2123 = vld [vmem:[%s4 + $0x24] sm:$0xf]
        %v2124 = vld [vmem:[%s4 + $0x28] sm:$0xf]
        %v2125 = vld [vmem:[%s4 + $0x2c] sm:$0xf]
        %v2126 = vld [vmem:[%s4 + $0x30] sm:$0xf]
        %v2127 = vld [vmem:[%s4 + $0x34] sm:$0xf]
        %v2128 = vld [vmem:[%s4 + $0x38] sm:$0xf]
        %v2129 = vld [vmem:[%s4 + $0x3c] sm:$0xf]
        %v2130 = vld [vmem:[%s4 + $0x40] sm:$0xf]
        %v2131 = vld [vmem:[%s4 + $0x44] sm:$0xf]
        %v2132 = vld [vmem:[%s4 + $0x48] sm:$0xf]
        %v2133 = vld [vmem:[%s4 + $0x4c] sm:$0xf]
        %v2134 = vld [vmem:[%s4 + $0x50] sm:$0xf]
        %v2135 = vld [vmem:[%s4 + $0x54] sm:$0xf]
        %v2136 = vld [vmem:[%s4 + $0x58] sm:$0xf]
        %v2137 = vld [vmem:[%s4 + $0x5c] sm:$0xf]
        %v2138 = vld [vmem:[%s4 + $0x60] sm:$0xf]
        %v2139 = vld [vmem:[%s4 + $0x64] sm:$0xf]
        %v2140 = vld [vmem:[%s4 + $0x68] sm:$0xf]
        %v2141 = vld [vmem:[%s4 + $0x6c] sm:$0xf]
        %v2142 = vld [vmem:[%s4 + $0x70] sm:$0xf]
        %v2143 = vld [vmem:[%s4 + $0x74] sm:$0xf]
        %v2144 = vld [vmem:[%s4 + $0x78] sm:$0xf]
        %v2145 = vld [vmem:[%s4 + $0x7c] sm:$0xf]
        %v2146 = vld [vmem:[%s4 + $0x80] sm:$0xf]
        %v2147 = vld [vmem:[%s4 + $0x84] sm:$0xf]
        %v2148 = vld [vmem:[%s4 + $0x88] sm:$0xf]
        %v2149 = vld [vmem:[%s4 + $0x8c] sm:$0xf]
        %v2150 = vld [vmem:[%s4 + $0x90] sm:$0xf]
        %v2151 = vld [vmem:[%s4 + $0x94] sm:$0xf]
        %v2152 = vld [vmem:[%s4 + $0x98] sm:$0xf]
        %v2153 = vld [vmem:[%s4 + $0x9c] sm:$0xf]
        %v2154 = vld [vmem:[%s4 + $0xa0] sm:$0xf]
        %v2155 = vld [vmem:[%s4 + $0xa4] sm:$0xf]
        %v2156 = vld [vmem:[%s4 + $0xa8] sm:$0xf]
        %v2157 = vld [vmem:[%s4 + $0xac] sm:$0xf]
        %v2158 = vld [vmem:[%s4 + $0xb0] sm:$0xf]
        %v2159 = vld [vmem:[%s4 + $0xb4] sm:$0xf]
        %v2160 = vld [vmem:[%s4 + $0xb8] sm:$0xf]
        %v2161 = vld [vmem:[%s4 + $0xbc] sm:$0xf]
        %v2162 = vld [vmem:[%s4 + $0xc0] sm:$0xf]
        %v2163 = vld [vmem:[%s4 + $0xc4] sm:$0xf]
        %v2164 = vld [vmem:[%s4 + $0xc8] sm:$0xf]
        %v2165 = vld [vmem:[%s4 + $0xcc] sm:$0xf]
        %v2166 = vld [vmem:[%s4 + $0xd0] sm:$0xf]
        %v2167 = vld [vmem:[%s4 + $0xd4] sm:$0xf]
        %v2168 = vld [vmem:[%s4 + $0xd8] sm:$0xf]
        %v2169 = vld [vmem:[%s4 + $0xdc] sm:$0xf]
        %v2170 = vld [vmem:[%s4 + $0xe0] sm:$0xf]
        %v2171 = vld [vmem:[%s4 + $0xe4] sm:$0xf]
        %v2172 = vld [vmem:[%s4 + $0xe8] sm:$0xf]
        %v2173 = vld [vmem:[%s4 + $0xec] sm:$0xf]
        %v2174 = vld [vmem:[%s4 + $0xf0] sm:$0xf]
        %v2175 = vld [vmem:[%s4 + $0xf4] sm:$0xf]
        %v2176 = vld [vmem:[%s4 + $0xf8] sm:$0xf]
        %v2177 = vld [vmem:[%s4 + $0xfc] sm:$0xf]
        %v2178 = vld [vmem:[%s5] sm:$0x1]
        %v2180 = vlaneseq
        %v2181 = vshrl.u32 %v2180, 7
        %v2182 = vsub.s32 0, %v2181
        %v2183 = vrot.slane %v2178, %v2182
        %v2249 = vunpack.c.l.b16 %v2114
        %v2250 = vunpack.c.l.b16 %v2115
        %v2251 = vunpack.c.l.b16 %v2116
        %v2252 = vunpack.c.l.b16 %v2117
        %v2253 = vunpack.c.l.b16 %v2118
        %v2254 = vunpack.c.l.b16 %v2119
        %v2255 = vunpack.c.l.b16 %v2120
        %v2256 = vunpack.c.l.b16 %v2121
        %v2257 = vunpack.c.l.b16 %v2122
        %v2258 = vunpack.c.l.b16 %v2123
        %v2259 = vunpack.c.l.b16 %v2124
        %v2260 = vunpack.c.l.b16 %v2125
        %v2261 = vunpack.c.l.b16 %v2126
        %v2262 = vunpack.c.l.b16 %v2127
        %v2263 = vunpack.c.l.b16 %v2128
        %v2264 = vunpack.c.l.b16 %v2129
        %v2265 = vunpack.c.l.b16 %v2130
        %v2266 = vunpack.c.l.b16 %v2131
        %v2267 = vunpack.c.l.b16 %v2132
        %v2268 = vunpack.c.l.b16 %v2133
        %v2269 = vunpack.c.l.b16 %v2134
        %v2270 = vunpack.c.l.b16 %v2135
        %v2271 = vunpack.c.l.b16 %v2136
        %v2272 = vunpack.c.l.b16 %v2137
        %v2273 = vunpack.c.l.b16 %v2138
        %v2274 = vunpack.c.l.b16 %v2139
        %v2275 = vunpack.c.l.b16 %v2140
        %v2276 = vunpack.c.l.b16 %v2141
        %v2277 = vunpack.c.l.b16 %v2142
        %v2278 = vunpack.c.l.b16 %v2143
        %v2279 = vunpack.c.l.b16 %v2144
        %v2280 = vunpack.c.l.b16 %v2145
        %v2281 = vunpack.c.l.b16 %v2146
        %v2282 = vunpack.c.l.b16 %v2147
        %v2283 = vunpack.c.l.b16 %v2148
        %v2284 = vunpack.c.l.b16 %v2149
        %v2285 = vunpack.c.l.b16 %v2150
        %v2286 = vunpack.c.l.b16 %v2151
        %v2287 = vunpack.c.l.b16 %v2152
        %v2288 = vunpack.c.l.b16 %v2153
        %v2289 = vunpack.c.l.b16 %v2154
        %v2290 = vunpack.c.l.b16 %v2155
        %v2291 = vunpack.c.l.b16 %v2156
        %v2292 = vunpack.c.l.b16 %v2157
        %v2293 = vunpack.c.l.b16 %v2158
        %v2294 = vunpack.c.l.b16 %v2159
        %v2295 = vunpack.c.l.b16 %v2160
        %v2296 = vunpack.c.l.b16 %v2161
        %v2297 = vunpack.c.l.b16 %v2162
        %v2298 = vunpack.c.l.b16 %v2163
        %v2299 = vunpack.c.l.b16 %v2164
        %v2300 = vunpack.c.l.b16 %v2165
        %v2301 = vunpack.c.l.b16 %v2166
        %v2302 = vunpack.c.l.b16 %v2167
        %v2303 = vunpack.c.l.b16 %v2168
        %v2304 = vunpack.c.l.b16 %v2169
        %v2305 = vunpack.c.l.b16 %v2170
        %v2306 = vunpack.c.l.b16 %v2171
        %v2307 = vunpack.c.l.b16 %v2172
        %v2308 = vunpack.c.l.b16 %v2173
        %v2309 = vunpack.c.l.b16 %v2174
        %v2310 = vunpack.c.l.b16 %v2175
        %v2311 = vunpack.c.l.b16 %v2176
        %v2312 = vunpack.c.l.b16 %v2177
        %v2313 = vpack.c.b16 %v2250, %v2249
        %v2314 = vpack.c.b16 %v2252, %v2251
        %v2315 = vpack.c.b16 %v2254, %v2253
        %v2316 = vpack.c.b16 %v2256, %v2255
        %v2317 = vpack.c.b16 %v2258, %v2257
        %v2318 = vpack.c.b16 %v2260, %v2259
        %v2319 = vpack.c.b16 %v2262, %v2261
        %v2320 = vpack.c.b16 %v2264, %v2263
        %v2321 = vpack.c.b16 %v2266, %v2265
        %v2322 = vpack.c.b16 %v2268, %v2267
        %v2323 = vpack.c.b16 %v2270, %v2269
        %v2324 = vpack.c.b16 %v2272, %v2271
        %v2325 = vpack.c.b16 %v2274, %v2273
        %v2326 = vpack.c.b16 %v2276, %v2275
        %v2327 = vpack.c.b16 %v2278, %v2277
        %v2328 = vpack.c.b16 %v2280, %v2279
        %v2329 = vpack.c.b16 %v2282, %v2281
        %v2330 = vpack.c.b16 %v2284, %v2283
        %v2331 = vpack.c.b16 %v2286, %v2285
        %v2332 = vpack.c.b16 %v2288, %v2287
        %v2333 = vpack.c.b16 %v2290, %v2289
        %v2334 = vpack.c.b16 %v2292, %v2291
        %v2335 = vpack.c.b16 %v2294, %v2293
        %v2336 = vpack.c.b16 %v2296, %v2295
        %v2337 = vpack.c.b16 %v2298, %v2297
        %v2338 = vpack.c.b16 %v2300, %v2299
        %v2339 = vpack.c.b16 %v2302, %v2301
        %v2340 = vpack.c.b16 %v2304, %v2303
        %v2341 = vpack.c.b16 %v2306, %v2305
        %v2342 = vpack.c.b16 %v2308, %v2307
        %v2343 = vpack.c.b16 %v2310, %v2309
        %v2344 = vpack.c.b16 %v2312, %v2311
        %2377 = vmatprep.subr.bf16.mxu0 0
        %2378 = vmatpush1.bf16.msra.mxu0 %v2313
        %2379 = vmatprep.subr.bf16.mxu0 0
        %2380 = vmatpush1.bf16.msra.mxu0 %v2314
        %2381 = vmatprep.subr.bf16.mxu0 0
        %2382 = vmatpush1.bf16.msra.mxu0 %v2315
        %2383 = vmatprep.subr.bf16.mxu0 0
        %2384 = vmatpush1.bf16.msra.mxu0 %v2316
        %2385 = vmatprep.subr.bf16.mxu0 0
        %2386 = vmatpush1.bf16.msra.mxu0 %v2317
        %2387 = vmatprep.subr.bf16.mxu0 0
        %2388 = vmatpush1.bf16.msra.mxu0 %v2318
        %2389 = vmatprep.subr.bf16.mxu0 0
        %2390 = vmatpush1.bf16.msra.mxu0 %v2319
        %2391 = vmatprep.subr.bf16.mxu0 0
        %2392 = vmatpush1.bf16.msra.mxu0 %v2320
        %2393 = vmatprep.subr.bf16.mxu0 0
        %2394 = vmatpush1.bf16.msra.mxu0 %v2321
        %2395 = vmatprep.subr.bf16.mxu0 0
        %2396 = vmatpush1.bf16.msra.mxu0 %v2322
        %2397 = vmatprep.subr.bf16.mxu0 0
        %2398 = vmatpush1.bf16.msra.mxu0 %v2323
        %2399 = vmatprep.subr.bf16.mxu0 0
        %2400 = vmatpush1.bf16.msra.mxu0 %v2324
        %2401 = vmatprep.subr.bf16.mxu0 0
        %2402 = vmatpush1.bf16.msra.mxu0 %v2325
        %2403 = vmatprep.subr.bf16.mxu0 0
        %2404 = vmatpush1.bf16.msra.mxu0 %v2326
        %2405 = vmatprep.subr.bf16.mxu0 0
        %2406 = vmatpush1.bf16.msra.mxu0 %v2327
        %2407 = vmatprep.subr.bf16.mxu0 0
        %2408 = vmatpush1.bf16.msra.mxu0 %v2328
        %2409 = vmatprep.mubr.bf16.mxu0 %v2111
        %2410 = vmatmul.mubr.bf16.gmra.mrb[0].mxu0 %v2110
        %v2411 = vpop.f32.mrb[0].mxu0
        %v2412 = vadd.f32 %v2183, %v2411
        %v2413 = vpop.f32.mrb[0].mxu0
        %v2414 = vpop.f32.mrb[0].mxu0
        %v2415 = vpop.f32.mrb[0].mxu0
        %2416 = vdwg.mxu0
        %2417 = vmatprep.subr.bf16.mxu0 0
        %2418 = vmatpush1.bf16.msra.mxu0 %v2329
        %2419 = vmatprep.subr.bf16.mxu0 0
        %2420 = vmatpush1.bf16.msra.mxu0 %v2330
        %2421 = vmatprep.subr.bf16.mxu0 0
        %2422 = vmatpush1.bf16.msra.mxu0 %v2331
        %2423 = vmatprep.subr.bf16.mxu0 0
        %2424 = vmatpush1.bf16.msra.mxu0 %v2332
        %2425 = vmatprep.subr.bf16.mxu0 0
        %2426 = vmatpush1.bf16.msra.mxu0 %v2333
        %2427 = vmatprep.subr.bf16.mxu0 0
        %2428 = vmatpush1.bf16.msra.mxu0 %v2334
        %2429 = vmatprep.subr.bf16.mxu0 0
        %2430 = vmatpush1.bf16.msra.mxu0 %v2335
        %2431 = vmatprep.subr.bf16.mxu0 0
        %2432 = vmatpush1.bf16.msra.mxu0 %v2336
        %2433 = vmatprep.subr.bf16.mxu0 0
        %2434 = vmatpush1.bf16.msra.mxu0 %v2337
        %2435 = vmatprep.subr.bf16.mxu0 0
        %2436 = vmatpush1.bf16.msra.mxu0 %v2338
        %2437 = vmatprep.subr.bf16.mxu0 0
        %2438 = vmatpush1.bf16.msra.mxu0 %v2339
        %2439 = vmatprep.subr.bf16.mxu0 0
        %2440 = vmatpush1.bf16.msra.mxu0 %v2340
        %2441 = vmatprep.subr.bf16.mxu0 0
        %2442 = vmatpush1.bf16.msra.mxu0 %v2341
        %2443 = vmatprep.subr.bf16.mxu0 0
        %2444 = vmatpush1.bf16.msra.mxu0 %v2342
        %2445 = vmatprep.subr.bf16.mxu0 0
        %2446 = vmatpush1.bf16.msra.mxu0 %v2343
        %2447 = vmatprep.subr.bf16.mxu0 0
        %2448 = vmatpush1.bf16.msra.mxu0 %v2344
        %2449 = vmatprep.mubr.bf16.mxu0 %v2113
        %2450 = vmatmul.mubr.bf16.gmra.mrb[0].mxu0 %v2112
        %v2451 = vpop.f32.mrb[0].mxu0
        %v2452 = vadd.f32 %v2412, %v2451
        %v2453 = vpop.f32.mrb[0].mxu0
        %v2454 = vpop.f32.mrb[0].mxu0
        %v2455 = vpop.f32.mrb[0].mxu0
        %2456 = vdwg.mxu0
        %v2457 = vld [vmem:[#allocation5] sm:$0xf]
        %v2458 = vld [vmem:[#allocation5 + $0x4] sm:$0xf]
        %v2459 = vld [vmem:[#allocation5 + $0x8] sm:$0xf]
        %v2460 = vld [vmem:[#allocation5 + $0xc] sm:$0xf]
        %v2461 = vld [vmem:[#allocation5 + $0x10] sm:$0xf]
        %v2462 = vld [vmem:[#allocation5 + $0x14] sm:$0xf]
        %v2463 = vld [vmem:[#allocation5 + $0x18] sm:$0xf]
        %v2464 = vld [vmem:[#allocation5 + $0x1c] sm:$0xf]
        %v2465 = vld [vmem:[#allocation5 + $0x20] sm:$0xf]
        %v2466 = vld [vmem:[#allocation5 + $0x24] sm:$0xf]
        %v2467 = vld [vmem:[#allocation5 + $0x28] sm:$0xf]
        %v2468 = vld [vmem:[#allocation5 + $0x2c] sm:$0xf]
        %v2469 = vld [vmem:[#allocation5 + $0x30] sm:$0xf]
        %v2470 = vld [vmem:[#allocation5 + $0x34] sm:$0xf]
        %v2471 = vld [vmem:[#allocation5 + $0x38] sm:$0xf]
        %v2472 = vld [vmem:[#allocation5 + $0x3c] sm:$0xf]
        %v2473 = vld [vmem:[#allocation5 + $0x40] sm:$0xf]
        %v2474 = vld [vmem:[#allocation5 + $0x44] sm:$0xf]
        %v2475 = vld [vmem:[#allocation5 + $0x48] sm:$0xf]
        %v2476 = vld [vmem:[#allocation5 + $0x4c] sm:$0xf]
        %v2477 = vld [vmem:[#allocation5 + $0x50] sm:$0xf]
        %v2478 = vld [vmem:[#allocation5 + $0x54] sm:$0xf]
        %v2479 = vld [vmem:[#allocation5 + $0x58] sm:$0xf]
        %v2480 = vld [vmem:[#allocation5 + $0x5c] sm:$0xf]
        %v2481 = vld [vmem:[#allocation5 + $0x60] sm:$0xf]
        %v2482 = vld [vmem:[#allocation5 + $0x64] sm:$0xf]
        %v2483 = vld [vmem:[#allocation5 + $0x68] sm:$0xf]
        %v2484 = vld [vmem:[#allocation5 + $0x6c] sm:$0xf]
        %v2485 = vld [vmem:[#allocation5 + $0x70] sm:$0xf]
        %v2486 = vld [vmem:[#allocation5 + $0x74] sm:$0xf]
        %v2487 = vld [vmem:[#allocation5 + $0x78] sm:$0xf]
        %v2488 = vld [vmem:[#allocation5 + $0x7c] sm:$0xf]
        %v2489 = vld [vmem:[#allocation5 + $0x80] sm:$0xf]
        %v2490 = vld [vmem:[#allocation5 + $0x84] sm:$0xf]
        %v2491 = vld [vmem:[#allocation5 + $0x88] sm:$0xf]
        %v2492 = vld [vmem:[#allocation5 + $0x8c] sm:$0xf]
        %v2493 = vld [vmem:[#allocation5 + $0x90] sm:$0xf]
        %v2494 = vld [vmem:[#allocation5 + $0x94] sm:$0xf]
        %v2495 = vld [vmem:[#allocation5 + $0x98] sm:$0xf]
        %v2496 = vld [vmem:[#allocation5 + $0x9c] sm:$0xf]
        %v2497 = vld [vmem:[#allocation5 + $0xa0] sm:$0xf]
        %v2498 = vld [vmem:[#allocation5 + $0xa4] sm:$0xf]
        %v2499 = vld [vmem:[#allocation5 + $0xa8] sm:$0xf]
        %v2500 = vld [vmem:[#allocation5 + $0xac] sm:$0xf]
        %v2501 = vld [vmem:[#allocation5 + $0xb0] sm:$0xf]
        %v2502 = vld [vmem:[#allocation5 + $0xb4] sm:$0xf]
        %v2503 = vld [vmem:[#allocation5 + $0xb8] sm:$0xf]
        %v2504 = vld [vmem:[#allocation5 + $0xbc] sm:$0xf]
        %v2505 = vld [vmem:[#allocation5 + $0xc0] sm:$0xf]
        %v2506 = vld [vmem:[#allocation5 + $0xc4] sm:$0xf]
        %v2507 = vld [vmem:[#allocation5 + $0xc8] sm:$0xf]
        %v2508 = vld [vmem:[#allocation5 + $0xcc] sm:$0xf]
        %v2509 = vld [vmem:[#allocation5 + $0xd0] sm:$0xf]
        %v2510 = vld [vmem:[#allocation5 + $0xd4] sm:$0xf]
        %v2511 = vld [vmem:[#allocation5 + $0xd8] sm:$0xf]
        %v2512 = vld [vmem:[#allocation5 + $0xdc] sm:$0xf]
        %v2513 = vld [vmem:[#allocation5 + $0xe0] sm:$0xf]
        %v2514 = vld [vmem:[#allocation5 + $0xe4] sm:$0xf]
        %v2515 = vld [vmem:[#allocation5 + $0xe8] sm:$0xf]
        %v2516 = vld [vmem:[#allocation5 + $0xec] sm:$0xf]
        %v2517 = vld [vmem:[#allocation5 + $0xf0] sm:$0xf]
        %v2518 = vld [vmem:[#allocation5 + $0xf4] sm:$0xf]
        %v2519 = vld [vmem:[#allocation5 + $0xf8] sm:$0xf]
        %v2520 = vld [vmem:[#allocation5 + $0xfc] sm:$0xf]
        %v2521 = vld [vmem:[%s7] sm:$0x1]
        %v2523 = vlaneseq
        %v2524 = vshrl.u32 %v2523, 7
        %v2525 = vsub.s32 0, %v2524
        %v2526 = vrot.slane %v2521, %v2525
        %v2592 = vunpack.c.l.b16 %v2457
        %v2593 = vunpack.c.l.b16 %v2458
        %v2594 = vunpack.c.l.b16 %v2459
        %v2595 = vunpack.c.l.b16 %v2460
        %v2596 = vunpack.c.l.b16 %v2461
        %v2597 = vunpack.c.l.b16 %v2462
        %v2598 = vunpack.c.l.b16 %v2463
        %v2599 = vunpack.c.l.b16 %v2464
        %v2600 = vunpack.c.l.b16 %v2465
        %v2601 = vunpack.c.l.b16 %v2466
        %v2602 = vunpack.c.l.b16 %v2467
        %v2603 = vunpack.c.l.b16 %v2468
        %v2604 = vunpack.c.l.b16 %v2469
        %v2605 = vunpack.c.l.b16 %v2470
        %v2606 = vunpack.c.l.b16 %v2471
        %v2607 = vunpack.c.l.b16 %v2472
        %v2608 = vunpack.c.l.b16 %v2473
        %v2609 = vunpack.c.l.b16 %v2474
        %v2610 = vunpack.c.l.b16 %v2475
        %v2611 = vunpack.c.l.b16 %v2476
        %v2612 = vunpack.c.l.b16 %v2477
        %v2613 = vunpack.c.l.b16 %v2478
        %v2614 = vunpack.c.l.b16 %v2479
        %v2615 = vunpack.c.l.b16 %v2480
        %v2616 = vunpack.c.l.b16 %v2481
        %v2617 = vunpack.c.l.b16 %v2482
        %v2618 = vunpack.c.l.b16 %v2483
        %v2619 = vunpack.c.l.b16 %v2484
        %v2620 = vunpack.c.l.b16 %v2485
        %v2621 = vunpack.c.l.b16 %v2486
        %v2622 = vunpack.c.l.b16 %v2487
        %v2623 = vunpack.c.l.b16 %v2488
        %v2624 = vunpack.c.l.b16 %v2489
        %v2625 = vunpack.c.l.b16 %v2490
        %v2626 = vunpack.c.l.b16 %v2491
        %v2627 = vunpack.c.l.b16 %v2492
        %v2628 = vunpack.c.l.b16 %v2493
        %v2629 = vunpack.c.l.b16 %v2494
        %v2630 = vunpack.c.l.b16 %v2495
        %v2631 = vunpack.c.l.b16 %v2496
        %v2632 = vunpack.c.l.b16 %v2497
        %v2633 = vunpack.c.l.b16 %v2498
        %v2634 = vunpack.c.l.b16 %v2499
        %v2635 = vunpack.c.l.b16 %v2500
        %v2636 = vunpack.c.l.b16 %v2501
        %v2637 = vunpack.c.l.b16 %v2502
        %v2638 = vunpack.c.l.b16 %v2503
        %v2639 = vunpack.c.l.b16 %v2504
        %v2640 = vunpack.c.l.b16 %v2505
        %v2641 = vunpack.c.l.b16 %v2506
        %v2642 = vunpack.c.l.b16 %v2507
        %v2643 = vunpack.c.l.b16 %v2508
        %v2644 = vunpack.c.l.b16 %v2509
        %v2645 = vunpack.c.l.b16 %v2510
        %v2646 = vunpack.c.l.b16 %v2511
        %v2647 = vunpack.c.l.b16 %v2512
        %v2648 = vunpack.c.l.b16 %v2513
        %v2649 = vunpack.c.l.b16 %v2514
        %v2650 = vunpack.c.l.b16 %v2515
        %v2651 = vunpack.c.l.b16 %v2516
        %v2652 = vunpack.c.l.b16 %v2517
        %v2653 = vunpack.c.l.b16 %v2518
        %v2654 = vunpack.c.l.b16 %v2519
        %v2655 = vunpack.c.l.b16 %v2520
        %v2656 = vpack.c.b16 %v2593, %v2592
        %v2657 = vpack.c.b16 %v2595, %v2594
        %v2658 = vpack.c.b16 %v2597, %v2596
        %v2659 = vpack.c.b16 %v2599, %v2598
        %v2660 = vpack.c.b16 %v2601, %v2600
        %v2661 = vpack.c.b16 %v2603, %v2602
        %v2662 = vpack.c.b16 %v2605, %v2604
        %v2663 = vpack.c.b16 %v2607, %v2606
        %v2664 = vpack.c.b16 %v2609, %v2608
        %v2665 = vpack.c.b16 %v2611, %v2610
        %v2666 = vpack.c.b16 %v2613, %v2612
        %v2667 = vpack.c.b16 %v2615, %v2614
        %v2668 = vpack.c.b16 %v2617, %v2616
        %v2669 = vpack.c.b16 %v2619, %v2618
        %v2670 = vpack.c.b16 %v2621, %v2620
        %v2671 = vpack.c.b16 %v2623, %v2622
        %v2672 = vpack.c.b16 %v2625, %v2624
        %v2673 = vpack.c.b16 %v2627, %v2626
        %v2674 = vpack.c.b16 %v2629, %v2628
        %v2675 = vpack.c.b16 %v2631, %v2630
        %v2676 = vpack.c.b16 %v2633, %v2632
        %v2677 = vpack.c.b16 %v2635, %v2634
        %v2678 = vpack.c.b16 %v2637, %v2636
        %v2679 = vpack.c.b16 %v2639, %v2638
        %v2680 = vpack.c.b16 %v2641, %v2640
        %v2681 = vpack.c.b16 %v2643, %v2642
        %v2682 = vpack.c.b16 %v2645, %v2644
        %v2683 = vpack.c.b16 %v2647, %v2646
        %v2684 = vpack.c.b16 %v2649, %v2648
        %v2685 = vpack.c.b16 %v2651, %v2650
        %v2686 = vpack.c.b16 %v2653, %v2652
        %v2687 = vpack.c.b16 %v2655, %v2654
        %2720 = vmatprep.subr.bf16.mxu0 0
        %2721 = vmatpush1.bf16.msra.mxu0 %v2656
        %2722 = vmatprep.subr.bf16.mxu0 0
        %2723 = vmatpush1.bf16.msra.mxu0 %v2657
        %2724 = vmatprep.subr.bf16.mxu0 0
        %2725 = vmatpush1.bf16.msra.mxu0 %v2658
        %2726 = vmatprep.subr.bf16.mxu0 0
        %2727 = vmatpush1.bf16.msra.mxu0 %v2659
        %2728 = vmatprep.subr.bf16.mxu0 0
        %2729 = vmatpush1.bf16.msra.mxu0 %v2660
        %2730 = vmatprep.subr.bf16.mxu0 0
        %2731 = vmatpush1.bf16.msra.mxu0 %v2661
        %2732 = vmatprep.subr.bf16.mxu0 0
        %2733 = vmatpush1.bf16.msra.mxu0 %v2662
        %2734 = vmatprep.subr.bf16.mxu0 0
        %2735 = vmatpush1.bf16.msra.mxu0 %v2663
        %2736 = vmatprep.subr.bf16.mxu0 0
        %2737 = vmatpush1.bf16.msra.mxu0 %v2664
        %2738 = vmatprep.subr.bf16.mxu0 0
        %2739 = vmatpush1.bf16.msra.mxu0 %v2665
        %2740 = vmatprep.subr.bf16.mxu0 0
        %2741 = vmatpush1.bf16.msra.mxu0 %v2666
        %2742 = vmatprep.subr.bf16.mxu0 0
        %2743 = vmatpush1.bf16.msra.mxu0 %v2667
        %2744 = vmatprep.subr.bf16.mxu0 0
        %2745 = vmatpush1.bf16.msra.mxu0 %v2668
        %2746 = vmatprep.subr.bf16.mxu0 0
        %2747 = vmatpush1.bf16.msra.mxu0 %v2669
        %2748 = vmatprep.subr.bf16.mxu0 0
        %2749 = vmatpush1.bf16.msra.mxu0 %v2670
        %2750 = vmatprep.subr.bf16.mxu0 0
        %2751 = vmatpush1.bf16.msra.mxu0 %v2671
        %2752 = vmatprep.mubr.bf16.mxu0 %v2111
        %2753 = vmatmul.mubr.bf16.gmra.mrb[0].mxu0 %v2110
        %v2754 = vpop.f32.mrb[0].mxu0
        %v2755 = vadd.f32 %v2526, %v2754
        %v2756 = vpop.f32.mrb[0].mxu0
        %v2757 = vpop.f32.mrb[0].mxu0
        %v2758 = vpop.f32.mrb[0].mxu0
        %2759 = vdwg.mxu0
        %2760 = vmatprep.subr.bf16.mxu0 0
        %2761 = vmatpush1.bf16.msra.mxu0 %v2672
        %2762 = vmatprep.subr.bf16.mxu0 0
        %2763 = vmatpush1.bf16.msra.mxu0 %v2673
        %2764 = vmatprep.subr.bf16.mxu0 0
        %2765 = vmatpush1.bf16.msra.mxu0 %v2674
        %2766 = vmatprep.subr.bf16.mxu0 0
        %2767 = vmatpush1.bf16.msra.mxu0 %v2675
        %2768 = vmatprep.subr.bf16.mxu0 0
        %2769 = vmatpush1.bf16.msra.mxu0 %v2676
        %2770 = vmatprep.subr.bf16.mxu0 0
        %2771 = vmatpush1.bf16.msra.mxu0 %v2677
        %2772 = vmatprep.subr.bf16.mxu0 0
        %2773 = vmatpush1.bf16.msra.mxu0 %v2678
        %2774 = vmatprep.subr.bf16.mxu0 0
        %2775 = vmatpush1.bf16.msra.mxu0 %v2679
        %2776 = vmatprep.subr.bf16.mxu0 0
        %2777 = vmatpush1.bf16.msra.mxu0 %v2680
        %2778 = vmatprep.subr.bf16.mxu0 0
        %2779 = vmatpush1.bf16.msra.mxu0 %v2681
        %2780 = vmatprep.subr.bf16.mxu0 0
        %2781 = vmatpush1.bf16.msra.mxu0 %v2682
        %2782 = vmatprep.subr.bf16.mxu0 0
        %2783 = vmatpush1.bf16.msra.mxu0 %v2683
        %2784 = vmatprep.subr.bf16.mxu0 0
        %2785 = vmatpush1.bf16.msra.mxu0 %v2684
        %2786 = vmatprep.subr.bf16.mxu0 0
        %2787 = vmatpush1.bf16.msra.mxu0 %v2685
        %2788 = vmatprep.subr.bf16.mxu0 0
        %2789 = vmatpush1.bf16.msra.mxu0 %v2686
        %2790 = vmatprep.subr.bf16.mxu0 0
        %2791 = vmatpush1.bf16.msra.mxu0 %v2687
        %2792 = vmatprep.mubr.bf16.mxu0 %v2113
        %2793 = vmatmul.mubr.bf16.gmra.mrb[0].mxu0 %v2112
        %v2794 = vpop.f32.mrb[0].mxu0
        %v2795 = vadd.f32 %v2755, %v2794
        %v2796 = vpop.f32.mrb[0].mxu0
        %v2797 = vpop.f32.mrb[0].mxu0
        %v2798 = vpop.f32.mrb[0].mxu0
        %2799 = vdwg.mxu0
        %v2800 = vmul.f32 %v2795, 0.5
        %v2801 = vmul.f32 %v2800, 1.442695
        %v2802 = vpow.pop %v2801
        %v2803 = vmul.f32 %v575, %v2802
        %v2804 = vadd.f32 %v2452, %v2803
        %v2805 = vpack.c.bf16 %v2804, %v2804
        %v2806 = vld [vmem:[#allocation7] sm:$0xff]
        %v2807 = vld [vmem:[#allocation7 + $0x8] sm:$0xff]
        %v2808 = vld [vmem:[#allocation7 + $0x10] sm:$0xff]
        %v2809 = vld [vmem:[#allocation7 + $0x18] sm:$0xff]
        %v2810 = vld [vmem:[#allocation7 + $0x20] sm:$0xff]
        %v2811 = vld [vmem:[#allocation7 + $0x28] sm:$0xff]
        %v2812 = vld [vmem:[#allocation7 + $0x30] sm:$0xff]
        %v2813 = vld [vmem:[#allocation7 + $0x38] sm:$0xff]
        %v2814 = vld [vmem:[#allocation7 + $0x40] sm:$0xff]
        %v2815 = vld [vmem:[#allocation7 + $0x48] sm:$0xff]
        %v2816 = vld [vmem:[#allocation7 + $0x50] sm:$0xff]
        %v2817 = vld [vmem:[#allocation7 + $0x58] sm:$0xff]
        %v2818 = vld [vmem:[#allocation7 + $0x60] sm:$0xff]
        %v2819 = vld [vmem:[#allocation7 + $0x68] sm:$0xff]
        %v2820 = vld [vmem:[#allocation7 + $0x70] sm:$0xff]
        %v2821 = vld [vmem:[#allocation7 + $0x78] sm:$0xff]
        %v2822 = vld [vmem:[#allocation7 + $0x80] sm:$0xff]
        %v2823 = vld [vmem:[#allocation7 + $0x88] sm:$0xff]
        %v2824 = vld [vmem:[#allocation7 + $0x90] sm:$0xff]
        %v2825 = vld [vmem:[#allocation7 + $0x98] sm:$0xff]
        %v2826 = vld [vmem:[#allocation7 + $0xa0] sm:$0xff]
        %v2827 = vld [vmem:[#allocation7 + $0xa8] sm:$0xff]
        %v2828 = vld [vmem:[#allocation7 + $0xb0] sm:$0xff]
        %v2829 = vld [vmem:[#allocation7 + $0xb8] sm:$0xff]
        %v2830 = vld [vmem:[#allocation7 + $0xc0] sm:$0xff]
        %v2831 = vld [vmem:[#allocation7 + $0xc8] sm:$0xff]
        %v2832 = vld [vmem:[#allocation7 + $0xd0] sm:$0xff]
        %v2833 = vld [vmem:[#allocation7 + $0xd8] sm:$0xff]
        %v2834 = vld [vmem:[#allocation7 + $0xe0] sm:$0xff]
        %v2835 = vld [vmem:[#allocation7 + $0xe8] sm:$0xff]
        %v2836 = vld [vmem:[#allocation7 + $0xf0] sm:$0xff]
        %v2837 = vld [vmem:[#allocation7 + $0xf8] sm:$0xff]
        %v2838 = vld [vmem:[%s9] sm:$0xf]
        %v2840 = vlaneseq
        %v2841 = vshrl.u32 %v2840, 7
        %v2842 = vsub.s32 0, %v2841
        %v2843 = vrot.slane %v2838, %v2842
        %v2844 = vlaneseq
        %v2845 = vshrl.u32 %v2844, 7
        %v2846 = vsub.s32 1, %v2845
        %v2847 = vrot.slane %v2838, %v2846
        %v2848 = vlaneseq
        %v2849 = vshrl.u32 %v2848, 7
        %v2850 = vsub.s32 2, %v2849
        %v2851 = vrot.slane %v2838, %v2850
        %v2852 = vlaneseq
        %v2853 = vshrl.u32 %v2852, 7
        %v2854 = vsub.s32 3, %v2853
        %v2855 = vrot.slane %v2838, %v2854
        %v2892 = vunpack.c.l.b16 %v2806
        %v2893 = vunpack.c.h.b16 %v2806
        %v2894 = vunpack.c.l.b16 %v2807
        %v2895 = vunpack.c.h.b16 %v2807
        %v2896 = vunpack.c.l.b16 %v2808
        %v2897 = vunpack.c.h.b16 %v2808
        %v2898 = vunpack.c.l.b16 %v2809
        %v2899 = vunpack.c.h.b16 %v2809
        %v2900 = vunpack.c.l.b16 %v2810
        %v2901 = vunpack.c.h.b16 %v2810
        %v2902 = vunpack.c.l.b16 %v2811
        %v2903 = vunpack.c.h.b16 %v2811
        %v2904 = vunpack.c.l.b16 %v2812
        %v2905 = vunpack.c.h.b16 %v2812
        %v2906 = vunpack.c.l.b16 %v2813
        %v2907 = vunpack.c.h.b16 %v2813
        %v2908 = vunpack.c.l.b16 %v2814
        %v2909 = vunpack.c.h.b16 %v2814
        %v2910 = vunpack.c.l.b16 %v2815
        %v2911 = vunpack.c.h.b16 %v2815
        %v2912 = vunpack.c.l.b16 %v2816
        %v2913 = vunpack.c.h.b16 %v2816
        %v2914 = vunpack.c.l.b16 %v2817
        %v2915 = vunpack.c.h.b16 %v2817
        %v2916 = vunpack.c.l.b16 %v2818
        %v2917 = vunpack.c.h.b16 %v2818
        %v2918 = vunpack.c.l.b16 %v2819
        %v2919 = vunpack.c.h.b16 %v2819
        %v2920 = vunpack.c.l.b16 %v2820
        %v2921 = vunpack.c.h.b16 %v2820
        %v2922 = vunpack.c.l.b16 %v2821
        %v2923 = vunpack.c.h.b16 %v2821
        %v2924 = vunpack.c.l.b16 %v2822
        %v2925 = vunpack.c.h.b16 %v2822
        %v2926 = vunpack.c.l.b16 %v2823
        %v2927 = vunpack.c.h.b16 %v2823
        %v2928 = vunpack.c.l.b16 %v2824
        %v2929 = vunpack.c.h.b16 %v2824
        %v2930 = vunpack.c.l.b16 %v2825
        %v2931 = vunpack.c.h.b16 %v2825
        %v2932 = vunpack.c.l.b16 %v2826
        %v2933 = vunpack.c.h.b16 %v2826
        %v2934 = vunpack.c.l.b16 %v2827
        %v2935 = vunpack.c.h.b16 %v2827
        %v2936 = vunpack.c.l.b16 %v2828
        %v2937 = vunpack.c.h.b16 %v2828
        %v2938 = vunpack.c.l.b16 %v2829
        %v2939 = vunpack.c.h.b16 %v2829
        %v2940 = vunpack.c.l.b16 %v2830
        %v2941 = vunpack.c.h.b16 %v2830
        %v2942 = vunpack.c.l.b16 %v2831
        %v2943 = vunpack.c.h.b16 %v2831
        %v2944 = vunpack.c.l.b16 %v2832
        %v2945 = vunpack.c.h.b16 %v2832
        %v2946 = vunpack.c.l.b16 %v2833
        %v2947 = vunpack.c.h.b16 %v2833
        %v2948 = vunpack.c.l.b16 %v2834
        %v2949 = vunpack.c.h.b16 %v2834
        %v2950 = vunpack.c.l.b16 %v2835
        %v2951 = vunpack.c.h.b16 %v2835
        %v2952 = vunpack.c.l.b16 %v2836
        %v2953 = vunpack.c.h.b16 %v2836
        %v2954 = vunpack.c.l.b16 %v2837
        %v2955 = vunpack.c.h.b16 %v2837
        %v2956 = vpack.c.b16 %v2896, %v2892
        %v2957 = vpack.c.b16 %v2897, %v2893
        %v2958 = vpack.c.b16 %v2898, %v2894
        %v2959 = vpack.c.b16 %v2899, %v2895
        %v2960 = vpack.c.b16 %v2904, %v2900
        %v2961 = vpack.c.b16 %v2905, %v2901
        %v2962 = vpack.c.b16 %v2906, %v2902
        %v2963 = vpack.c.b16 %v2907, %v2903
        %v2964 = vpack.c.b16 %v2912, %v2908
        %v2965 = vpack.c.b16 %v2913, %v2909
        %v2966 = vpack.c.b16 %v2914, %v2910
        %v2967 = vpack.c.b16 %v2915, %v2911
        %v2968 = vpack.c.b16 %v2920, %v2916
        %v2969 = vpack.c.b16 %v2921, %v2917
        %v2970 = vpack.c.b16 %v2922, %v2918
        %v2971 = vpack.c.b16 %v2923, %v2919
        %v2972 = vpack.c.b16 %v2928, %v2924
        %v2973 = vpack.c.b16 %v2929, %v2925
        %v2974 = vpack.c.b16 %v2930, %v2926
        %v2975 = vpack.c.b16 %v2931, %v2927
        %v2976 = vpack.c.b16 %v2936, %v2932
        %v2977 = vpack.c.b16 %v2937, %v2933
        %v2978 = vpack.c.b16 %v2938, %v2934
        %v2979 = vpack.c.b16 %v2939, %v2935
        %v2980 = vpack.c.b16 %v2944, %v2940
        %v2981 = vpack.c.b16 %v2945, %v2941
        %v2982 = vpack.c.b16 %v2946, %v2942
        %v2983 = vpack.c.b16 %v2947, %v2943
        %v2984 = vpack.c.b16 %v2952, %v2948
        %v2985 = vpack.c.b16 %v2953, %v2949
        %v2986 = vpack.c.b16 %v2954, %v2950
        %v2987 = vpack.c.b16 %v2955, %v2951
        %3020 = vmatprep.subr.bf16.mxu0 %v2957
        %3021 = vmatpush1.bf16.msra.mxu0 %v2956
        %3022 = vmatprep.subr.bf16.mxu0 %v2961
        %3023 = vmatpush1.bf16.msra.mxu0 %v2960
        %3024 = vmatprep.subr.bf16.mxu0 %v2965
        %3025 = vmatpush1.bf16.msra.mxu0 %v2964
        %3026 = vmatprep.subr.bf16.mxu0 %v2969
        %3027 = vmatpush1.bf16.msra.mxu0 %v2968
        %3028 = vmatprep.subr.bf16.mxu0 %v2973
        %3029 = vmatpush1.bf16.msra.mxu0 %v2972
        %3030 = vmatprep.subr.bf16.mxu0 %v2977
        %3031 = vmatpush1.bf16.msra.mxu0 %v2976
        %3032 = vmatprep.subr.bf16.mxu0 %v2981
        %3033 = vmatpush1.bf16.msra.mxu0 %v2980
        %3034 = vmatprep.subr.bf16.mxu0 %v2985
        %3035 = vmatpush1.bf16.msra.mxu0 %v2984
        %3036 = vmatprep.subr.bf16.mxu0 0
        %3037 = vmatpush1.bf16.msra.mxu0 0
        %3038 = vmatprep.subr.bf16.mxu0 0
        %3039 = vmatpush1.bf16.msra.mxu0 0
        %3040 = vmatprep.subr.bf16.mxu0 0
        %3041 = vmatpush1.bf16.msra.mxu0 0
        %3042 = vmatprep.subr.bf16.mxu0 0
        %3043 = vmatpush1.bf16.msra.mxu0 0
        %3044 = vmatprep.subr.bf16.mxu0 0
        %3045 = vmatpush1.bf16.msra.mxu0 0
        %3046 = vmatprep.subr.bf16.mxu0 0
        %3047 = vmatpush1.bf16.msra.mxu0 0
        %3048 = vmatprep.subr.bf16.mxu0 0
        %3049 = vmatpush1.bf16.msra.mxu0 0
        %3050 = vmatprep.subr.bf16.mxu0 0
        %3051 = vmatpush1.bf16.msra.mxu0 0
        %3052 = vmatprep.mubr.bf16.mxu0 0
        %3053 = vmatmul.mubr.bf16.gmra.mrb[0].mxu0 %v2805
        %v3054 = vpop.f32.mrb[0].mxu0
        %v3055 = vadd.f32 %v2843, %v3054
        %v3056 = vpop.f32.mrb[0].mxu0
        %v3057 = vadd.f32 %v2847, %v3056
        %v3058 = vpop.f32.mrb[0].mxu0
        %v3059 = vpop.f32.mrb[0].mxu0
        %3060 = vdwg.mxu0
        %3061 = vmatprep.subr.bf16.mxu0 %v2959
        %3062 = vmatpush1.bf16.msra.mxu0 %v2958
        %3063 = vmatprep.subr.bf16.mxu0 %v2963
        %3064 = vmatpush1.bf16.msra.mxu0 %v2962
        %3065 = vmatprep.subr.bf16.mxu0 %v2967
        %3066 = vmatpush1.bf16.msra.mxu0 %v2966
        %3067 = vmatprep.subr.bf16.mxu0 %v2971
        %3068 = vmatpush1.bf16.msra.mxu0 %v2970
        %3069 = vmatprep.subr.bf16.mxu0 %v2975
        %3070 = vmatpush1.bf16.msra.mxu0 %v2974
        %3071 = vmatprep.subr.bf16.mxu0 %v2979
        %3072 = vmatpush1.bf16.msra.mxu0 %v2978
        %3073 = vmatprep.subr.bf16.mxu0 %v2983
        %3074 = vmatpush1.bf16.msra.mxu0 %v2982
        %3075 = vmatprep.subr.bf16.mxu0 %v2987
        %3076 = vmatpush1.bf16.msra.mxu0 %v2986
        %3077 = vmatprep.subr.bf16.mxu0 0
        %3078 = vmatpush1.bf16.msra.mxu0 0
        %3079 = vmatprep.subr.bf16.mxu0 0
        %3080 = vmatpush1.bf16.msra.mxu0 0
        %3081 = vmatprep.subr.bf16.mxu0 0
        %3082 = vmatpush1.bf16.msra.mxu0 0
        %3083 = vmatprep.subr.bf16.mxu0 0
        %3084 = vmatpush1.bf16.msra.mxu0 0
        %3085 = vmatprep.subr.bf16.mxu0 0
        %3086 = vmatpush1.bf16.msra.mxu0 0
        %3087 = vmatprep.subr.bf16.mxu0 0
        %3088 = vmatpush1.bf16.msra.mxu0 0
        %3089 = vmatprep.subr.bf16.mxu0 0
        %3090 = vmatpush1.bf16.msra.mxu0 0
        %3091 = vmatprep.subr.bf16.mxu0 0
        %3092 = vmatpush1.bf16.msra.mxu0 0
        %3093 = vmatprep.mubr.bf16.mxu0 0
        %3094 = vmatmul.mubr.bf16.gmra.mrb[0].mxu0 %v2805
        %v3095 = vpop.f32.mrb[0].mxu0
        %v3096 = vadd.f32 %v2851, %v3095
        %v3097 = vpop.f32.mrb[0].mxu0
        %v3098 = vadd.f32 %v2855, %v3097
        %v3099 = vpop.f32.mrb[0].mxu0
        %v3100 = vpop.f32.mrb[0].mxu0
        %3101 = vdwg.mxu0
        %v3102 = vmax.f32 %v3055, 0.0
        %v3103 = vmax.f32 %v3057, 0.0
        %v3104 = vmax.f32 %v3096, 0.0
        %v3105 = vmax.f32 %v3098, 0.0
        %v3106 = vpack.c.bf16 %v3102, %v3102
        %v3107 = vpack.c.bf16 %v3103, %v3103
        %v3108 = vpack.c.bf16 %v3104, %v3104
        %v3109 = vpack.c.bf16 %v3105, %v3105
        %v3110 = vld [vmem:[#allocation8] sm:$0xff]
        %v3111 = vld [vmem:[#allocation8 + $0x8] sm:$0xff]
        %v3112 = vld [vmem:[#allocation8 + $0x10] sm:$0xff]
        %v3113 = vld [vmem:[#allocation8 + $0x18] sm:$0xf]
        %v3114 = vld [vmem:[#allocation8 + $0x1c] sm:$0xff]
        %v3115 = vld [vmem:[#allocation8 + $0x24] sm:$0xff]
        %v3116 = vld [vmem:[#allocation8 + $0x2c] sm:$0xff]
        %v3117 = vld [vmem:[#allocation8 + $0x34] sm:$0xf]
        %v3118 = vld [vmem:[#allocation8 + $0x38] sm:$0xff]
        %v3119 = vld [vmem:[#allocation8 + $0x40] sm:$0xff]
        %v3120 = vld [vmem:[#allocation8 + $0x48] sm:$0xff]
        %v3121 = vld [vmem:[#allocation8 + $0x50] sm:$0xf]
        %v3122 = vld [vmem:[#allocation8 + $0x54] sm:$0xff]
        %v3123 = vld [vmem:[#allocation8 + $0x5c] sm:$0xff]
        %v3124 = vld [vmem:[#allocation8 + $0x64] sm:$0xff]
        %v3125 = vld [vmem:[#allocation8 + $0x6c] sm:$0xf]
        %v3126 = vld [vmem:[#allocation8 + $0x70] sm:$0xff]
        %v3127 = vld [vmem:[#allocation8 + $0x78] sm:$0xff]
        %v3128 = vld [vmem:[#allocation8 + $0x80] sm:$0xff]
        %v3129 = vld [vmem:[#allocation8 + $0x88] sm:$0xf]
        %v3130 = vld [vmem:[#allocation8 + $0x8c] sm:$0xff]
        %v3131 = vld [vmem:[#allocation8 + $0x94] sm:$0xff]
        %v3132 = vld [vmem:[#allocation8 + $0x9c] sm:$0xff]
        %v3133 = vld [vmem:[#allocation8 + $0xa4] sm:$0xf]
        %v3134 = vld [vmem:[#allocation8 + $0xa8] sm:$0xff]
        %v3135 = vld [vmem:[#allocation8 + $0xb0] sm:$0xff]
        %v3136 = vld [vmem:[#allocation8 + $0xb8] sm:$0xff]
        %v3137 = vld [vmem:[#allocation8 + $0xc0] sm:$0xf]
        %v3138 = vld [vmem:[#allocation8 + $0xc4] sm:$0xff]
        %v3139 = vld [vmem:[#allocation8 + $0xcc] sm:$0xff]
        %v3140 = vld [vmem:[#allocation8 + $0xd4] sm:$0xff]
        %v3141 = vld [vmem:[#allocation8 + $0xdc] sm:$0xf]
        %v3142 = vld [vmem:[#allocation8 + $0xe0] sm:$0xff]
        %v3143 = vld [vmem:[#allocation8 + $0xe8] sm:$0xff]
        %v3144 = vld [vmem:[#allocation8 + $0xf0] sm:$0xff]
        %v3145 = vld [vmem:[#allocation8 + $0xf8] sm:$0xf]
        %v3146 = vld [vmem:[#allocation8 + $0xfc] sm:$0xff]
        %v3147 = vld [vmem:[#allocation8 + $0x104] sm:$0xff]
        %v3148 = vld [vmem:[#allocation8 + $0x10c] sm:$0xff]
        %v3149 = vld [vmem:[#allocation8 + $0x114] sm:$0xf]
        %v3150 = vld [vmem:[#allocation8 + $0x118] sm:$0xff]
        %v3151 = vld [vmem:[#allocation8 + $0x120] sm:$0xff]
        %v3152 = vld [vmem:[#allocation8 + $0x128] sm:$0xff]
        %v3153 = vld [vmem:[#allocation8 + $0x130] sm:$0xf]
        %v3154 = vld [vmem:[#allocation8 + $0x134] sm:$0xff]
        %v3155 = vld [vmem:[#allocation8 + $0x13c] sm:$0xff]
        %v3156 = vld [vmem:[#allocation8 + $0x144] sm:$0xff]
        %v3157 = vld [vmem:[#allocation8 + $0x14c] sm:$0xf]
        %v3158 = vld [vmem:[#allocation8 + $0x150] sm:$0xff]
        %v3159 = vld [vmem:[#allocation8 + $0x158] sm:$0xff]
        %v3160 = vld [vmem:[#allocation8 + $0x160] sm:$0xff]
        %v3161 = vld [vmem:[#allocation8 + $0x168] sm:$0xf]
        %v3162 = vld [vmem:[#allocation8 + $0x16c] sm:$0xff]
        %v3163 = vld [vmem:[#allocation8 + $0x174] sm:$0xff]
        %v3164 = vld [vmem:[#allocation8 + $0x17c] sm:$0xff]
        %v3165 = vld [vmem:[#allocation8 + $0x184] sm:$0xf]
        %v3166 = vld [vmem:[#allocation8 + $0x188] sm:$0xff]
        %v3167 = vld [vmem:[#allocation8 + $0x190] sm:$0xff]
        %v3168 = vld [vmem:[#allocation8 + $0x198] sm:$0xff]
        %v3169 = vld [vmem:[#allocation8 + $0x1a0] sm:$0xf]
        %v3170 = vld [vmem:[#allocation8 + $0x1a4] sm:$0xff]
        %v3171 = vld [vmem:[#allocation8 + $0x1ac] sm:$0xff]
        %v3172 = vld [vmem:[#allocation8 + $0x1b4] sm:$0xff]
        %v3173 = vld [vmem:[#allocation8 + $0x1bc] sm:$0xf]
        %v3174 = vld [vmem:[#allocation8 + $0x1c0] sm:$0xff]
        %v3175 = vld [vmem:[#allocation8 + $0x1c8] sm:$0xff]
        %v3176 = vld [vmem:[#allocation8 + $0x1d0] sm:$0xff]
        %v3177 = vld [vmem:[#allocation8 + $0x1d8] sm:$0xf]
        %v3178 = vld [vmem:[#allocation8 + $0x1dc] sm:$0xff]
        %v3179 = vld [vmem:[#allocation8 + $0x1e4] sm:$0xff]
        %v3180 = vld [vmem:[#allocation8 + $0x1ec] sm:$0xff]
        %v3181 = vld [vmem:[#allocation8 + $0x1f4] sm:$0xf]
        %v3182 = vld [vmem:[#allocation8 + $0x1f8] sm:$0xff]
        %v3183 = vld [vmem:[#allocation8 + $0x200] sm:$0xff]
        %v3184 = vld [vmem:[#allocation8 + $0x208] sm:$0xff]
        %v3185 = vld [vmem:[#allocation8 + $0x210] sm:$0xf]
        %v3186 = vld [vmem:[#allocation8 + $0x214] sm:$0xff]
        %v3187 = vld [vmem:[#allocation8 + $0x21c] sm:$0xff]
        %v3188 = vld [vmem:[#allocation8 + $0x224] sm:$0xff]
        %v3189 = vld [vmem:[#allocation8 + $0x22c] sm:$0xf]
        %v3190 = vld [vmem:[#allocation8 + $0x230] sm:$0xff]
        %v3191 = vld [vmem:[#allocation8 + $0x238] sm:$0xff]
        %v3192 = vld [vmem:[#allocation8 + $0x240] sm:$0xff]
        %v3193 = vld [vmem:[#allocation8 + $0x248] sm:$0xf]
        %v3194 = vld [vmem:[#allocation8 + $0x24c] sm:$0xff]
        %v3195 = vld [vmem:[#allocation8 + $0x254] sm:$0xff]
        %v3196 = vld [vmem:[#allocation8 + $0x25c] sm:$0xff]
        %v3197 = vld [vmem:[#allocation8 + $0x264] sm:$0xf]
        %v3198 = vld [vmem:[#allocation8 + $0x268] sm:$0xff]
        %v3199 = vld [vmem:[#allocation8 + $0x270] sm:$0xff]
        %v3200 = vld [vmem:[#allocation8 + $0x278] sm:$0xff]
        %v3201 = vld [vmem:[#allocation8 + $0x280] sm:$0xf]
        %v3202 = vld [vmem:[#allocation8 + $0x284] sm:$0xff]
        %v3203 = vld [vmem:[#allocation8 + $0x28c] sm:$0xff]
        %v3204 = vld [vmem:[#allocation8 + $0x294] sm:$0xff]
        %v3205 = vld [vmem:[#allocation8 + $0x29c] sm:$0xf]
        %v3206 = vld [vmem:[#allocation8 + $0x2a0] sm:$0xff]
        %v3207 = vld [vmem:[#allocation8 + $0x2a8] sm:$0xff]
        %v3208 = vld [vmem:[#allocation8 + $0x2b0] sm:$0xff]
        %v3209 = vld [vmem:[#allocation8 + $0x2b8] sm:$0xf]
        %v3210 = vld [vmem:[#allocation8 + $0x2bc] sm:$0xff]
        %v3211 = vld [vmem:[#allocation8 + $0x2c4] sm:$0xff]
        %v3212 = vld [vmem:[#allocation8 + $0x2cc] sm:$0xff]
        %v3213 = vld [vmem:[#allocation8 + $0x2d4] sm:$0xf]
        %v3214 = vld [vmem:[#allocation8 + $0x2d8] sm:$0xff]
        %v3215 = vld [vmem:[#allocation8 + $0x2e0] sm:$0xff]
        %v3216 = vld [vmem:[#allocation8 + $0x2e8] sm:$0xff]
        %v3217 = vld [vmem:[#allocation8 + $0x2f0] sm:$0xf]
        %v3218 = vld [vmem:[#allocation8 + $0x2f4] sm:$0xff]
        %v3219 = vld [vmem:[#allocation8 + $0x2fc] sm:$0xff]
        %v3220 = vld [vmem:[#allocation8 + $0x304] sm:$0xff]
        %v3221 = vld [vmem:[#allocation8 + $0x30c] sm:$0xf]
        %v3222 = vld [vmem:[#allocation8 + $0x310] sm:$0xff]
        %v3223 = vld [vmem:[#allocation8 + $0x318] sm:$0xff]
        %v3224 = vld [vmem:[#allocation8 + $0x320] sm:$0xff]
        %v3225 = vld [vmem:[#allocation8 + $0x328] sm:$0xf]
        %v3226 = vld [vmem:[#allocation8 + $0x32c] sm:$0xff]
        %v3227 = vld [vmem:[#allocation8 + $0x334] sm:$0xff]
        %v3228 = vld [vmem:[#allocation8 + $0x33c] sm:$0xff]
        %v3229 = vld [vmem:[#allocation8 + $0x344] sm:$0xf]
        %v3230 = vld [vmem:[#allocation8 + $0x348] sm:$0xff]
        %v3231 = vld [vmem:[#allocation8 + $0x350] sm:$0xff]
        %v3232 = vld [vmem:[#allocation8 + $0x358] sm:$0xff]
        %v3233 = vld [vmem:[#allocation8 + $0x360] sm:$0xf]
        %v3234 = vld [vmem:[#allocation8 + $0x364] sm:$0xff]
        %v3235 = vld [vmem:[#allocation8 + $0x36c] sm:$0xff]
        %v3236 = vld [vmem:[#allocation8 + $0x374] sm:$0xff]
        %v3237 = vld [vmem:[#allocation8 + $0x37c] sm:$0xf]
        %v3238 = vld [vmem:[#allocation8 + $0x380] sm:$0xff]
        %v3239 = vld [vmem:[#allocation8 + $0x388] sm:$0xff]
        %v3240 = vld [vmem:[#allocation8 + $0x390] sm:$0xff]
        %v3241 = vld [vmem:[#allocation8 + $0x398] sm:$0xf]
        %v3242 = vld [vmem:[#allocation8 + $0x39c] sm:$0xff]
        %v3243 = vld [vmem:[#allocation8 + $0x3a4] sm:$0xff]
        %v3244 = vld [vmem:[#allocation8 + $0x3ac] sm:$0xff]
        %v3245 = vld [vmem:[#allocation8 + $0x3b4] sm:$0xf]
        %v3246 = vld [vmem:[#allocation8 + $0x3b8] sm:$0xff]
        %v3247 = vld [vmem:[#allocation8 + $0x3c0] sm:$0xff]
        %v3248 = vld [vmem:[#allocation8 + $0x3c8] sm:$0xff]
        %v3249 = vld [vmem:[#allocation8 + $0x3d0] sm:$0xf]
        %v3250 = vld [vmem:[#allocation8 + $0x3d4] sm:$0xff]
        %v3251 = vld [vmem:[#allocation8 + $0x3dc] sm:$0xff]
        %v3252 = vld [vmem:[#allocation8 + $0x3e4] sm:$0xff]
        %v3253 = vld [vmem:[#allocation8 + $0x3ec] sm:$0xf]
        %v3254 = vld [vmem:[#allocation8 + $0x3f0] sm:$0xff]
        %v3255 = vld [vmem:[#allocation8 + $0x3f8] sm:$0xff]
        %v3256 = vld [vmem:[#allocation8 + $0x400] sm:$0xff]
        %v3257 = vld [vmem:[#allocation8 + $0x408] sm:$0xf]
        %v3258 = vld [vmem:[#allocation8 + $0x40c] sm:$0xff]
        %v3259 = vld [vmem:[#allocation8 + $0x414] sm:$0xff]
        %v3260 = vld [vmem:[#allocation8 + $0x41c] sm:$0xff]
        %v3261 = vld [vmem:[#allocation8 + $0x424] sm:$0xf]
        %v3262 = vld [vmem:[#allocation8 + $0x428] sm:$0xff]
        %v3263 = vld [vmem:[#allocation8 + $0x430] sm:$0xff]
        %v3264 = vld [vmem:[#allocation8 + $0x438] sm:$0xff]
        %v3265 = vld [vmem:[#allocation8 + $0x440] sm:$0xf]
        %v3266 = vld [vmem:[#allocation8 + $0x444] sm:$0xff]
        %v3267 = vld [vmem:[#allocation8 + $0x44c] sm:$0xff]
        %v3268 = vld [vmem:[#allocation8 + $0x454] sm:$0xff]
        %v3269 = vld [vmem:[#allocation8 + $0x45c] sm:$0xf]
        %v3270 = vld [vmem:[#allocation8 + $0x460] sm:$0xff]
        %v3271 = vld [vmem:[#allocation8 + $0x468] sm:$0xff]
        %v3272 = vld [vmem:[#allocation8 + $0x470] sm:$0xff]
        %v3273 = vld [vmem:[#allocation8 + $0x478] sm:$0xf]
        %v3274 = vld [vmem:[#allocation8 + $0x47c] sm:$0xff]
        %v3275 = vld [vmem:[#allocation8 + $0x484] sm:$0xff]
        %v3276 = vld [vmem:[#allocation8 + $0x48c] sm:$0xff]
        %v3277 = vld [vmem:[#allocation8 + $0x494] sm:$0xf]
        %v3278 = vld [vmem:[#allocation8 + $0x498] sm:$0xff]
        %v3279 = vld [vmem:[#allocation8 + $0x4a0] sm:$0xff]
        %v3280 = vld [vmem:[#allocation8 + $0x4a8] sm:$0xff]
        %v3281 = vld [vmem:[#allocation8 + $0x4b0] sm:$0xf]
        %v3282 = vld [vmem:[#allocation8 + $0x4b4] sm:$0xff]
        %v3283 = vld [vmem:[#allocation8 + $0x4bc] sm:$0xff]
        %v3284 = vld [vmem:[#allocation8 + $0x4c4] sm:$0xff]
        %v3285 = vld [vmem:[#allocation8 + $0x4cc] sm:$0xf]
        %v3286 = vld [vmem:[#allocation8 + $0x4d0] sm:$0xff]
        %v3287 = vld [vmem:[#allocation8 + $0x4d8] sm:$0xff]
        %v3288 = vld [vmem:[#allocation8 + $0x4e0] sm:$0xff]
        %v3289 = vld [vmem:[#allocation8 + $0x4e8] sm:$0xf]
        %v3290 = vld [vmem:[#allocation8 + $0x4ec] sm:$0xff]
        %v3291 = vld [vmem:[#allocation8 + $0x4f4] sm:$0xff]
        %v3292 = vld [vmem:[#allocation8 + $0x4fc] sm:$0xff]
        %v3293 = vld [vmem:[#allocation8 + $0x504] sm:$0xf]
        %v3294 = vld [vmem:[#allocation8 + $0x508] sm:$0xff]
        %v3295 = vld [vmem:[#allocation8 + $0x510] sm:$0xff]
        %v3296 = vld [vmem:[#allocation8 + $0x518] sm:$0xff]
        %v3297 = vld [vmem:[#allocation8 + $0x520] sm:$0xf]
        %v3298 = vld [vmem:[#allocation8 + $0x524] sm:$0xff]
        %v3299 = vld [vmem:[#allocation8 + $0x52c] sm:$0xff]
        %v3300 = vld [vmem:[#allocation8 + $0x534] sm:$0xff]
        %v3301 = vld [vmem:[#allocation8 + $0x53c] sm:$0xf]
        %v3302 = vld [vmem:[#allocation8 + $0x540] sm:$0xff]
        %v3303 = vld [vmem:[#allocation8 + $0x548] sm:$0xff]
        %v3304 = vld [vmem:[#allocation8 + $0x550] sm:$0xff]
        %v3305 = vld [vmem:[#allocation8 + $0x558] sm:$0xf]
        %v3306 = vld [vmem:[#allocation8 + $0x55c] sm:$0xff]
        %v3307 = vld [vmem:[#allocation8 + $0x564] sm:$0xff]
        %v3308 = vld [vmem:[#allocation8 + $0x56c] sm:$0xff]
        %v3309 = vld [vmem:[#allocation8 + $0x574] sm:$0xf]
        %v3310 = vld [vmem:[#allocation8 + $0x578] sm:$0xff]
        %v3311 = vld [vmem:[#allocation8 + $0x580] sm:$0xff]
        %v3312 = vld [vmem:[#allocation8 + $0x588] sm:$0xff]
        %v3313 = vld [vmem:[#allocation8 + $0x590] sm:$0xf]
        %v3314 = vld [vmem:[#allocation8 + $0x594] sm:$0xff]
        %v3315 = vld [vmem:[#allocation8 + $0x59c] sm:$0xff]
        %v3316 = vld [vmem:[#allocation8 + $0x5a4] sm:$0xff]
        %v3317 = vld [vmem:[#allocation8 + $0x5ac] sm:$0xf]
        %v3318 = vld [vmem:[#allocation8 + $0x5b0] sm:$0xff]
        %v3319 = vld [vmem:[#allocation8 + $0x5b8] sm:$0xff]
        %v3320 = vld [vmem:[#allocation8 + $0x5c0] sm:$0xff]
        %v3321 = vld [vmem:[#allocation8 + $0x5c8] sm:$0xf]
        %v3322 = vld [vmem:[#allocation8 + $0x5cc] sm:$0xff]
        %v3323 = vld [vmem:[#allocation8 + $0x5d4] sm:$0xff]
        %v3324 = vld [vmem:[#allocation8 + $0x5dc] sm:$0xff]
        %v3325 = vld [vmem:[#allocation8 + $0x5e4] sm:$0xf]
        %v3326 = vld [vmem:[#allocation8 + $0x5e8] sm:$0xff]
        %v3327 = vld [vmem:[#allocation8 + $0x5f0] sm:$0xff]
        %v3328 = vld [vmem:[#allocation8 + $0x5f8] sm:$0xff]
        %v3329 = vld [vmem:[#allocation8 + $0x600] sm:$0xf]
        %v3330 = vld [vmem:[#allocation8 + $0x604] sm:$0xff]
        %v3331 = vld [vmem:[#allocation8 + $0x60c] sm:$0xff]
        %v3332 = vld [vmem:[#allocation8 + $0x614] sm:$0xff]
        %v3333 = vld [vmem:[#allocation8 + $0x61c] sm:$0xf]
        %v3334 = vld [vmem:[#allocation8 + $0x620] sm:$0xff]
        %v3335 = vld [vmem:[#allocation8 + $0x628] sm:$0xff]
        %v3336 = vld [vmem:[#allocation8 + $0x630] sm:$0xff]
        %v3337 = vld [vmem:[#allocation8 + $0x638] sm:$0xf]
        %v3338 = vld [vmem:[#allocation8 + $0x63c] sm:$0xff]
        %v3339 = vld [vmem:[#allocation8 + $0x644] sm:$0xff]
        %v3340 = vld [vmem:[#allocation8 + $0x64c] sm:$0xff]
        %v3341 = vld [vmem:[#allocation8 + $0x654] sm:$0xf]
        %v3342 = vld [vmem:[#allocation8 + $0x658] sm:$0xff]
        %v3343 = vld [vmem:[#allocation8 + $0x660] sm:$0xff]
        %v3344 = vld [vmem:[#allocation8 + $0x668] sm:$0xff]
        %v3345 = vld [vmem:[#allocation8 + $0x670] sm:$0xf]
        %v3346 = vld [vmem:[#allocation8 + $0x674] sm:$0xff]
        %v3347 = vld [vmem:[#allocation8 + $0x67c] sm:$0xff]
        %v3348 = vld [vmem:[#allocation8 + $0x684] sm:$0xff]
        %v3349 = vld [vmem:[#allocation8 + $0x68c] sm:$0xf]
        %v3350 = vld [vmem:[#allocation8 + $0x690] sm:$0xff]
        %v3351 = vld [vmem:[#allocation8 + $0x698] sm:$0xff]
        %v3352 = vld [vmem:[#allocation8 + $0x6a0] sm:$0xff]
        %v3353 = vld [vmem:[#allocation8 + $0x6a8] sm:$0xf]
        %v3354 = vld [vmem:[#allocation8 + $0x6ac] sm:$0xff]
        %v3355 = vld [vmem:[#allocation8 + $0x6b4] sm:$0xff]
        %v3356 = vld [vmem:[#allocation8 + $0x6bc] sm:$0xff]
        %v3357 = vld [vmem:[#allocation8 + $0x6c4] sm:$0xf]
        %v3358 = vld [vmem:[#allocation8 + $0x6c8] sm:$0xff]
        %v3359 = vld [vmem:[#allocation8 + $0x6d0] sm:$0xff]
        %v3360 = vld [vmem:[#allocation8 + $0x6d8] sm:$0xff]
        %v3361 = vld [vmem:[#allocation8 + $0x6e0] sm:$0xf]
        %v3362 = vld [vmem:[#allocation8 + $0x6e4] sm:$0xff]
        %v3363 = vld [vmem:[#allocation8 + $0x6ec] sm:$0xff]
        %v3364 = vld [vmem:[#allocation8 + $0x6f4] sm:$0xff]
        %v3365 = vld [vmem:[#allocation8 + $0x6fc] sm:$0xf]
        %v3366 = vld [vmem:[%s11] sm:$0xff]
        %v3368 = vlaneseq
        %v3369 = vshrl.u32 %v3368, 7
        %v3370 = vsub.s32 0, %v3369
        %v3371 = vrot.slane %v3366, %v3370
        %v3372 = vlaneseq
        %v3373 = vshrl.u32 %v3372, 7
        %v3374 = vsub.s32 1, %v3373
        %v3375 = vrot.slane %v3366, %v3374
        %v3376 = vlaneseq
        %v3377 = vshrl.u32 %v3376, 7
        %v3378 = vsub.s32 2, %v3377
        %v3379 = vrot.slane %v3366, %v3378
        %v3380 = vlaneseq
        %v3381 = vshrl.u32 %v3380, 7
        %v3382 = vsub.s32 3, %v3381
        %v3383 = vrot.slane %v3366, %v3382
        %v3384 = vlaneseq
        %v3385 = vshrl.u32 %v3384, 7
        %v3386 = vsub.s32 4, %v3385
        %v3387 = vrot.slane %v3366, %v3386
        %v3388 = vlaneseq
        %v3389 = vshrl.u32 %v3388, 7
        %v3390 = vsub.s32 5, %v3389
        %v3391 = vrot.slane %v3366, %v3390
        %v3392 = vlaneseq
        %v3393 = vshrl.u32 %v3392, 7
        %v3394 = vsub.s32 6, %v3393
        %v3395 = vrot.slane %v3366, %v3394
        %v3659 = vunpack.c.l.b16 %v3110
        %v3660 = vunpack.c.h.b16 %v3110
        %v3661 = vunpack.c.l.b16 %v3111
        %v3662 = vunpack.c.h.b16 %v3111
        %v3663 = vunpack.c.l.b16 %v3112
        %v3664 = vunpack.c.h.b16 %v3112
        %v3665 = vunpack.c.l.b16 %v3113
        %v3666 = vunpack.c.l.b16 %v3114
        %v3667 = vunpack.c.h.b16 %v3114
        %v3668 = vunpack.c.l.b16 %v3115
        %v3669 = vunpack.c.h.b16 %v3115
        %v3670 = vunpack.c.l.b16 %v3116
        %v3671 = vunpack.c.h.b16 %v3116
        %v3672 = vunpack.c.l.b16 %v3117
        %v3673 = vunpack.c.l.b16 %v3118
        %v3674 = vunpack.c.h.b16 %v3118
        %v3675 = vunpack.c.l.b16 %v3119
        %v3676 = vunpack.c.h.b16 %v3119
        %v3677 = vunpack.c.l.b16 %v3120
        %v3678 = vunpack.c.h.b16 %v3120
        %v3679 = vunpack.c.l.b16 %v3121
        %v3680 = vunpack.c.l.b16 %v3122
        %v3681 = vunpack.c.h.b16 %v3122
        %v3682 = vunpack.c.l.b16 %v3123
        %v3683 = vunpack.c.h.b16 %v3123
        %v3684 = vunpack.c.l.b16 %v3124
        %v3685 = vunpack.c.h.b16 %v3124
        %v3686 = vunpack.c.l.b16 %v3125
        %v3687 = vunpack.c.l.b16 %v3126
        %v3688 = vunpack.c.h.b16 %v3126
        %v3689 = vunpack.c.l.b16 %v3127
        %v3690 = vunpack.c.h.b16 %v3127
        %v3691 = vunpack.c.l.b16 %v3128
        %v3692 = vunpack.c.h.b16 %v3128
        %v3693 = vunpack.c.l.b16 %v3129
        %v3694 = vunpack.c.l.b16 %v3130
        %v3695 = vunpack.c.h.b16 %v3130
        %v3696 = vunpack.c.l.b16 %v3131
        %v3697 = vunpack.c.h.b16 %v3131
        %v3698 = vunpack.c.l.b16 %v3132
        %v3699 = vunpack.c.h.b16 %v3132
        %v3700 = vunpack.c.l.b16 %v3133
        %v3701 = vunpack.c.l.b16 %v3134
        %v3702 = vunpack.c.h.b16 %v3134
        %v3703 = vunpack.c.l.b16 %v3135
        %v3704 = vunpack.c.h.b16 %v3135
        %v3705 = vunpack.c.l.b16 %v3136
        %v3706 = vunpack.c.h.b16 %v3136
        %v3707 = vunpack.c.l.b16 %v3137
        %v3708 = vunpack.c.l.b16 %v3138
        %v3709 = vunpack.c.h.b16 %v3138
        %v3710 = vunpack.c.l.b16 %v3139
        %v3711 = vunpack.c.h.b16 %v3139
        %v3712 = vunpack.c.l.b16 %v3140
        %v3713 = vunpack.c.h.b16 %v3140
        %v3714 = vunpack.c.l.b16 %v3141
        %v3715 = vunpack.c.l.b16 %v3142
        %v3716 = vunpack.c.h.b16 %v3142
        %v3717 = vunpack.c.l.b16 %v3143
        %v3718 = vunpack.c.h.b16 %v3143
        %v3719 = vunpack.c.l.b16 %v3144
        %v3720 = vunpack.c.h.b16 %v3144
        %v3721 = vunpack.c.l.b16 %v3145
        %v3722 = vunpack.c.l.b16 %v3146
        %v3723 = vunpack.c.h.b16 %v3146
        %v3724 = vunpack.c.l.b16 %v3147
        %v3725 = vunpack.c.h.b16 %v3147
        %v3726 = vunpack.c.l.b16 %v3148
        %v3727 = vunpack.c.h.b16 %v3148
        %v3728 = vunpack.c.l.b16 %v3149
        %v3729 = vunpack.c.l.b16 %v3150
        %v3730 = vunpack.c.h.b16 %v3150
        %v3731 = vunpack.c.l.b16 %v3151
        %v3732 = vunpack.c.h.b16 %v3151
        %v3733 = vunpack.c.l.b16 %v3152
        %v3734 = vunpack.c.h.b16 %v3152
        %v3735 = vunpack.c.l.b16 %v3153
        %v3736 = vunpack.c.l.b16 %v3154
        %v3737 = vunpack.c.h.b16 %v3154
        %v3738 = vunpack.c.l.b16 %v3155
        %v3739 = vunpack.c.h.b16 %v3155
        %v3740 = vunpack.c.l.b16 %v3156
        %v3741 = vunpack.c.h.b16 %v3156
        %v3742 = vunpack.c.l.b16 %v3157
        %v3743 = vunpack.c.l.b16 %v3158
        %v3744 = vunpack.c.h.b16 %v3158
        %v3745 = vunpack.c.l.b16 %v3159
        %v3746 = vunpack.c.h.b16 %v3159
        %v3747 = vunpack.c.l.b16 %v3160
        %v3748 = vunpack.c.h.b16 %v3160
        %v3749 = vunpack.c.l.b16 %v3161
        %v3750 = vunpack.c.l.b16 %v3162
        %v3751 = vunpack.c.h.b16 %v3162
        %v3752 = vunpack.c.l.b16 %v3163
        %v3753 = vunpack.c.h.b16 %v3163
        %v3754 = vunpack.c.l.b16 %v3164
        %v3755 = vunpack.c.h.b16 %v3164
        %v3756 = vunpack.c.l.b16 %v3165
        %v3757 = vunpack.c.l.b16 %v3166
        %v3758 = vunpack.c.h.b16 %v3166
        %v3759 = vunpack.c.l.b16 %v3167
        %v3760 = vunpack.c.h.b16 %v3167
        %v3761 = vunpack.c.l.b16 %v3168
        %v3762 = vunpack.c.h.b16 %v3168
        %v3763 = vunpack.c.l.b16 %v3169
        %v3764 = vunpack.c.l.b16 %v3170
        %v3765 = vunpack.c.h.b16 %v3170
        %v3766 = vunpack.c.l.b16 %v3171
        %v3767 = vunpack.c.h.b16 %v3171
        %v3768 = vunpack.c.l.b16 %v3172
        %v3769 = vunpack.c.h.b16 %v3172
        %v3770 = vunpack.c.l.b16 %v3173
        %v3771 = vunpack.c.l.b16 %v3174
        %v3772 = vunpack.c.h.b16 %v3174
        %v3773 = vunpack.c.l.b16 %v3175
        %v3774 = vunpack.c.h.b16 %v3175
        %v3775 = vunpack.c.l.b16 %v3176
        %v3776 = vunpack.c.h.b16 %v3176
        %v3777 = vunpack.c.l.b16 %v3177
        %v3778 = vunpack.c.l.b16 %v3178
        %v3779 = vunpack.c.h.b16 %v3178
        %v3780 = vunpack.c.l.b16 %v3179
        %v3781 = vunpack.c.h.b16 %v3179
        %v3782 = vunpack.c.l.b16 %v3180
        %v3783 = vunpack.c.h.b16 %v3180
        %v3784 = vunpack.c.l.b16 %v3181
        %v3785 = vunpack.c.l.b16 %v3182
        %v3786 = vunpack.c.h.b16 %v3182
        %v3787 = vunpack.c.l.b16 %v3183
        %v3788 = vunpack.c.h.b16 %v3183
        %v3789 = vunpack.c.l.b16 %v3184
        %v3790 = vunpack.c.h.b16 %v3184
        %v3791 = vunpack.c.l.b16 %v3185
        %v3792 = vunpack.c.l.b16 %v3186
        %v3793 = vunpack.c.h.b16 %v3186
        %v3794 = vunpack.c.l.b16 %v3187
        %v3795 = vunpack.c.h.b16 %v3187
        %v3796 = vunpack.c.l.b16 %v3188
        %v3797 = vunpack.c.h.b16 %v3188
        %v3798 = vunpack.c.l.b16 %v3189
        %v3799 = vunpack.c.l.b16 %v3190
        %v3800 = vunpack.c.h.b16 %v3190
        %v3801 = vunpack.c.l.b16 %v3191
        %v3802 = vunpack.c.h.b16 %v3191
        %v3803 = vunpack.c.l.b16 %v3192
        %v3804 = vunpack.c.h.b16 %v3192
        %v3805 = vunpack.c.l.b16 %v3193
        %v3806 = vunpack.c.l.b16 %v3194
        %v3807 = vunpack.c.h.b16 %v3194
        %v3808 = vunpack.c.l.b16 %v3195
        %v3809 = vunpack.c.h.b16 %v3195
        %v3810 = vunpack.c.l.b16 %v3196
        %v3811 = vunpack.c.h.b16 %v3196
        %v3812 = vunpack.c.l.b16 %v3197
        %v3813 = vunpack.c.l.b16 %v3198
        %v3814 = vunpack.c.h.b16 %v3198
        %v3815 = vunpack.c.l.b16 %v3199
        %v3816 = vunpack.c.h.b16 %v3199
        %v3817 = vunpack.c.l.b16 %v3200
        %v3818 = vunpack.c.h.b16 %v3200
        %v3819 = vunpack.c.l.b16 %v3201
        %v3820 = vunpack.c.l.b16 %v3202
        %v3821 = vunpack.c.h.b16 %v3202
        %v3822 = vunpack.c.l.b16 %v3203
        %v3823 = vunpack.c.h.b16 %v3203
        %v3824 = vunpack.c.l.b16 %v3204
        %v3825 = vunpack.c.h.b16 %v3204
        %v3826 = vunpack.c.l.b16 %v3205
        %v3827 = vunpack.c.l.b16 %v3206
        %v3828 = vunpack.c.h.b16 %v3206
        %v3829 = vunpack.c.l.b16 %v3207
        %v3830 = vunpack.c.h.b16 %v3207
        %v3831 = vunpack.c.l.b16 %v3208
        %v3832 = vunpack.c.h.b16 %v3208
        %v3833 = vunpack.c.l.b16 %v3209
        %v3834 = vunpack.c.l.b16 %v3210
        %v3835 = vunpack.c.h.b16 %v3210
        %v3836 = vunpack.c.l.b16 %v3211
        %v3837 = vunpack.c.h.b16 %v3211
        %v3838 = vunpack.c.l.b16 %v3212
        %v3839 = vunpack.c.h.b16 %v3212
        %v3840 = vunpack.c.l.b16 %v3213
        %v3841 = vunpack.c.l.b16 %v3214
        %v3842 = vunpack.c.h.b16 %v3214
        %v3843 = vunpack.c.l.b16 %v3215
        %v3844 = vunpack.c.h.b16 %v3215
        %v3845 = vunpack.c.l.b16 %v3216
        %v3846 = vunpack.c.h.b16 %v3216
        %v3847 = vunpack.c.l.b16 %v3217
        %v3848 = vunpack.c.l.b16 %v3218
        %v3849 = vunpack.c.h.b16 %v3218
        %v3850 = vunpack.c.l.b16 %v3219
        %v3851 = vunpack.c.h.b16 %v3219
        %v3852 = vunpack.c.l.b16 %v3220
        %v3853 = vunpack.c.h.b16 %v3220
        %v3854 = vunpack.c.l.b16 %v3221
        %v3855 = vunpack.c.l.b16 %v3222
        %v3856 = vunpack.c.h.b16 %v3222
        %v3857 = vunpack.c.l.b16 %v3223
        %v3858 = vunpack.c.h.b16 %v3223
        %v3859 = vunpack.c.l.b16 %v3224
        %v3860 = vunpack.c.h.b16 %v3224
        %v3861 = vunpack.c.l.b16 %v3225
        %v3862 = vunpack.c.l.b16 %v3226
        %v3863 = vunpack.c.h.b16 %v3226
        %v3864 = vunpack.c.l.b16 %v3227
        %v3865 = vunpack.c.h.b16 %v3227
        %v3866 = vunpack.c.l.b16 %v3228
        %v3867 = vunpack.c.h.b16 %v3228
        %v3868 = vunpack.c.l.b16 %v3229
        %v3869 = vunpack.c.l.b16 %v3230
        %v3870 = vunpack.c.h.b16 %v3230
        %v3871 = vunpack.c.l.b16 %v3231
        %v3872 = vunpack.c.h.b16 %v3231
        %v3873 = vunpack.c.l.b16 %v3232
        %v3874 = vunpack.c.h.b16 %v3232
        %v3875 = vunpack.c.l.b16 %v3233
        %v3876 = vunpack.c.l.b16 %v3234
        %v3877 = vunpack.c.h.b16 %v3234
        %v3878 = vunpack.c.l.b16 %v3235
        %v3879 = vunpack.c.h.b16 %v3235
        %v3880 = vunpack.c.l.b16 %v3236
        %v3881 = vunpack.c.h.b16 %v3236
        %v3882 = vunpack.c.l.b16 %v3237
        %v3883 = vunpack.c.l.b16 %v3238
        %v3884 = vunpack.c.h.b16 %v3238
        %v3885 = vunpack.c.l.b16 %v3239
        %v3886 = vunpack.c.h.b16 %v3239
        %v3887 = vunpack.c.l.b16 %v3240
        %v3888 = vunpack.c.h.b16 %v3240
        %v3889 = vunpack.c.l.b16 %v3241
        %v3890 = vunpack.c.l.b16 %v3242
        %v3891 = vunpack.c.h.b16 %v3242
        %v3892 = vunpack.c.l.b16 %v3243
        %v3893 = vunpack.c.h.b16 %v3243
        %v3894 = vunpack.c.l.b16 %v3244
        %v3895 = vunpack.c.h.b16 %v3244
        %v3896 = vunpack.c.l.b16 %v3245
        %v3897 = vunpack.c.l.b16 %v3246
        %v3898 = vunpack.c.h.b16 %v3246
        %v3899 = vunpack.c.l.b16 %v3247
        %v3900 = vunpack.c.h.b16 %v3247
        %v3901 = vunpack.c.l.b16 %v3248
        %v3902 = vunpack.c.h.b16 %v3248
        %v3903 = vunpack.c.l.b16 %v3249
        %v3904 = vunpack.c.l.b16 %v3250
        %v3905 = vunpack.c.h.b16 %v3250
        %v3906 = vunpack.c.l.b16 %v3251
        %v3907 = vunpack.c.h.b16 %v3251
        %v3908 = vunpack.c.l.b16 %v3252
        %v3909 = vunpack.c.h.b16 %v3252
        %v3910 = vunpack.c.l.b16 %v3253
        %v3911 = vunpack.c.l.b16 %v3254
        %v3912 = vunpack.c.h.b16 %v3254
        %v3913 = vunpack.c.l.b16 %v3255
        %v3914 = vunpack.c.h.b16 %v3255
        %v3915 = vunpack.c.l.b16 %v3256
        %v3916 = vunpack.c.h.b16 %v3256
        %v3917 = vunpack.c.l.b16 %v3257
        %v3918 = vunpack.c.l.b16 %v3258
        %v3919 = vunpack.c.h.b16 %v3258
        %v3920 = vunpack.c.l.b16 %v3259
        %v3921 = vunpack.c.h.b16 %v3259
        %v3922 = vunpack.c.l.b16 %v3260
        %v3923 = vunpack.c.h.b16 %v3260
        %v3924 = vunpack.c.l.b16 %v3261
        %v3925 = vunpack.c.l.b16 %v3262
        %v3926 = vunpack.c.h.b16 %v3262
        %v3927 = vunpack.c.l.b16 %v3263
        %v3928 = vunpack.c.h.b16 %v3263
        %v3929 = vunpack.c.l.b16 %v3264
        %v3930 = vunpack.c.h.b16 %v3264
        %v3931 = vunpack.c.l.b16 %v3265
        %v3932 = vunpack.c.l.b16 %v3266
        %v3933 = vunpack.c.h.b16 %v3266
        %v3934 = vunpack.c.l.b16 %v3267
        %v3935 = vunpack.c.h.b16 %v3267
        %v3936 = vunpack.c.l.b16 %v3268
        %v3937 = vunpack.c.h.b16 %v3268
        %v3938 = vunpack.c.l.b16 %v3269
        %v3939 = vunpack.c.l.b16 %v3270
        %v3940 = vunpack.c.h.b16 %v3270
        %v3941 = vunpack.c.l.b16 %v3271
        %v3942 = vunpack.c.h.b16 %v3271
        %v3943 = vunpack.c.l.b16 %v3272
        %v3944 = vunpack.c.h.b16 %v3272
        %v3945 = vunpack.c.l.b16 %v3273
        %v3946 = vunpack.c.l.b16 %v3274
        %v3947 = vunpack.c.h.b16 %v3274
        %v3948 = vunpack.c.l.b16 %v3275
        %v3949 = vunpack.c.h.b16 %v3275
        %v3950 = vunpack.c.l.b16 %v3276
        %v3951 = vunpack.c.h.b16 %v3276
        %v3952 = vunpack.c.l.b16 %v3277
        %v3953 = vunpack.c.l.b16 %v3278
        %v3954 = vunpack.c.h.b16 %v3278
        %v3955 = vunpack.c.l.b16 %v3279
        %v3956 = vunpack.c.h.b16 %v3279
        %v3957 = vunpack.c.l.b16 %v3280
        %v3958 = vunpack.c.h.b16 %v3280
        %v3959 = vunpack.c.l.b16 %v3281
        %v3960 = vunpack.c.l.b16 %v3282
        %v3961 = vunpack.c.h.b16 %v3282
        %v3962 = vunpack.c.l.b16 %v3283
        %v3963 = vunpack.c.h.b16 %v3283
        %v3964 = vunpack.c.l.b16 %v3284
        %v3965 = vunpack.c.h.b16 %v3284
        %v3966 = vunpack.c.l.b16 %v3285
        %v3967 = vunpack.c.l.b16 %v3286
        %v3968 = vunpack.c.h.b16 %v3286
        %v3969 = vunpack.c.l.b16 %v3287
        %v3970 = vunpack.c.h.b16 %v3287
        %v3971 = vunpack.c.l.b16 %v3288
        %v3972 = vunpack.c.h.b16 %v3288
        %v3973 = vunpack.c.l.b16 %v3289
        %v3974 = vunpack.c.l.b16 %v3290
        %v3975 = vunpack.c.h.b16 %v3290
        %v3976 = vunpack.c.l.b16 %v3291
        %v3977 = vunpack.c.h.b16 %v3291
        %v3978 = vunpack.c.l.b16 %v3292
        %v3979 = vunpack.c.h.b16 %v3292
        %v3980 = vunpack.c.l.b16 %v3293
        %v3981 = vunpack.c.l.b16 %v3294
        %v3982 = vunpack.c.h.b16 %v3294
        %v3983 = vunpack.c.l.b16 %v3295
        %v3984 = vunpack.c.h.b16 %v3295
        %v3985 = vunpack.c.l.b16 %v3296
        %v3986 = vunpack.c.h.b16 %v3296
        %v3987 = vunpack.c.l.b16 %v3297
        %v3988 = vunpack.c.l.b16 %v3298
        %v3989 = vunpack.c.h.b16 %v3298
        %v3990 = vunpack.c.l.b16 %v3299
        %v3991 = vunpack.c.h.b16 %v3299
        %v3992 = vunpack.c.l.b16 %v3300
        %v3993 = vunpack.c.h.b16 %v3300
        %v3994 = vunpack.c.l.b16 %v3301
        %v3995 = vunpack.c.l.b16 %v3302
        %v3996 = vunpack.c.h.b16 %v3302
        %v3997 = vunpack.c.l.b16 %v3303
        %v3998 = vunpack.c.h.b16 %v3303
        %v3999 = vunpack.c.l.b16 %v3304
        %v4000 = vunpack.c.h.b16 %v3304
        %v4001 = vunpack.c.l.b16 %v3305
        %v4002 = vunpack.c.l.b16 %v3306
        %v4003 = vunpack.c.h.b16 %v3306
        %v4004 = vunpack.c.l.b16 %v3307
        %v4005 = vunpack.c.h.b16 %v3307
        %v4006 = vunpack.c.l.b16 %v3308
        %v4007 = vunpack.c.h.b16 %v3308
        %v4008 = vunpack.c.l.b16 %v3309
        %v4009 = vunpack.c.l.b16 %v3310
        %v4010 = vunpack.c.h.b16 %v3310
        %v4011 = vunpack.c.l.b16 %v3311
        %v4012 = vunpack.c.h.b16 %v3311
        %v4013 = vunpack.c.l.b16 %v3312
        %v4014 = vunpack.c.h.b16 %v3312
        %v4015 = vunpack.c.l.b16 %v3313
        %v4016 = vunpack.c.l.b16 %v3314
        %v4017 = vunpack.c.h.b16 %v3314
        %v4018 = vunpack.c.l.b16 %v3315
        %v4019 = vunpack.c.h.b16 %v3315
        %v4020 = vunpack.c.l.b16 %v3316
        %v4021 = vunpack.c.h.b16 %v3316
        %v4022 = vunpack.c.l.b16 %v3317
        %v4023 = vunpack.c.l.b16 %v3318
        %v4024 = vunpack.c.h.b16 %v3318
        %v4025 = vunpack.c.l.b16 %v3319
        %v4026 = vunpack.c.h.b16 %v3319
        %v4027 = vunpack.c.l.b16 %v3320
        %v4028 = vunpack.c.h.b16 %v3320
        %v4029 = vunpack.c.l.b16 %v3321
        %v4030 = vunpack.c.l.b16 %v3322
        %v4031 = vunpack.c.h.b16 %v3322
        %v4032 = vunpack.c.l.b16 %v3323
        %v4033 = vunpack.c.h.b16 %v3323
        %v4034 = vunpack.c.l.b16 %v3324
        %v4035 = vunpack.c.h.b16 %v3324
        %v4036 = vunpack.c.l.b16 %v3325
        %v4037 = vunpack.c.l.b16 %v3326
        %v4038 = vunpack.c.h.b16 %v3326
        %v4039 = vunpack.c.l.b16 %v3327
        %v4040 = vunpack.c.h.b16 %v3327
        %v4041 = vunpack.c.l.b16 %v3328
        %v4042 = vunpack.c.h.b16 %v3328
        %v4043 = vunpack.c.l.b16 %v3329
        %v4044 = vunpack.c.l.b16 %v3330
        %v4045 = vunpack.c.h.b16 %v3330
        %v4046 = vunpack.c.l.b16 %v3331
        %v4047 = vunpack.c.h.b16 %v3331
        %v4048 = vunpack.c.l.b16 %v3332
        %v4049 = vunpack.c.h.b16 %v3332
        %v4050 = vunpack.c.l.b16 %v3333
        %v4051 = vunpack.c.l.b16 %v3334
        %v4052 = vunpack.c.h.b16 %v3334
        %v4053 = vunpack.c.l.b16 %v3335
        %v4054 = vunpack.c.h.b16 %v3335
        %v4055 = vunpack.c.l.b16 %v3336
        %v4056 = vunpack.c.h.b16 %v3336
        %v4057 = vunpack.c.l.b16 %v3337
        %v4058 = vunpack.c.l.b16 %v3338
        %v4059 = vunpack.c.h.b16 %v3338
        %v4060 = vunpack.c.l.b16 %v3339
        %v4061 = vunpack.c.h.b16 %v3339
        %v4062 = vunpack.c.l.b16 %v3340
        %v4063 = vunpack.c.h.b16 %v3340
        %v4064 = vunpack.c.l.b16 %v3341
        %v4065 = vunpack.c.l.b16 %v3342
        %v4066 = vunpack.c.h.b16 %v3342
        %v4067 = vunpack.c.l.b16 %v3343
        %v4068 = vunpack.c.h.b16 %v3343
        %v4069 = vunpack.c.l.b16 %v3344
        %v4070 = vunpack.c.h.b16 %v3344
        %v4071 = vunpack.c.l.b16 %v3345
        %v4072 = vunpack.c.l.b16 %v3346
        %v4073 = vunpack.c.h.b16 %v3346
        %v4074 = vunpack.c.l.b16 %v3347
        %v4075 = vunpack.c.h.b16 %v3347
        %v4076 = vunpack.c.l.b16 %v3348
        %v4077 = vunpack.c.h.b16 %v3348
        %v4078 = vunpack.c.l.b16 %v3349
        %v4079 = vunpack.c.l.b16 %v3350
        %v4080 = vunpack.c.h.b16 %v3350
        %v4081 = vunpack.c.l.b16 %v3351
        %v4082 = vunpack.c.h.b16 %v3351
        %v4083 = vunpack.c.l.b16 %v3352
        %v4084 = vunpack.c.h.b16 %v3352
        %v4085 = vunpack.c.l.b16 %v3353
        %v4086 = vunpack.c.l.b16 %v3354
        %v4087 = vunpack.c.h.b16 %v3354
        %v4088 = vunpack.c.l.b16 %v3355
        %v4089 = vunpack.c.h.b16 %v3355
        %v4090 = vunpack.c.l.b16 %v3356
        %v4091 = vunpack.c.h.b16 %v3356
        %v4092 = vunpack.c.l.b16 %v3357
        %v4093 = vunpack.c.l.b16 %v3358
        %v4094 = vunpack.c.h.b16 %v3358
        %v4095 = vunpack.c.l.b16 %v3359
        %v4096 = vunpack.c.h.b16 %v3359
        %v4097 = vunpack.c.l.b16 %v3360
        %v4098 = vunpack.c.h.b16 %v3360
        %v4099 = vunpack.c.l.b16 %v3361
        %v4100 = vunpack.c.l.b16 %v3362
        %v4101 = vunpack.c.h.b16 %v3362
        %v4102 = vunpack.c.l.b16 %v3363
        %v4103 = vunpack.c.h.b16 %v3363
        %v4104 = vunpack.c.l.b16 %v3364
        %v4105 = vunpack.c.h.b16 %v3364
        %v4106 = vunpack.c.l.b16 %v3365
        %v4107 = vpack.c.b16 %v3666, %v3659
        %v4108 = vpack.c.b16 %v3667, %v3660
        %v4109 = vpack.c.b16 %v3668, %v3661
        %v4110 = vpack.c.b16 %v3669, %v3662
        %v4111 = vpack.c.b16 %v3670, %v3663
        %v4112 = vpack.c.b16 %v3671, %v3664
        %v4113 = vpack.c.b16 %v3672, %v3665
        %v4114 = vpack.c.b16 %v3680, %v3673
        %v4115 = vpack.c.b16 %v3681, %v3674
        %v4116 = vpack.c.b16 %v3682, %v3675
        %v4117 = vpack.c.b16 %v3683, %v3676
        %v4118 = vpack.c.b16 %v3684, %v3677
        %v4119 = vpack.c.b16 %v3685, %v3678
        %v4120 = vpack.c.b16 %v3686, %v3679
        %v4121 = vpack.c.b16 %v3694, %v3687
        %v4122 = vpack.c.b16 %v3695, %v3688
        %v4123 = vpack.c.b16 %v3696, %v3689
        %v4124 = vpack.c.b16 %v3697, %v3690
        %v4125 = vpack.c.b16 %v3698, %v3691
        %v4126 = vpack.c.b16 %v3699, %v3692
        %v4127 = vpack.c.b16 %v3700, %v3693
        %v4128 = vpack.c.b16 %v3708, %v3701
        %v4129 = vpack.c.b16 %v3709, %v3702
        %v4130 = vpack.c.b16 %v3710, %v3703
        %v4131 = vpack.c.b16 %v3711, %v3704
        %v4132 = vpack.c.b16 %v3712, %v3705
        %v4133 = vpack.c.b16 %v3713, %v3706
        %v4134 = vpack.c.b16 %v3714, %v3707
        %v4135 = vpack.c.b16 %v3722, %v3715
        %v4136 = vpack.c.b16 %v3723, %v3716
        %v4137 = vpack.c.b16 %v3724, %v3717
        %v4138 = vpack.c.b16 %v3725, %v3718
        %v4139 = vpack.c.b16 %v3726, %v3719
        %v4140 = vpack.c.b16 %v3727, %v3720
        %v4141 = vpack.c.b16 %v3728, %v3721
        %v4142 = vpack.c.b16 %v3736, %v3729
        %v4143 = vpack.c.b16 %v3737, %v3730
        %v4144 = vpack.c.b16 %v3738, %v3731
        %v4145 = vpack.c.b16 %v3739, %v3732
        %v4146 = vpack.c.b16 %v3740, %v3733
        %v4147 = vpack.c.b16 %v3741, %v3734
        %v4148 = vpack.c.b16 %v3742, %v3735
        %v4149 = vpack.c.b16 %v3750, %v3743
        %v4150 = vpack.c.b16 %v3751, %v3744
        %v4151 = vpack.c.b16 %v3752, %v3745
        %v4152 = vpack.c.b16 %v3753, %v3746
        %v4153 = vpack.c.b16 %v3754, %v3747
        %v4154 = vpack.c.b16 %v3755, %v3748
        %v4155 = vpack.c.b16 %v3756, %v3749
        %v4156 = vpack.c.b16 %v3764, %v3757
        %v4157 = vpack.c.b16 %v3765, %v3758
        %v4158 = vpack.c.b16 %v3766, %v3759
        %v4159 = vpack.c.b16 %v3767, %v3760
        %v4160 = vpack.c.b16 %v3768, %v3761
        %v4161 = vpack.c.b16 %v3769, %v3762
        %v4162 = vpack.c.b16 %v3770, %v3763
        %v4163 = vpack.c.b16 %v3778, %v3771
        %v4164 = vpack.c.b16 %v3779, %v3772
        %v4165 = vpack.c.b16 %v3780, %v3773
        %v4166 = vpack.c.b16 %v3781, %v3774
        %v4167 = vpack.c.b16 %v3782, %v3775
        %v4168 = vpack.c.b16 %v3783, %v3776
        %v4169 = vpack.c.b16 %v3784, %v3777
        %v4170 = vpack.c.b16 %v3792, %v3785
        %v4171 = vpack.c.b16 %v3793, %v3786
        %v4172 = vpack.c.b16 %v3794, %v3787
        %v4173 = vpack.c.b16 %v3795, %v3788
        %v4174 = vpack.c.b16 %v3796, %v3789
        %v4175 = vpack.c.b16 %v3797, %v3790
        %v4176 = vpack.c.b16 %v3798, %v3791
        %v4177 = vpack.c.b16 %v3806, %v3799
        %v4178 = vpack.c.b16 %v3807, %v3800
        %v4179 = vpack.c.b16 %v3808, %v3801
        %v4180 = vpack.c.b16 %v3809, %v3802
        %v4181 = vpack.c.b16 %v3810, %v3803
        %v4182 = vpack.c.b16 %v3811, %v3804
        %v4183 = vpack.c.b16 %v3812, %v3805
        %v4184 = vpack.c.b16 %v3820, %v3813
        %v4185 = vpack.c.b16 %v3821, %v3814
        %v4186 = vpack.c.b16 %v3822, %v3815
        %v4187 = vpack.c.b16 %v3823, %v3816
        %v4188 = vpack.c.b16 %v3824, %v3817
        %v4189 = vpack.c.b16 %v3825, %v3818
        %v4190 = vpack.c.b16 %v3826, %v3819
        %v4191 = vpack.c.b16 %v3834, %v3827
        %v4192 = vpack.c.b16 %v3835, %v3828
        %v4193 = vpack.c.b16 %v3836, %v3829
        %v4194 = vpack.c.b16 %v3837, %v3830
        %v4195 = vpack.c.b16 %v3838, %v3831
        %v4196 = vpack.c.b16 %v3839, %v3832
        %v4197 = vpack.c.b16 %v3840, %v3833
        %v4198 = vpack.c.b16 %v3848, %v3841
        %v4199 = vpack.c.b16 %v3849, %v3842
        %v4200 = vpack.c.b16 %v3850, %v3843
        %v4201 = vpack.c.b16 %v3851, %v3844
        %v4202 = vpack.c.b16 %v3852, %v3845
        %v4203 = vpack.c.b16 %v3853, %v3846
        %v4204 = vpack.c.b16 %v3854, %v3847
        %v4205 = vpack.c.b16 %v3862, %v3855
        %v4206 = vpack.c.b16 %v3863, %v3856
        %v4207 = vpack.c.b16 %v3864, %v3857
        %v4208 = vpack.c.b16 %v3865, %v3858
        %v4209 = vpack.c.b16 %v3866, %v3859
        %v4210 = vpack.c.b16 %v3867, %v3860
        %v4211 = vpack.c.b16 %v3868, %v3861
        %v4212 = vpack.c.b16 %v3876, %v3869
        %v4213 = vpack.c.b16 %v3877, %v3870
        %v4214 = vpack.c.b16 %v3878, %v3871
        %v4215 = vpack.c.b16 %v3879, %v3872
        %v4216 = vpack.c.b16 %v3880, %v3873
        %v4217 = vpack.c.b16 %v3881, %v3874
        %v4218 = vpack.c.b16 %v3882, %v3875
        %v4219 = vpack.c.b16 %v3890, %v3883
        %v4220 = vpack.c.b16 %v3891, %v3884
        %v4221 = vpack.c.b16 %v3892, %v3885
        %v4222 = vpack.c.b16 %v3893, %v3886
        %v4223 = vpack.c.b16 %v3894, %v3887
        %v4224 = vpack.c.b16 %v3895, %v3888
        %v4225 = vpack.c.b16 %v3896, %v3889
        %v4226 = vpack.c.b16 %v3904, %v3897
        %v4227 = vpack.c.b16 %v3905, %v3898
        %v4228 = vpack.c.b16 %v3906, %v3899
        %v4229 = vpack.c.b16 %v3907, %v3900
        %v4230 = vpack.c.b16 %v3908, %v3901
        %v4231 = vpack.c.b16 %v3909, %v3902
        %v4232 = vpack.c.b16 %v3910, %v3903
        %v4233 = vpack.c.b16 %v3918, %v3911
        %v4234 = vpack.c.b16 %v3919, %v3912
        %v4235 = vpack.c.b16 %v3920, %v3913
        %v4236 = vpack.c.b16 %v3921, %v3914
        %v4237 = vpack.c.b16 %v3922, %v3915
        %v4238 = vpack.c.b16 %v3923, %v3916
        %v4239 = vpack.c.b16 %v3924, %v3917
        %v4240 = vpack.c.b16 %v3932, %v3925
        %v4241 = vpack.c.b16 %v3933, %v3926
        %v4242 = vpack.c.b16 %v3934, %v3927
        %v4243 = vpack.c.b16 %v3935, %v3928
        %v4244 = vpack.c.b16 %v3936, %v3929
        %v4245 = vpack.c.b16 %v3937, %v3930
        %v4246 = vpack.c.b16 %v3938, %v3931
        %v4247 = vpack.c.b16 %v3946, %v3939
        %v4248 = vpack.c.b16 %v3947, %v3940
        %v4249 = vpack.c.b16 %v3948, %v3941
        %v4250 = vpack.c.b16 %v3949, %v3942
        %v4251 = vpack.c.b16 %v3950, %v3943
        %v4252 = vpack.c.b16 %v3951, %v3944
        %v4253 = vpack.c.b16 %v3952, %v3945
        %v4254 = vpack.c.b16 %v3960, %v3953
        %v4255 = vpack.c.b16 %v3961, %v3954
        %v4256 = vpack.c.b16 %v3962, %v3955
        %v4257 = vpack.c.b16 %v3963, %v3956
        %v4258 = vpack.c.b16 %v3964, %v3957
        %v4259 = vpack.c.b16 %v3965, %v3958
        %v4260 = vpack.c.b16 %v3966, %v3959
        %v4261 = vpack.c.b16 %v3974, %v3967
        %v4262 = vpack.c.b16 %v3975, %v3968
        %v4263 = vpack.c.b16 %v3976, %v3969
        %v4264 = vpack.c.b16 %v3977, %v3970
        %v4265 = vpack.c.b16 %v3978, %v3971
        %v4266 = vpack.c.b16 %v3979, %v3972
        %v4267 = vpack.c.b16 %v3980, %v3973
        %v4268 = vpack.c.b16 %v3988, %v3981
        %v4269 = vpack.c.b16 %v3989, %v3982
        %v4270 = vpack.c.b16 %v3990, %v3983
        %v4271 = vpack.c.b16 %v3991, %v3984
        %v4272 = vpack.c.b16 %v3992, %v3985
        %v4273 = vpack.c.b16 %v3993, %v3986
        %v4274 = vpack.c.b16 %v3994, %v3987
        %v4275 = vpack.c.b16 %v4002, %v3995
        %v4276 = vpack.c.b16 %v4003, %v3996
        %v4277 = vpack.c.b16 %v4004, %v3997
        %v4278 = vpack.c.b16 %v4005, %v3998
        %v4279 = vpack.c.b16 %v4006, %v3999
        %v4280 = vpack.c.b16 %v4007, %v4000
        %v4281 = vpack.c.b16 %v4008, %v4001
        %v4282 = vpack.c.b16 %v4016, %v4009
        %v4283 = vpack.c.b16 %v4017, %v4010
        %v4284 = vpack.c.b16 %v4018, %v4011
        %v4285 = vpack.c.b16 %v4019, %v4012
        %v4286 = vpack.c.b16 %v4020, %v4013
        %v4287 = vpack.c.b16 %v4021, %v4014
        %v4288 = vpack.c.b16 %v4022, %v4015
        %v4289 = vpack.c.b16 %v4030, %v4023
        %v4290 = vpack.c.b16 %v4031, %v4024
        %v4291 = vpack.c.b16 %v4032, %v4025
        %v4292 = vpack.c.b16 %v4033, %v4026
        %v4293 = vpack.c.b16 %v4034, %v4027
        %v4294 = vpack.c.b16 %v4035, %v4028
        %v4295 = vpack.c.b16 %v4036, %v4029
        %v4296 = vpack.c.b16 %v4044, %v4037
        %v4297 = vpack.c.b16 %v4045, %v4038
        %v4298 = vpack.c.b16 %v4046, %v4039
        %v4299 = vpack.c.b16 %v4047, %v4040
        %v4300 = vpack.c.b16 %v4048, %v4041
        %v4301 = vpack.c.b16 %v4049, %v4042
        %v4302 = vpack.c.b16 %v4050, %v4043
        %v4303 = vpack.c.b16 %v4058, %v4051
        %v4304 = vpack.c.b16 %v4059, %v4052
        %v4305 = vpack.c.b16 %v4060, %v4053
        %v4306 = vpack.c.b16 %v4061, %v4054
        %v4307 = vpack.c.b16 %v4062, %v4055
        %v4308 = vpack.c.b16 %v4063, %v4056
        %v4309 = vpack.c.b16 %v4064, %v4057
        %v4310 = vpack.c.b16 %v4072, %v4065
        %v4311 = vpack.c.b16 %v4073, %v4066
        %v4312 = vpack.c.b16 %v4074, %v4067
        %v4313 = vpack.c.b16 %v4075, %v4068
        %v4314 = vpack.c.b16 %v4076, %v4069
        %v4315 = vpack.c.b16 %v4077, %v4070
        %v4316 = vpack.c.b16 %v4078, %v4071
        %v4317 = vpack.c.b16 %v4086, %v4079
        %v4318 = vpack.c.b16 %v4087, %v4080
        %v4319 = vpack.c.b16 %v4088, %v4081
        %v4320 = vpack.c.b16 %v4089, %v4082
        %v4321 = vpack.c.b16 %v4090, %v4083
        %v4322 = vpack.c.b16 %v4091, %v4084
        %v4323 = vpack.c.b16 %v4092, %v4085
        %v4324 = vpack.c.b16 %v4100, %v4093
        %v4325 = vpack.c.b16 %v4101, %v4094
        %v4326 = vpack.c.b16 %v4102, %v4095
        %v4327 = vpack.c.b16 %v4103, %v4096
        %v4328 = vpack.c.b16 %v4104, %v4097
        %v4329 = vpack.c.b16 %v4105, %v4098
        %v4330 = vpack.c.b16 %v4106, %v4099
        %4555 = vmatprep.subr.bf16.mxu0 %v4108
        %4556 = vmatpush1.bf16.msra.mxu0 %v4107
        %4557 = vmatprep.subr.bf16.mxu0 %v4115
        %4558 = vmatpush1.bf16.msra.mxu0 %v4114
        %4559 = vmatprep.subr.bf16.mxu0 %v4122
        %4560 = vmatpush1.bf16.msra.mxu0 %v4121
        %4561 = vmatprep.subr.bf16.mxu0 %v4129
        %4562 = vmatpush1.bf16.msra.mxu0 %v4128
        %4563 = vmatprep.subr.bf16.mxu0 %v4136
        %4564 = vmatpush1.bf16.msra.mxu0 %v4135
        %4565 = vmatprep.subr.bf16.mxu0 %v4143
        %4566 = vmatpush1.bf16.msra.mxu0 %v4142
        %4567 = vmatprep.subr.bf16.mxu0 %v4150
        %4568 = vmatpush1.bf16.msra.mxu0 %v4149
        %4569 = vmatprep.subr.bf16.mxu0 %v4157
        %4570 = vmatpush1.bf16.msra.mxu0 %v4156
        %4571 = vmatprep.subr.bf16.mxu0 %v4164
        %4572 = vmatpush1.bf16.msra.mxu0 %v4163
        %4573 = vmatprep.subr.bf16.mxu0 %v4171
        %4574 = vmatpush1.bf16.msra.mxu0 %v4170
        %4575 = vmatprep.subr.bf16.mxu0 %v4178
        %4576 = vmatpush1.bf16.msra.mxu0 %v4177
        %4577 = vmatprep.subr.bf16.mxu0 %v4185
        %4578 = vmatpush1.bf16.msra.mxu0 %v4184
        %4579 = vmatprep.subr.bf16.mxu0 %v4192
        %4580 = vmatpush1.bf16.msra.mxu0 %v4191
        %4581 = vmatprep.subr.bf16.mxu0 %v4199
        %4582 = vmatpush1.bf16.msra.mxu0 %v4198
        %4583 = vmatprep.subr.bf16.mxu0 %v4206
        %4584 = vmatpush1.bf16.msra.mxu0 %v4205
        %4585 = vmatprep.subr.bf16.mxu0 %v4213
        %4586 = vmatpush1.bf16.msra.mxu0 %v4212
        %4587 = vmatprep.mubr.bf16.mxu0 %v3107
        %4588 = vmatmul.mubr.bf16.gmra.mrb[0].mxu0 %v3106
        %v4589 = vpop.f32.mrb[0].mxu0
        %v4590 = vadd.f32 %v3371, %v4589
        %v4591 = vpop.f32.mrb[0].mxu0
        %v4592 = vadd.f32 %v3375, %v4591
        %v4593 = vpop.f32.mrb[0].mxu0
        %v4594 = vpop.f32.mrb[0].mxu0
        %4595 = vdwg.mxu0
        %4596 = vmatprep.subr.bf16.mxu0 %v4220
        %4597 = vmatpush1.bf16.msra.mxu0 %v4219
        %4598 = vmatprep.subr.bf16.mxu0 %v4227
        %4599 = vmatpush1.bf16.msra.mxu0 %v4226
        %4600 = vmatprep.subr.bf16.mxu0 %v4234
        %4601 = vmatpush1.bf16.msra.mxu0 %v4233
        %4602 = vmatprep.subr.bf16.mxu0 %v4241
        %4603 = vmatpush1.bf16.msra.mxu0 %v4240
        %4604 = vmatprep.subr.bf16.mxu0 %v4248
        %4605 = vmatpush1.bf16.msra.mxu0 %v4247
        %4606 = vmatprep.subr.bf16.mxu0 %v4255
        %4607 = vmatpush1.bf16.msra.mxu0 %v4254
        %4608 = vmatprep.subr.bf16.mxu0 %v4262
        %4609 = vmatpush1.bf16.msra.mxu0 %v4261
        %4610 = vmatprep.subr.bf16.mxu0 %v4269
        %4611 = vmatpush1.bf16.msra.mxu0 %v4268
        %4612 = vmatprep.subr.bf16.mxu0 %v4276
        %4613 = vmatpush1.bf16.msra.mxu0 %v4275
        %4614 = vmatprep.subr.bf16.mxu0 %v4283
        %4615 = vmatpush1.bf16.msra.mxu0 %v4282
        %4616 = vmatprep.subr.bf16.mxu0 %v4290
        %4617 = vmatpush1.bf16.msra.mxu0 %v4289
        %4618 = vmatprep.subr.bf16.mxu0 %v4297
        %4619 = vmatpush1.bf16.msra.mxu0 %v4296
        %4620 = vmatprep.subr.bf16.mxu0 %v4304
        %4621 = vmatpush1.bf16.msra.mxu0 %v4303
        %4622 = vmatprep.subr.bf16.mxu0 %v4311
        %4623 = vmatpush1.bf16.msra.mxu0 %v4310
        %4624 = vmatprep.subr.bf16.mxu0 %v4318
        %4625 = vmatpush1.bf16.msra.mxu0 %v4317
        %4626 = vmatprep.subr.bf16.mxu0 %v4325
        %4627 = vmatpush1.bf16.msra.mxu0 %v4324
        %4628 = vmatprep.mubr.bf16.mxu0 %v3109
        %4629 = vmatmul.mubr.bf16.gmra.mrb[0].mxu0 %v3108
        %v4630 = vpop.f32.mrb[0].mxu0
        %v4631 = vadd.f32 %v4590, %v4630
        %v4632 = vpop.f32.mrb[0].mxu0
        %v4633 = vadd.f32 %v4592, %v4632
        %v4634 = vpop.f32.mrb[0].mxu0
        %v4635 = vpop.f32.mrb[0].mxu0
        %4636 = vdwg.mxu0
        %4637 = vmatprep.subr.bf16.mxu0 %v4110
        %4638 = vmatpush1.bf16.msra.mxu0 %v4109
        %4639 = vmatprep.subr.bf16.mxu0 %v4117
        %4640 = vmatpush1.bf16.msra.mxu0 %v4116
        %4641 = vmatprep.subr.bf16.mxu0 %v4124
        %4642 = vmatpush1.bf16.msra.mxu0 %v4123
        %4643 = vmatprep.subr.bf16.mxu0 %v4131
        %4644 = vmatpush1.bf16.msra.mxu0 %v4130
        %4645 = vmatprep.subr.bf16.mxu0 %v4138
        %4646 = vmatpush1.bf16.msra.mxu0 %v4137
        %4647 = vmatprep.subr.bf16.mxu0 %v4145
        %4648 = vmatpush1.bf16.msra.mxu0 %v4144
        %4649 = vmatprep.subr.bf16.mxu0 %v4152
        %4650 = vmatpush1.bf16.msra.mxu0 %v4151
        %4651 = vmatprep.subr.bf16.mxu0 %v4159
        %4652 = vmatpush1.bf16.msra.mxu0 %v4158
        %4653 = vmatprep.subr.bf16.mxu0 %v4166
        %4654 = vmatpush1.bf16.msra.mxu0 %v4165
        %4655 = vmatprep.subr.bf16.mxu0 %v4173
        %4656 = vmatpush1.bf16.msra.mxu0 %v4172
        %4657 = vmatprep.subr.bf16.mxu0 %v4180
        %4658 = vmatpush1.bf16.msra.mxu0 %v4179
        %4659 = vmatprep.subr.bf16.mxu0 %v4187
        %4660 = vmatpush1.bf16.msra.mxu0 %v4186
        %4661 = vmatprep.subr.bf16.mxu0 %v4194
        %4662 = vmatpush1.bf16.msra.mxu0 %v4193
        %4663 = vmatprep.subr.bf16.mxu0 %v4201
        %4664 = vmatpush1.bf16.msra.mxu0 %v4200
        %4665 = vmatprep.subr.bf16.mxu0 %v4208
        %4666 = vmatpush1.bf16.msra.mxu0 %v4207
        %4667 = vmatprep.subr.bf16.mxu0 %v4215
        %4668 = vmatpush1.bf16.msra.mxu0 %v4214
        %4669 = vmatprep.mubr.bf16.mxu0 %v3107
        %4670 = vmatmul.mubr.bf16.gmra.mrb[0].mxu0 %v3106
        %v4671 = vpop.f32.mrb[0].mxu0
        %v4672 = vadd.f32 %v3379, %v4671
        %v4673 = vpop.f32.mrb[0].mxu0
        %v4674 = vadd.f32 %v3383, %v4673
        %v4675 = vpop.f32.mrb[0].mxu0
        %v4676 = vpop.f32.mrb[0].mxu0
        %4677 = vdwg.mxu0
        %4678 = vmatprep.subr.bf16.mxu0 %v4222
        %4679 = vmatpush1.bf16.msra.mxu0 %v4221
        %4680 = vmatprep.subr.bf16.mxu0 %v4229
        %4681 = vmatpush1.bf16.msra.mxu0 %v4228
        %4682 = vmatprep.subr.bf16.mxu0 %v4236
        %4683 = vmatpush1.bf16.msra.mxu0 %v4235
        %4684 = vmatprep.subr.bf16.mxu0 %v4243
        %4685 = vmatpush1.bf16.msra.mxu0 %v4242
        %4686 = vmatprep.subr.bf16.mxu0 %v4250
        %4687 = vmatpush1.bf16.msra.mxu0 %v4249
        %4688 = vmatprep.subr.bf16.mxu0 %v4257
        %4689 = vmatpush1.bf16.msra.mxu0 %v4256
        %4690 = vmatprep.subr.bf16.mxu0 %v4264
        %4691 = vmatpush1.bf16.msra.mxu0 %v4263
        %4692 = vmatprep.subr.bf16.mxu0 %v4271
        %4693 = vmatpush1.bf16.msra.mxu0 %v4270
        %4694 = vmatprep.subr.bf16.mxu0 %v4278
        %4695 = vmatpush1.bf16.msra.mxu0 %v4277
        %4696 = vmatprep.subr.bf16.mxu0 %v4285
        %4697 = vmatpush1.bf16.msra.mxu0 %v4284
        %4698 = vmatprep.subr.bf16.mxu0 %v4292
        %4699 = vmatpush1.bf16.msra.mxu0 %v4291
        %4700 = vmatprep.subr.bf16.mxu0 %v4299
        %4701 = vmatpush1.bf16.msra.mxu0 %v4298
        %4702 = vmatprep.subr.bf16.mxu0 %v4306
        %4703 = vmatpush1.bf16.msra.mxu0 %v4305
        %4704 = vmatprep.subr.bf16.mxu0 %v4313
        %4705 = vmatpush1.bf16.msra.mxu0 %v4312
        %4706 = vmatprep.subr.bf16.mxu0 %v4320
        %4707 = vmatpush1.bf16.msra.mxu0 %v4319
        %4708 = vmatprep.subr.bf16.mxu0 %v4327
        %4709 = vmatpush1.bf16.msra.mxu0 %v4326
        %4710 = vmatprep.mubr.bf16.mxu0 %v3109
        %4711 = vmatmul.mubr.bf16.gmra.mrb[0].mxu0 %v3108
        %v4712 = vpop.f32.mrb[0].mxu0
        %v4713 = vadd.f32 %v4672, %v4712
        %v4714 = vpop.f32.mrb[0].mxu0
        %v4715 = vadd.f32 %v4674, %v4714
        %v4716 = vpop.f32.mrb[0].mxu0
        %v4717 = vpop.f32.mrb[0].mxu0
        %4718 = vdwg.mxu0
        %4719 = vmatprep.subr.bf16.mxu0 %v4112
        %4720 = vmatpush1.bf16.msra.mxu0 %v4111
        %4721 = vmatprep.subr.bf16.mxu0 %v4119
        %4722 = vmatpush1.bf16.msra.mxu0 %v4118
        %4723 = vmatprep.subr.bf16.mxu0 %v4126
        %4724 = vmatpush1.bf16.msra.mxu0 %v4125
        %4725 = vmatprep.subr.bf16.mxu0 %v4133
        %4726 = vmatpush1.bf16.msra.mxu0 %v4132
        %4727 = vmatprep.subr.bf16.mxu0 %v4140
        %4728 = vmatpush1.bf16.msra.mxu0 %v4139
        %4729 = vmatprep.subr.bf16.mxu0 %v4147
        %4730 = vmatpush1.bf16.msra.mxu0 %v4146
        %4731 = vmatprep.subr.bf16.mxu0 %v4154
        %4732 = vmatpush1.bf16.msra.mxu0 %v4153
        %4733 = vmatprep.subr.bf16.mxu0 %v4161
        %4734 = vmatpush1.bf16.msra.mxu0 %v4160
        %4735 = vmatprep.subr.bf16.mxu0 %v4168
        %4736 = vmatpush1.bf16.msra.mxu0 %v4167
        %4737 = vmatprep.subr.bf16.mxu0 %v4175
        %4738 = vmatpush1.bf16.msra.mxu0 %v4174
        %4739 = vmatprep.subr.bf16.mxu0 %v4182
        %4740 = vmatpush1.bf16.msra.mxu0 %v4181
        %4741 = vmatprep.subr.bf16.mxu0 %v4189
        %4742 = vmatpush1.bf16.msra.mxu0 %v4188
        %4743 = vmatprep.subr.bf16.mxu0 %v4196
        %4744 = vmatpush1.bf16.msra.mxu0 %v4195
        %4745 = vmatprep.subr.bf16.mxu0 %v4203
        %4746 = vmatpush1.bf16.msra.mxu0 %v4202
        %4747 = vmatprep.subr.bf16.mxu0 %v4210
        %4748 = vmatpush1.bf16.msra.mxu0 %v4209
        %4749 = vmatprep.subr.bf16.mxu0 %v4217
        %4750 = vmatpush1.bf16.msra.mxu0 %v4216
        %4751 = vmatprep.mubr.bf16.mxu0 %v3107
        %4752 = vmatmul.mubr.bf16.gmra.mrb[0].mxu0 %v3106
        %v4753 = vpop.f32.mrb[0].mxu0
        %v4754 = vadd.f32 %v3387, %v4753
        %v4755 = vpop.f32.mrb[0].mxu0
        %v4756 = vadd.f32 %v3391, %v4755
        %v4757 = vpop.f32.mrb[0].mxu0
        %v4758 = vpop.f32.mrb[0].mxu0
        %4759 = vdwg.mxu0
        %4760 = vmatprep.subr.bf16.mxu0 %v4224
        %4761 = vmatpush1.bf16.msra.mxu0 %v4223
        %4762 = vmatprep.subr.bf16.mxu0 %v4231
        %4763 = vmatpush1.bf16.msra.mxu0 %v4230
        %4764 = vmatprep.subr.bf16.mxu0 %v4238
        %4765 = vmatpush1.bf16.msra.mxu0 %v4237
        %4766 = vmatprep.subr.bf16.mxu0 %v4245
        %4767 = vmatpush1.bf16.msra.mxu0 %v4244
        %4768 = vmatprep.subr.bf16.mxu0 %v4252
        %4769 = vmatpush1.bf16.msra.mxu0 %v4251
        %4770 = vmatprep.subr.bf16.mxu0 %v4259
        %4771 = vmatpush1.bf16.msra.mxu0 %v4258
        %4772 = vmatprep.subr.bf16.mxu0 %v4266
        %4773 = vmatpush1.bf16.msra.mxu0 %v4265
        %4774 = vmatprep.subr.bf16.mxu0 %v4273
        %4775 = vmatpush1.bf16.msra.mxu0 %v4272
        %4776 = vmatprep.subr.bf16.mxu0 %v4280
        %4777 = vmatpush1.bf16.msra.mxu0 %v4279
        %4778 = vmatprep.subr.bf16.mxu0 %v4287
        %4779 = vmatpush1.bf16.msra.mxu0 %v4286
        %4780 = vmatprep.subr.bf16.mxu0 %v4294
        %4781 = vmatpush1.bf16.msra.mxu0 %v4293
        %4782 = vmatprep.subr.bf16.mxu0 %v4301
        %4783 = vmatpush1.bf16.msra.mxu0 %v4300
        %4784 = vmatprep.subr.bf16.mxu0 %v4308
        %4785 = vmatpush1.bf16.msra.mxu0 %v4307
        %4786 = vmatprep.subr.bf16.mxu0 %v4315
        %4787 = vmatpush1.bf16.msra.mxu0 %v4314
        %4788 = vmatprep.subr.bf16.mxu0 %v4322
        %4789 = vmatpush1.bf16.msra.mxu0 %v4321
        %4790 = vmatprep.subr.bf16.mxu0 %v4329
        %4791 = vmatpush1.bf16.msra.mxu0 %v4328
        %4792 = vmatprep.mubr.bf16.mxu0 %v3109
        %4793 = vmatmul.mubr.bf16.gmra.mrb[0].mxu0 %v3108
        %v4794 = vpop.f32.mrb[0].mxu0
        %v4795 = vadd.f32 %v4754, %v4794
        %v4796 = vpop.f32.mrb[0].mxu0
        %v4797 = vadd.f32 %v4756, %v4796
        %v4798 = vpop.f32.mrb[0].mxu0
        %v4799 = vpop.f32.mrb[0].mxu0
        %4800 = vdwg.mxu0
        %4801 = vmatprep.subr.bf16.mxu0 0
        %4802 = vmatpush1.bf16.msra.mxu0 %v4113
        %4803 = vmatprep.subr.bf16.mxu0 0
        %4804 = vmatpush1.bf16.msra.mxu0 %v4120
        %4805 = vmatprep.subr.bf16.mxu0 0
        %4806 = vmatpush1.bf16.msra.mxu0 %v4127
        %4807 = vmatprep.subr.bf16.mxu0 0
        %4808 = vmatpush1.bf16.msra.mxu0 %v4134
        %4809 = vmatprep.subr.bf16.mxu0 0
        %4810 = vmatpush1.bf16.msra.mxu0 %v4141
        %4811 = vmatprep.subr.bf16.mxu0 0
        %4812 = vmatpush1.bf16.msra.mxu0 %v4148
        %4813 = vmatprep.subr.bf16.mxu0 0
        %4814 = vmatpush1.bf16.msra.mxu0 %v4155
        %4815 = vmatprep.subr.bf16.mxu0 0
        %4816 = vmatpush1.bf16.msra.mxu0 %v4162
        %4817 = vmatprep.subr.bf16.mxu0 0
        %4818 = vmatpush1.bf16.msra.mxu0 %v4169
        %4819 = vmatprep.subr.bf16.mxu0 0
        %4820 = vmatpush1.bf16.msra.mxu0 %v4176
        %4821 = vmatprep.subr.bf16.mxu0 0
        %4822 = vmatpush1.bf16.msra.mxu0 %v4183
        %4823 = vmatprep.subr.bf16.mxu0 0
        %4824 = vmatpush1.bf16.msra.mxu0 %v4190
        %4825 = vmatprep.subr.bf16.mxu0 0
        %4826 = vmatpush1.bf16.msra.mxu0 %v4197
        %4827 = vmatprep.subr.bf16.mxu0 0
        %4828 = vmatpush1.bf16.msra.mxu0 %v4204
        %4829 = vmatprep.subr.bf16.mxu0 0
        %4830 = vmatpush1.bf16.msra.mxu0 %v4211
        %4831 = vmatprep.subr.bf16.mxu0 0
        %4832 = vmatpush1.bf16.msra.mxu0 %v4218
        %4833 = vmatprep.mubr.bf16.mxu0 %v3107
        %4834 = vmatmul.mubr.bf16.gmra.mrb[0].mxu0 %v3106
        %v4835 = vpop.f32.mrb[0].mxu0
        %v4836 = vadd.f32 %v3395, %v4835
        %v4837 = vpop.f32.mrb[0].mxu0
        %v4838 = vpop.f32.mrb[0].mxu0
        %v4839 = vpop.f32.mrb[0].mxu0
        %4840 = vdwg.mxu0
        %4841 = vmatprep.subr.bf16.mxu0 0
        %4842 = vmatpush1.bf16.msra.mxu0 %v4225
        %4843 = vmatprep.subr.bf16.mxu0 0
        %4844 = vmatpush1.bf16.msra.mxu0 %v4232
        %4845 = vmatprep.subr.bf16.mxu0 0
        %4846 = vmatpush1.bf16.msra.mxu0 %v4239
        %4847 = vmatprep.subr.bf16.mxu0 0
        %4848 = vmatpush1.bf16.msra.mxu0 %v4246
        %4849 = vmatprep.subr.bf16.mxu0 0
        %4850 = vmatpush1.bf16.msra.mxu0 %v4253
        %4851 = vmatprep.subr.bf16.mxu0 0
        %4852 = vmatpush1.bf16.msra.mxu0 %v4260
        %4853 = vmatprep.subr.bf16.mxu0 0
        %4854 = vmatpush1.bf16.msra.mxu0 %v4267
        %4855 = vmatprep.subr.bf16.mxu0 0
        %4856 = vmatpush1.bf16.msra.mxu0 %v4274
        %4857 = vmatprep.subr.bf16.mxu0 0
        %4858 = vmatpush1.bf16.msra.mxu0 %v4281
        %4859 = vmatprep.subr.bf16.mxu0 0
        %4860 = vmatpush1.bf16.msra.mxu0 %v4288
        %4861 = vmatprep.subr.bf16.mxu0 0
        %4862 = vmatpush1.bf16.msra.mxu0 %v4295
        %4863 = vmatprep.subr.bf16.mxu0 0
        %4864 = vmatpush1.bf16.msra.mxu0 %v4302
        %4865 = vmatprep.subr.bf16.mxu0 0
        %4866 = vmatpush1.bf16.msra.mxu0 %v4309
        %4867 = vmatprep.subr.bf16.mxu0 0
        %4868 = vmatpush1.bf16.msra.mxu0 %v4316
        %4869 = vmatprep.subr.bf16.mxu0 0
        %4870 = vmatpush1.bf16.msra.mxu0 %v4323
        %4871 = vmatprep.subr.bf16.mxu0 0
        %4872 = vmatpush1.bf16.msra.mxu0 %v4330
        %4873 = vmatprep.mubr.bf16.mxu0 %v3109
        %4874 = vmatmul.mubr.bf16.gmra.mrb[0].mxu0 %v3108
        %v4875 = vpop.f32.mrb[0].mxu0
        %v4876 = vadd.f32 %v4836, %v4875
        %v4877 = vpop.f32.mrb[0].mxu0
        %v4878 = vpop.f32.mrb[0].mxu0
        %v4879 = vpop.f32.mrb[0].mxu0
        %4880 = vdwg.mxu0
        %v4881 = vxor.u32 %v4631, 2147483648
        %v4882 = vxor.u32 %v4633, 2147483648
        %v4883 = vxor.u32 %v4713, 2147483648
        %v4884 = vxor.u32 %v4715, 2147483648
        %v4885 = vxor.u32 %v4795, 2147483648
        %v4886 = vxor.u32 %v4797, 2147483648
        %v4887 = vxor.u32 %v4876, 2147483648
        %v4888 = vmul.f32 %v4881, 1.442695
        %v4889 = vpow.pop %v4888
        %v4890 = vmul.f32 %v4882, 1.442695
        %v4891 = vpow.pop %v4890
        %v4892 = vmul.f32 %v4883, 1.442695
        %v4893 = vpow.pop %v4892
        %v4894 = vmul.f32 %v4884, 1.442695
        %v4895 = vpow.pop %v4894
        %v4896 = vmul.f32 %v4885, 1.442695
        %v4897 = vpow.pop %v4896
        %v4898 = vmul.f32 %v4886, 1.442695
        %v4899 = vpow.pop %v4898
        %v4900 = vmul.f32 %v4887, 1.442695
        %v4901 = vpow.pop %v4900
        %v4902 = vadd.f32 %v4889, 1.0
        %v4903 = vadd.f32 %v4891, 1.0
        %v4904 = vadd.f32 %v4893, 1.0
        %v4905 = vadd.f32 %v4895, 1.0
        %v4906 = vadd.f32 %v4897, 1.0
        %v4907 = vadd.f32 %v4899, 1.0
        %v4908 = vadd.f32 %v4901, 1.0
        %v4909 = vrcp.pop %v4902
        %v4910 = vmul.f32 1.0, %v4909
        %v4911 = vrcp.pop %v4903
        %v4912 = vmul.f32 1.0, %v4911
        %v4913 = vrcp.pop %v4904
        %v4914 = vmul.f32 1.0, %v4913
        %v4915 = vrcp.pop %v4905
        %v4916 = vmul.f32 1.0, %v4915
        %v4917 = vrcp.pop %v4906
        %v4918 = vmul.f32 1.0, %v4917
        %v4919 = vrcp.pop %v4907
        %v4920 = vmul.f32 1.0, %v4919
        %v4921 = vrcp.pop %v4908
        %v4922 = vmul.f32 1.0, %v4921
        %v4923 = vpack.c.bf16 %v4910, %v4910
        %v4924 = vpack.c.bf16 %v4912, %v4912
        %v4925 = vpack.c.bf16 %v4914, %v4914
        %v4926 = vpack.c.bf16 %v4916, %v4916
        %v4927 = vpack.c.bf16 %v4918, %v4918
        %v4928 = vpack.c.bf16 %v4920, %v4920
        %v4929 = vpack.c.bf16 %v4922, %v4922
        %v4937 = vunpack.c.l.b16 %v4923
        %v4938 = vunpack.c.l.b16 %v4924
        %v4939 = vunpack.c.l.b16 %v4925
        %v4940 = vunpack.c.l.b16 %v4926
        %v4941 = vunpack.c.l.b16 %v4927
        %v4942 = vunpack.c.l.b16 %v4928
        %v4943 = vunpack.c.l.b16 %v4929
        %v4944 = vpack.c.b16 %v4938, %v4937
        %v4945 = vpack.c.b16 %v4940, %v4939
        %v4946 = vpack.c.b16 %v4942, %v4941
        %v4947 = vpack.c.b16 %v4943, %v4943
        %4952 = vst [vmem:[%s536] sm:$0xff] %v4944
        %4953 = vst [vmem:[%s536 + $0x8] sm:$0xff] %v4945
        %4954 = vst [vmem:[%s536 + $0x10] sm:$0xff] %v4946
        %4955 = vst [vmem:[%s536 + $0x18] sm:$0xf] %v4947
        %4956 = vst [vmem:[%s543] sm:$0xff] %v2452
        %4957 = vst [vmem:[%s550] sm:$0xff] %v2795
        %s4958 = sand.u32 %s305, 1
        %s4959 = scalar_lea.sflag [#allocation4], %s4958
        %s4960 = sand.u32 %s305, 1
        %s4961 = smul.addr %s4960, 28
        %s4962 = scalar_lea.vmem [#allocation10], %s4961
        %s4963 = sand.u32 %s35, 1
        %s4964 = scalar_lea.sflag [#allocation12], %s4963
        %s4965 = sand.u32 %s331, 1
        %s4966 = smul.addr %s4965, 8
        %s4967 = scalar_lea.vmem [#allocation11], %s4966
        %s4968 = sand.u32 %s35, 1
        %s4969 = scalar_lea.sflag [#allocation12], %s4968
        %s4970 = sand.u32 %s357, 1
        %s4971 = smul.addr %s4970, 8
        %s4972 = scalar_lea.vmem [#allocation13], %s4971
        // Predicated region
        $region85: #{vae_forward_padded.1} parent=67 // pred_check
          %p4973 = pneg %p315
        $region86: #{vae_forward_padded.1} parent=67 // pred_check_branch
          %4975 = sbr.rel (%p4973) target = $region88
        $region87: #{vae_forward_padded.1} parent=67 // pred_region
          %s4977 = ssub.s32 448, 448
          %4978 = vsyncadd %s4959, %s4977
          %s4979 = smul.addr %s35, 7
          %s4980 = smul.addr %s4979, 64
          %s4981 = scalar_lea.hbm %s12, %s4980
          %s4983 = sshll.u32 %s4962, 4
          %s4984 = int_to_ptr.vmem [resolvable:$true] %s4983
          %4986 = dma.vmem_to_hbm [thread:$0]  %s4984, 448, %s4981, %s4959
        $region88: #{vae_forward_padded.1} parent=67 // pred_fallthru
          _
        // Predicated region
        $region89: #{vae_forward_padded.1} parent=67 // pred_check
          %p4987 = pneg %p341
        $region90: #{vae_forward_padded.1} parent=67 // pred_check_branch
          %4989 = sbr.rel (%p4987) target = $region92
        $region91: #{vae_forward_padded.1} parent=67 // pred_region
          %s4991 = ssub.s32 128, 128
          %4992 = vsyncadd %s4964, %s4991
          %s4993 = smul.addr %s35, 128
          %s4994 = scalar_lea.hbm %s13, %s4993
          %s4996 = sshll.u32 %s4967, 4
          %s4997 = int_to_ptr.vmem [resolvable:$true] %s4996
          %4999 = dma.vmem_to_hbm [thread:$0]  %s4997, 128, %s4994, %s4964
        $region92: #{vae_forward_padded.1} parent=67 // pred_fallthru
          _
        // Predicated region
        $region93: #{vae_forward_padded.1} parent=67 // pred_check
          %p5000 = pneg %p367
        $region94: #{vae_forward_padded.1} parent=67 // pred_check_branch
          %5002 = sbr.rel (%p5000) target = $region96
        $region95: #{vae_forward_padded.1} parent=67 // pred_region
          %s5004 = ssub.s32 128, 128
          %5005 = vsyncadd %s4969, %s5004
          %s5006 = smul.addr %s35, 128
          %s5007 = scalar_lea.hbm %s14, %s5006
          %s5009 = sshll.u32 %s4972, 4
          %s5010 = int_to_ptr.vmem [resolvable:$true] %s5009
          %5012 = dma.vmem_to_hbm [thread:$0]  %s5010, 128, %s5007, %s4969
        $region96: #{vae_forward_padded.1} parent=67 // pred_fallthru
          _
      $region68: #{vae_forward_padded.1} parent=5 // pred_fallthru
        _
      %p5013 = scmp.le.s32.totalorder 2, %s30
      // Predicated region
      $region97: #{vae_forward_padded.1} parent=5 // pred_check
        %p5014 = pneg %p5013
      $region98: #{vae_forward_padded.1} parent=5 // pred_check_branch
        %5016 = sbr.rel (%p5014) target = $region100
      $region99: #{vae_forward_padded.1} parent=5 // pred_region
        %s5017 = ssub.s32 %s30, 2
        // Predicated region
        $region101: #{vae_forward_padded.1} parent=99 // pred_check
          %p5018 = pneg %p321
        $region102: #{vae_forward_padded.1} parent=99 // pred_check_branch
          %5020 = sbr.rel (%p5018) target = $region104
        $region103: #{vae_forward_padded.1} parent=99 // pred_region
          %s5021 = sand.u32 %s306, 1
          %s5022 = scalar_lea.sflag [#allocation4], %s5021
          %s5023 = sand.u32 %s306, 1
          %s5024 = smul.addr %s5023, 28
          %s5025 = scalar_lea.vmem [#allocation10], %s5024
          %5026 = dma.done %s5022, 448
        $region104: #{vae_forward_padded.1} parent=99 // pred_fallthru
          _
        // Predicated region
        $region105: #{vae_forward_padded.1} parent=99 // pred_check
          %p5027 = pneg %p347
        $region106: #{vae_forward_padded.1} parent=99 // pred_check_branch
          %5029 = sbr.rel (%p5027) target = $region108
        $region107: #{vae_forward_padded.1} parent=99 // pred_region
          %s5030 = sand.u32 %s36, 1
          %s5031 = scalar_lea.sflag [#allocation12], %s5030
          %s5032 = sand.u32 %s332, 1
          %s5033 = smul.addr %s5032, 8
          %s5034 = scalar_lea.vmem [#allocation11], %s5033
          %5035 = dma.done %s5031, 128
        $region108: #{vae_forward_padded.1} parent=99 // pred_fallthru
          _
        // Predicated region
        $region109: #{vae_forward_padded.1} parent=99 // pred_check
          %p5036 = pneg %p373
        $region110: #{vae_forward_padded.1} parent=99 // pred_check_branch
          %5038 = sbr.rel (%p5036) target = $region112
        $region111: #{vae_forward_padded.1} parent=99 // pred_region
          %s5039 = sand.u32 %s36, 1
          %s5040 = scalar_lea.sflag [#allocation12], %s5039
          %s5041 = sand.u32 %s358, 1
          %s5042 = smul.addr %s5041, 8
          %s5043 = scalar_lea.vmem [#allocation13], %s5042
          %5044 = dma.done %s5040, 128
        $region112: #{vae_forward_padded.1} parent=99 // pred_fallthru
          _
      $region100: #{vae_forward_padded.1} parent=5 // pred_fallthru
        _
    $region6: #{vae_forward_padded.1} parent=1 // loop_footer
      %s34 = sadd.s32 1, %s30
    $region7: #{vae_forward_padded.1} parent=1 // loop_footer_branch
      %29 = sbr.rel target = $region3
    $region8: #{vae_forward_padded.1} parent=1 // loop_exit
      _
    %5045 = vsyncpa [#allocation3], 1
    %s5046 = scalar_lea.sflag [#allocation3], 1
    %5047 = vsyncpa %s5046, 1
    %5048 = vsyncpa [#allocation6], 1
    %5049 = vsyncpa [#allocation9], 1
    %5050 = vsyncpa [#allocation4], 1
    %s5051 = scalar_lea.sflag [#allocation4], 1
    %5052 = vsyncpa %s5051, 1
    %5053 = vsyncpa [#allocation12], 1
    %s5054 = scalar_lea.sflag [#allocation12], 1
    %5055 = vsyncpa %s5054, 1

</llo_original>
